<compile_context>
chip_gen: v7x
topology: tpu7x:2x2x1
jax: 0.10.0
libtpu: 0.0.40
codegen_flags: <defaults>
</compile_context>

<pallas_src>
import jax
import jax.numpy as jnp
from jax import lax
from jax.experimental import pallas as pl
from jax.experimental.pallas import tpu as pltpu


def mf_fc_kernel(uidx_ref, iidx_ref,          # streamed (tb, 1) int32 id columns
                 uemb_ref, iemb_ref,          # VMEM-resident bf16 tables
                 w1u_ref, w1i_ref, b1_ref,    # Linear(128,256) split into halves
                 w2_ref, b2_ref,              # Linear(256,128)
                 w3_ref, b3_ref,              # Linear(128,64) zero-padded to 128 lanes
                 w4_ref, b4_ref,              # Linear(64,1) as padded row vector + bias
                 out_ref):                    # lane-dense (1, tb) f32 block
    tb = uidx_ref.shape[0]
    n_u = uemb_ref.shape[0]
    n_i = iemb_ref.shape[0]

    # In-kernel embedding gather: one-hot matmul on the MXU against the resident tables.
    u_oh = (lax.broadcasted_iota(jnp.int32, (tb, n_u), 1)
            == uidx_ref[...]).astype(jnp.bfloat16)
    i_oh = (lax.broadcasted_iota(jnp.int32, (tb, n_i), 1)
            == iidx_ref[...]).astype(jnp.bfloat16)
    ue = jnp.dot(u_oh, uemb_ref[...],
                 preferred_element_type=jnp.float32).astype(jnp.bfloat16)  # [tb, nf]
    ie = jnp.dot(i_oh, iemb_ref[...],
                 preferred_element_type=jnp.float32).astype(jnp.bfloat16)  # [tb, nf]

    # Linear(128,256) + ReLU; concat([ue, ie]) @ W1 == ue @ W1[:nf] + ie @ W1[nf:].
    h1 = (jnp.dot(ue, w1u_ref[...], preferred_element_type=jnp.float32)
          + jnp.dot(ie, w1i_ref[...], preferred_element_type=jnp.float32)
          + b1_ref[...])
    h1 = jnp.maximum(h1, 0.0).astype(jnp.bfloat16)

    # Linear(256,128) + ReLU
    h2 = jnp.dot(h1, w2_ref[...], preferred_element_type=jnp.float32) + b2_ref[...]
    h2 = jnp.maximum(h2, 0.0).astype(jnp.bfloat16)

    # Linear(128,64) + ReLU  (cols 64..127 are zero padding -> h3 is lane-full f32)
    h3 = jnp.dot(h2, w3_ref[...], preferred_element_type=jnp.float32) + b3_ref[...]
    h3 = jnp.maximum(h3, 0.0)                                    # [tb, 128] f32

    # Linear(64,1) on the VPU/XLU: mul by the padded w4 row + lane reduce, + b4.
    r = jnp.sum(h3 * w4_ref[...], axis=-1)                       # [tb] f32
    out_ref[...] = (r[None, :] + b4_ref[...]).astype(out_ref.dtype)   # (1, tb)


def _pick_tile(batch):
    # Keep >= 2 grid steps (v7x megacore sharding) while amortizing the ~0.35 us/step
    # pipeline overhead; tb must be a multiple of 128 for the lane-dense output block.
    t = pl.cdiv(batch, 2)
    t = ((t + 255) // 256) * 256
    return int(min(2048, max(256, t)))


def mf_fc_forward(prep, user, item, *, tb=None):
    """Fused forward pass: in-kernel gather + 4-layer MLP. `prep` from prepare_params."""
    B = user.shape[0]
    if tb is None:
        tb = _pick_tile(B)
    n_tiles = pl.cdiv(B, tb)
    B_pad = n_tiles * tb

    user = user.astype(jnp.int32)
    item = item.astype(jnp.int32)
    if B_pad != B:
        # Pad the cheap int32 index vectors (4 B/row), not the gathered activations.
        user = jnp.pad(user, (0, B_pad - B))
        item = jnp.pad(item, (0, B_pad - B))
    uidx = user.reshape(B_pad, 1)
    iidx = item.reshape(B_pad, 1)

    full = lambda i: (0, 0)                         # resident blocks: same block every step
    resident = lambda a: pl.BlockSpec(a.shape, full)

    out = pl.pallas_call(
        mf_fc_kernel,
        out_shape=jax.ShapeDtypeStruct((1, B_pad), jnp.float32),
        grid_spec=pltpu.PrefetchScalarGridSpec(
            num_scalar_prefetch=0,
            grid=(n_tiles,),
            in_specs=[
                # Streamed per-tile id columns (only per-step DMA traffic, ~8 B/row).
                pl.BlockSpec((tb, 1), lambda i: (i, 0)),
                pl.BlockSpec((tb, 1), lambda i: (i, 0)),
                # VMEM-resident tables + weights/biases (few hundred KB total).
                resident(prep["uemb"]), resident(prep["iemb"]),
                resident(prep["w1u"]), resident(prep["w1i"]), resident(prep["b1"]),
                resident(prep["w2"]), resident(prep["b2"]),
                resident(prep["w3"]), resident(prep["b3"]),
                resident(prep["w4"]), resident(prep["b4"]),
            ],
            out_specs=pl.BlockSpec((1, tb), lambda i: (0, i)),   # lane-dense output
        ),
        compiler_params=pltpu.CompilerParams(
            dimension_semantics=("parallel",)),
    )(uidx, iidx,
      prep["uemb"], prep["iemb"],
      prep["w1u"], prep["w1i"], prep["b1"],
      prep["w2"], prep["b2"],
      prep["w3"], prep["b3"],
      prep["w4"], prep["b4"])

    # Drop batch padding (padded rows hold garbage-but-finite values), squeeze to [B].
    return out[0, :B] if B_pad != B else out[0]


def init_params(key, n_users, n_items, n_factors=64):
    """PyTorch-equivalent f32 parameters (weights stored [in_features, out_features])."""
    ks = jax.random.split(key, 10)
    u = lambda k, shape, lo, hi: jax.random.uniform(
        k, shape, dtype=jnp.float32, minval=lo, maxval=hi)

    def linear(kw, kb, fan_in, fan_out):
        bound = 1.0 / float(fan_in) ** 0.5
        return (u(kw, (fan_in, fan_out), -bound, bound),
                u(kb, (1, fan_out), -bound, bound))

    params = {
        "user_emb": u(ks[0], (n_users, n_factors), 0.0, 0.05),
        "item_emb": u(ks[1], (n_items, n_factors), 0.0, 0.05),
    }
    params["w1"], params["b1"] = linear(ks[2], ks[3], n_factors * 2, 256)
    params["w2"], params["b2"] = linear(ks[4], ks[5], 256, 128)
    params["w3"], params["b3"] = linear(ks[6], ks[7], 128, 64)
    bound4 = 1.0 / 8.0
    params["w4_row"] = u(ks[8], (1, 64), -bound4, bound4)        # == W4.T, [1, 64]
    params["b4"] = u(ks[9], (), -bound4, bound4)
    return params


def prepare_params(params):
    """One-time kernel-side prep: bf16 casts, table row padding, lane padding, W1 split."""
    nf = params["user_emb"].shape[1]

    def pad_rows_128(t):
        rp = ((t.shape[0] + 127) // 128) * 128
        return jnp.pad(t, ((0, rp - t.shape[0]), (0, 0)))

    def pad_cols_128(t):
        cp = ((t.shape[1] + 127) // 128) * 128
        return jnp.pad(t, ((0, 0), (0, cp - t.shape[1])))

    return {
        "uemb": pad_rows_128(params["user_emb"]).astype(jnp.bfloat16),
        "iemb": pad_rows_128(params["item_emb"]).astype(jnp.bfloat16),
        "w1u": params["w1"][:nf].astype(jnp.bfloat16),
        "w1i": params["w1"][nf:].astype(jnp.bfloat16),
        "b1": params["b1"],
        "w2": params["w2"].astype(jnp.bfloat16),
        "b2": params["b2"],
        # Zero-pad to 128 lanes so h3 is a lane-full [tb, 128] tile (padding is inert).
        "w3": pad_cols_128(params["w3"]).astype(jnp.bfloat16),
        "b3": pad_cols_128(params["b3"]),
        "w4": pad_cols_128(params["w4_row"]),
        "b4": params["b4"].reshape(1, 1),
    }


if __name__ == "__main__":
    key = jax.random.PRNGKey(0)
    k_params, k_user, k_item = jax.random.split(key, 3)

    n_users, n_items, n_factors = 32, 48, 64
    batch = 300      # not a tile multiple -> exercises index padding + output slice

    params = init_params(k_params, n_users, n_items, n_factors)
    prep = prepare_params(params)

    user = jax.random.randint(k_user, (batch,), 0, n_users, dtype=jnp.int32)
    item = jax.random.randint(k_item, (batch,), 0, n_items, dtype=jnp.int32)

    out = mf_fc_forward(prep, user, item)      # auto tile -> tb=256, 2 grid steps
    jax.block_until_ready(out)

    # Pure-JAX reference (same bf16-weight / f32-accumulation path as the kernel).
    ue = jnp.take(params["user_emb"], user, axis=0).astype(jnp.bfloat16)
    ie = jnp.take(params["item_emb"], item, axis=0).astype(jnp.bfloat16)
    xr = jnp.concatenate([ue, ie], axis=1)
    h = jnp.maximum(jnp.dot(xr, params["w1"].astype(jnp.bfloat16),
                            preferred_element_type=jnp.float32) + params["b1"], 0.0)
    h = jnp.maximum(jnp.dot(h.astype(jnp.bfloat16), params["w2"].astype(jnp.bfloat16),
                            preferred_element_type=jnp.float32) + params["b2"], 0.0)
    h = jnp.maximum(jnp.dot(h.astype(jnp.bfloat16), params["w3"].astype(jnp.bfloat16),
                            preferred_element_type=jnp.float32) + params["b3"], 0.0)
    ref = jnp.sum(h * params["w4_row"], axis=-1) + params["b4"]

    assert out.shape == (batch,)
    err = float(jnp.max(jnp.abs(out - ref)))
    assert jnp.allclose(out, ref, atol=2e-4, rtol=2e-4), err

    print("KERNEL_OK")
</pallas_src>

<mosaic_0001>
module attributes {stable_mosaic.version = 11 : i64} {
  func.func @mf_fc_kernel(%arg0: i32, %arg1: memref<256x1xi32, #tpu.memory_space<vmem>>, %arg2: memref<256x1xi32, #tpu.memory_space<vmem>>, %arg3: memref<128x64xbf16, #tpu.memory_space<vmem>>, %arg4: memref<128x64xbf16, #tpu.memory_space<vmem>>, %arg5: memref<64x256xbf16, #tpu.memory_space<vmem>>, %arg6: memref<64x256xbf16, #tpu.memory_space<vmem>>, %arg7: memref<1x256xf32, #tpu.memory_space<vmem>>, %arg8: memref<256x128xbf16, #tpu.memory_space<vmem>>, %arg9: memref<1x128xf32, #tpu.memory_space<vmem>>, %arg10: memref<128x128xbf16, #tpu.memory_space<vmem>>, %arg11: memref<1x128xf32, #tpu.memory_space<vmem>>, %arg12: memref<1x128xf32, #tpu.memory_space<vmem>>, %arg13: memref<1x1xf32, #tpu.memory_space<vmem>>, %arg14: memref<1x256xf32, #tpu.memory_space<vmem>>) attributes {dimension_semantics = [#tpu.dimension_semantics<parallel>], iteration_bounds = array<i64: 2>, scalar_prefetch = 0 : i64, scratch_operands = 0 : i64, tpu.core_type = #tpu.core_type<tc>, window_params = [{transform_indices = @transform_0, window_bounds = array<i64: 256, 1>}, {transform_indices = @transform_1, window_bounds = array<i64: 256, 1>}, {pipeline_mode = #tpu.pipeline_mode<synchronous>, transform_indices = @transform_2, window_bounds = array<i64: 128, 64>}, {pipeline_mode = #tpu.pipeline_mode<synchronous>, transform_indices = @transform_3, window_bounds = array<i64: 128, 64>}, {pipeline_mode = #tpu.pipeline_mode<synchronous>, transform_indices = @transform_4, window_bounds = array<i64: 64, 256>}, {pipeline_mode = #tpu.pipeline_mode<synchronous>, transform_indices = @transform_5, window_bounds = array<i64: 64, 256>}, {pipeline_mode = #tpu.pipeline_mode<synchronous>, transform_indices = @transform_6, window_bounds = array<i64: 1, 256>}, {pipeline_mode = #tpu.pipeline_mode<synchronous>, transform_indices = @transform_7, window_bounds = array<i64: 256, 128>}, {pipeline_mode = #tpu.pipeline_mode<synchronous>, transform_indices = @transform_8, window_bounds = array<i64: 1, 128>}, {pipeline_mode = #tpu.pipeline_mode<synchronous>, transform_indices = @transform_9, window_bounds = array<i64: 128, 128>}, {pipeline_mode = #tpu.pipeline_mode<synchronous>, transform_indices = @transform_10, window_bounds = array<i64: 1, 128>}, {pipeline_mode = #tpu.pipeline_mode<synchronous>, transform_indices = @transform_11, window_bounds = array<i64: 1, 128>}, {pipeline_mode = #tpu.pipeline_mode<synchronous>, transform_indices = @transform_12, window_bounds = array<i64: 1, 1>}, {transform_indices = @transform_13, window_bounds = array<i64: 1, 256>}]} {
    %0 = tpu.iota {dimensions = array<i32: 1>} : vector<256x128xi32>
    %c0 = arith.constant 0 : index
    %c0_0 = arith.constant 0 : index
    %1 = vector.load %arg1[%c0, %c0_0] : memref<256x1xi32, #tpu.memory_space<vmem>>, vector<256x1xi32>
    %2 = vector.broadcast %1 : vector<256x1xi32> to vector<256x128xi32>
    %3 = arith.cmpi eq, %0, %2 : vector<256x128xi32>
    %4 = arith.extui %3 : vector<256x128xi1> to vector<256x128xi32>
    %5 = arith.sitofp %4 : vector<256x128xi32> to vector<256x128xf32>
    %6 = arith.truncf %5 : vector<256x128xf32> to vector<256x128xbf16>
    %7 = tpu.iota {dimensions = array<i32: 1>} : vector<256x128xi32>
    %c0_1 = arith.constant 0 : index
    %c0_2 = arith.constant 0 : index
    %8 = vector.load %arg2[%c0_1, %c0_2] : memref<256x1xi32, #tpu.memory_space<vmem>>, vector<256x1xi32>
    %9 = vector.broadcast %8 : vector<256x1xi32> to vector<256x128xi32>
    %10 = arith.cmpi eq, %7, %9 : vector<256x128xi32>
    %11 = arith.extui %10 : vector<256x128xi1> to vector<256x128xi32>
    %12 = arith.sitofp %11 : vector<256x128xi32> to vector<256x128xf32>
    %13 = arith.truncf %12 : vector<256x128xf32> to vector<256x128xbf16>
    %c0_3 = arith.constant 0 : index
    %c0_4 = arith.constant 0 : index
    %14 = vector.load %arg3[%c0_3, %c0_4] : memref<128x64xbf16, #tpu.memory_space<vmem>>, vector<128x64xbf16>
    %cst = arith.constant dense<0.000000e+00> : vector<256x64xf32>
    %15 = tpu.matmul %6, %14, %cst {dimension_numbers = #tpu.dot_dimension_numbers<[1], [0], [0], [1], [0, 0, 1, 1], [], []>} : vector<256x128xbf16>, vector<128x64xbf16>, vector<256x64xf32> -> vector<256x64xf32>
    %16 = arith.truncf %15 : vector<256x64xf32> to vector<256x64xbf16>
    %c0_5 = arith.constant 0 : index
    %c0_6 = arith.constant 0 : index
    %17 = vector.load %arg4[%c0_5, %c0_6] : memref<128x64xbf16, #tpu.memory_space<vmem>>, vector<128x64xbf16>
    %cst_7 = arith.constant dense<0.000000e+00> : vector<256x64xf32>
    %18 = tpu.matmul %13, %17, %cst_7 {dimension_numbers = #tpu.dot_dimension_numbers<[1], [0], [0], [1], [0, 0, 1, 1], [], []>} : vector<256x128xbf16>, vector<128x64xbf16>, vector<256x64xf32> -> vector<256x64xf32>
    %19 = arith.truncf %18 : vector<256x64xf32> to vector<256x64xbf16>
    %c0_8 = arith.constant 0 : index
    %c0_9 = arith.constant 0 : index
    %20 = vector.load %arg5[%c0_8, %c0_9] : memref<64x256xbf16, #tpu.memory_space<vmem>>, vector<64x256xbf16>
    %cst_10 = arith.constant dense<0.000000e+00> : vector<256x256xf32>
    %21 = tpu.matmul %16, %20, %cst_10 {dimension_numbers = #tpu.dot_dimension_numbers<[1], [0], [0], [1], [0, 0, 1, 1], [], []>} : vector<256x64xbf16>, vector<64x256xbf16>, vector<256x256xf32> -> vector<256x256xf32>
    %c0_11 = arith.constant 0 : index
    %c0_12 = arith.constant 0 : index
    %22 = vector.load %arg6[%c0_11, %c0_12] : memref<64x256xbf16, #tpu.memory_space<vmem>>, vector<64x256xbf16>
    %cst_13 = arith.constant dense<0.000000e+00> : vector<256x256xf32>
    %23 = tpu.matmul %19, %22, %cst_13 {dimension_numbers = #tpu.dot_dimension_numbers<[1], [0], [0], [1], [0, 0, 1, 1], [], []>} : vector<256x64xbf16>, vector<64x256xbf16>, vector<256x256xf32> -> vector<256x256xf32>
    %24 = arith.addf %21, %23 : vector<256x256xf32>
    %c0_14 = arith.constant 0 : index
    %c0_15 = arith.constant 0 : index
    %25 = vector.load %arg7[%c0_14, %c0_15] : memref<1x256xf32, #tpu.memory_space<vmem>>, vector<1x256xf32>
    %26 = vector.broadcast %25 : vector<1x256xf32> to vector<256x256xf32>
    %27 = arith.addf %24, %26 : vector<256x256xf32>
    %cst_16 = arith.constant 0.000000e+00 : f32
    %28 = vector.broadcast %cst_16 : f32 to vector<256x256xf32>
    %29 = arith.maximumf %27, %28 : vector<256x256xf32>
    %30 = arith.truncf %29 : vector<256x256xf32> to vector<256x256xbf16>
    %c0_17 = arith.constant 0 : index
    %c0_18 = arith.constant 0 : index
    %31 = vector.load %arg8[%c0_17, %c0_18] : memref<256x128xbf16, #tpu.memory_space<vmem>>, vector<256x128xbf16>
    %cst_19 = arith.constant dense<0.000000e+00> : vector<256x128xf32>
    %32 = tpu.matmul %30, %31, %cst_19 {dimension_numbers = #tpu.dot_dimension_numbers<[1], [0], [0], [1], [0, 0, 1, 1], [], []>} : vector<256x256xbf16>, vector<256x128xbf16>, vector<256x128xf32> -> vector<256x128xf32>
    %c0_20 = arith.constant 0 : index
    %c0_21 = arith.constant 0 : index
    %33 = vector.load %arg9[%c0_20, %c0_21] : memref<1x128xf32, #tpu.memory_space<vmem>>, vector<1x128xf32>
    %34 = vector.broadcast %33 : vector<1x128xf32> to vector<256x128xf32>
    %35 = arith.addf %32, %34 : vector<256x128xf32>
    %cst_22 = arith.constant 0.000000e+00 : f32
    %36 = vector.broadcast %cst_22 : f32 to vector<256x128xf32>
    %37 = arith.maximumf %35, %36 : vector<256x128xf32>
    %38 = arith.truncf %37 : vector<256x128xf32> to vector<256x128xbf16>
    %c0_23 = arith.constant 0 : index
    %c0_24 = arith.constant 0 : index
    %39 = vector.load %arg10[%c0_23, %c0_24] : memref<128x128xbf16, #tpu.memory_space<vmem>>, vector<128x128xbf16>
    %cst_25 = arith.constant dense<0.000000e+00> : vector<256x128xf32>
    %40 = tpu.matmul %38, %39, %cst_25 {dimension_numbers = #tpu.dot_dimension_numbers<[1], [0], [0], [1], [0, 0, 1, 1], [], []>} : vector<256x128xbf16>, vector<128x128xbf16>, vector<256x128xf32> -> vector<256x128xf32>
    %c0_26 = arith.constant 0 : index
    %c0_27 = arith.constant 0 : index
    %41 = vector.load %arg11[%c0_26, %c0_27] : memref<1x128xf32, #tpu.memory_space<vmem>>, vector<1x128xf32>
    %42 = vector.broadcast %41 : vector<1x128xf32> to vector<256x128xf32>
    %43 = arith.addf %40, %42 : vector<256x128xf32>
    %cst_28 = arith.constant 0.000000e+00 : f32
    %44 = vector.broadcast %cst_28 : f32 to vector<256x128xf32>
    %45 = arith.maximumf %43, %44 : vector<256x128xf32>
    %c0_29 = arith.constant 0 : index
    %c0_30 = arith.constant 0 : index
    %46 = vector.load %arg12[%c0_29, %c0_30] : memref<1x128xf32, #tpu.memory_space<vmem>>, vector<1x128xf32>
    %47 = vector.broadcast %46 : vector<1x128xf32> to vector<256x128xf32>
    %48 = arith.mulf %45, %47 : vector<256x128xf32>
    %cst_31 = arith.constant dense<0.000000e+00> : vector<256xf32>
    %49 = vector.multi_reduction <add>, %48, %cst_31 [1] : vector<256x128xf32> to vector<256xf32>
    %50 = vector.shape_cast %49 : vector<256xf32> to vector<1x256xf32>
    %c0_32 = arith.constant 0 : index
    %c0_33 = arith.constant 0 : index
    %51 = vector.load %arg13[%c0_32, %c0_33] : memref<1x1xf32, #tpu.memory_space<vmem>>, vector<1x1xf32>
    %52 = vector.broadcast %51 : vector<1x1xf32> to vector<1x256xf32>
    %53 = arith.addf %50, %52 : vector<1x256xf32>
    %c0_34 = arith.constant 0 : index
    %c0_35 = arith.constant 0 : index
    %54 = vector.load %arg14[%c0_34, %c0_35] : memref<1x256xf32, #tpu.memory_space<vmem>>, vector<1x256xf32>
    tpu.vector_store %arg14[%c0_34, %c0_35], %53 {strides = array<i32>} : memref<1x256xf32, #tpu.memory_space<vmem>>, vector<1x256xf32>,
    return
  }
  func.func @transform_0(%arg0: i32) -> (i32, i32) {
    %c0_i32 = arith.constant 0 : i32
    %c0_i32_0 = arith.constant 0 : i32
    return %arg0, %c0_i32 : i32, i32
  }
  func.func @transform_1(%arg0: i32) -> (i32, i32) {
    %c0_i32 = arith.constant 0 : i32
    %c0_i32_0 = arith.constant 0 : i32
    return %arg0, %c0_i32 : i32, i32
  }
  func.func @transform_2(%arg0: i32) -> (i32, i32) {
    %c0_i32 = arith.constant 0 : i32
    %c0_i32_0 = arith.constant 0 : i32
    %c0_i32_1 = arith.constant 0 : i32
    return %c0_i32, %c0_i32_0 : i32, i32
  }
  func.func @transform_3(%arg0: i32) -> (i32, i32) {
    %c0_i32 = arith.constant 0 : i32
    %c0_i32_0 = arith.constant 0 : i32
    %c0_i32_1 = arith.constant 0 : i32
    return %c0_i32, %c0_i32_0 : i32, i32
  }
  func.func @transform_4(%arg0: i32) -> (i32, i32) {
    %c0_i32 = arith.constant 0 : i32
    %c0_i32_0 = arith.constant 0 : i32
    %c0_i32_1 = arith.constant 0 : i32
    return %c0_i32, %c0_i32_0 : i32, i32
  }
  func.func @transform_5(%arg0: i32) -> (i32, i32) {
    %c0_i32 = arith.constant 0 : i32
    %c0_i32_0 = arith.constant 0 : i32
    %c0_i32_1 = arith.constant 0 : i32
    return %c0_i32, %c0_i32_0 : i32, i32
  }
  func.func @transform_6(%arg0: i32) -> (i32, i32) {
    %c0_i32 = arith.constant 0 : i32
    %c0_i32_0 = arith.constant 0 : i32
    %c0_i32_1 = arith.constant 0 : i32
    return %c0_i32, %c0_i32_0 : i32, i32
  }
  func.func @transform_7(%arg0: i32) -> (i32, i32) {
    %c0_i32 = arith.constant 0 : i32
    %c0_i32_0 = arith.constant 0 : i32
    %c0_i32_1 = arith.constant 0 : i32
    return %c0_i32, %c0_i32_0 : i32, i32
  }
  func.func @transform_8(%arg0: i32) -> (i32, i32) {
    %c0_i32 = arith.constant 0 : i32
    %c0_i32_0 = arith.constant 0 : i32
    %c0_i32_1 = arith.constant 0 : i32
    return %c0_i32, %c0_i32_0 : i32, i32
  }
  func.func @transform_9(%arg0: i32) -> (i32, i32) {
    %c0_i32 = arith.constant 0 : i32
    %c0_i32_0 = arith.constant 0 : i32
    %c0_i32_1 = arith.constant 0 : i32
    return %c0_i32, %c0_i32_0 : i32, i32
  }
  func.func @transform_10(%arg0: i32) -> (i32, i32) {
    %c0_i32 = arith.constant 0 : i32
    %c0_i32_0 = arith.constant 0 : i32
    %c0_i32_1 = arith.constant 0 : i32
    return %c0_i32, %c0_i32_0 : i32, i32
  }
  func.func @transform_11(%arg0: i32) -> (i32, i32) {
    %c0_i32 = arith.constant 0 : i32
    %c0_i32_0 = arith.constant 0 : i32
    %c0_i32_1 = arith.constant 0 : i32
    return %c0_i32, %c0_i32_0 : i32, i32
  }
  func.func @transform_12(%arg0: i32) -> (i32, i32) {
    %c0_i32 = arith.constant 0 : i32
    %c0_i32_0 = arith.constant 0 : i32
    %c0_i32_1 = arith.constant 0 : i32
    return %c0_i32, %c0_i32_0 : i32, i32
  }
  func.func @transform_13(%arg0: i32) -> (i32, i32) {
    %c0_i32 = arith.constant 0 : i32
    %c0_i32_0 = arith.constant 0 : i32
    return %c0_i32, %arg0 : i32, i32
  }
}

</mosaic_0001>

<llo_original>
// kernel: tpu_custom_call.1
$region0: #{tpu_custom_call.1}
  #allocation0 [shape = 'u32[]', space=smem, size = 0x4, offset = 0x4, fixed_abs, tag = 'smem constant byte address 0x4 - core index']
  #allocation1 [shape = 'u32[144,128]{1,0:T(1,128)}', space=vmem, size = 0x12000, scoped, tag = 'internal scratch']
  #allocation2 [shape = 'f32[1,1]{1,0:T(1,128)S(1)}', space=vmem, size = 0x200, scoped, tag = 'scoped memory for tpu_custom_call.1']
  %s0 = inlined_call_operand.vmem [shape: s32[512,1], index: 0, kind: input, shape index: {}]
  %s1 = inlined_call_operand.vmem [shape: s32[512,1], index: 1, kind: input, shape index: {}]
  %s2 = inlined_call_operand.vmem [shape: bf16[128,64], index: 2, kind: input, shape index: {}]
  %s3 = inlined_call_operand.vmem [shape: bf16[128,64], index: 3, kind: input, shape index: {}]
  %s4 = inlined_call_operand.vmem [shape: bf16[64,256], index: 4, kind: input, shape index: {}]
  %s5 = inlined_call_operand.vmem [shape: bf16[64,256], index: 5, kind: input, shape index: {}]
  %s6 = inlined_call_operand.vmem [shape: f32[1,256], index: 6, kind: input, shape index: {}]
  %s7 = inlined_call_operand.vmem [shape: bf16[256,128], index: 7, kind: input, shape index: {}]
  %s8 = inlined_call_operand.vmem [shape: f32[1,128], index: 8, kind: input, shape index: {}]
  %s9 = inlined_call_operand.vmem [shape: bf16[128,128], index: 9, kind: input, shape index: {}]
  %s10 = inlined_call_operand.vmem [shape: f32[1,128], index: 10, kind: input, shape index: {}]
  %s11 = inlined_call_operand.vmem [shape: f32[1,128], index: 11, kind: input, shape index: {}]
  %s12 = inlined_call_operand.<no memory space> [shape: f32[1,1], index: 12, kind: input, shape index: {}]
  %s13 = inlined_call_operand.hbm [shape: f32[1,512], index: 13, kind: output, shape index: {}]
  %s14 = sld [smem:[#allocation0]]
  $region85: #{tpu_custom_call.1} parent=0
    _
  %s16 = ssub.s32 1, %s14
  %s17 = scalar_select 0, %s16, %s14
  %v18 = vstv %s12
  %19 = vst [vmem:[#allocation2] sm:$0x1] %v18
  $region1: #{tpu_custom_call.1} parent=0
    #allocation3 [shape = 'u8[2048]{0}', space=vmem, size = 0x800, scoped, tag = 'output window, operand 0']
    #allocation4 [shape = 's32[2]{0}', space=sflag, size = 0x8, scoped, tag = 'scoped memory for tpu_custom_call.1']
    %20 = vsyncpa [#allocation4], 0
    %s21 = scalar_lea.sflag [#allocation4], 1
    %22 = vsyncpa %s21, 0
    loop: start=0, step=1, limit=4
    $region2: #{tpu_custom_call.1} parent=1 // loop_pre_header
      _
    $region3: #{tpu_custom_call.1} parent=1 // loop_header
      %s24 = sphi 0, %s28
      %p25 = scmp.ge.s32.totalorder %s24, 4
      %s34 = sphi 0, %s36
      %s37 = sphi 0, %s34
      %s38 = sphi 0, %s37
      %s54 = sphi 0, %s38
      %s60 = sphi 0, %s62
      %s63 = sphi 0, %s60
      %s64 = sphi 0, %s63
      %s80 = sphi 0, %s64
      %s84 = sphi 0, %s84
      %s86 = sphi 0, %s84
      %s87 = sphi 0, %s86
      %s101 = sphi 0, %s87
      %s105 = sphi 0, %s105
      %s107 = sphi 0, %s105
      %s108 = sphi 0, %s107
      %s122 = sphi 0, %s108
      %s126 = sphi 0, %s126
      %s128 = sphi 0, %s126
      %s129 = sphi 0, %s128
      %s143 = sphi 0, %s129
      %s147 = sphi 0, %s147
      %s149 = sphi 0, %s147
      %s150 = sphi 0, %s149
      %s164 = sphi 0, %s150
      %s168 = sphi 0, %s168
      %s170 = sphi 0, %s168
      %s171 = sphi 0, %s170
      %s185 = sphi 0, %s171
      %s189 = sphi 0, %s189
      %s191 = sphi 0, %s189
      %s192 = sphi 0, %s191
      %s206 = sphi 0, %s192
      %s210 = sphi 0, %s210
      %s212 = sphi 0, %s210
      %s213 = sphi 0, %s212
      %s227 = sphi 0, %s213
      %s231 = sphi 0, %s231
      %s233 = sphi 0, %s231
      %s234 = sphi 0, %s233
      %s248 = sphi 0, %s234
      %s252 = sphi 0, %s252
      %s254 = sphi 0, %s252
      %s255 = sphi 0, %s254
      %s269 = sphi 0, %s255
      %s273 = sphi 0, %s273
      %s275 = sphi 0, %s273
      %s276 = sphi 0, %s275
      %s290 = sphi 0, %s276
      %s294 = sphi 0, %s294
      %s296 = sphi 0, %s294
      %s297 = sphi 0, %s296
      %s311 = sphi 0, %s297
      %s317 = sphi 0, %s319
      %s320 = sphi 0, %s317
      %s321 = sphi 0, %s320
      %s337 = sphi 0, %s321
    $region4: #{tpu_custom_call.1} parent=1 // loop_header_branch
      %27 = sbr.rel (%p25) target = $region8
    $region5: #{tpu_custom_call.1} parent=1 // loop_body
      %s29 = ssub.s32 %s24, 1
      %s30 = ssub.s32 %s24, 2
      %s31 = sadd.s32 %s24, 1
      %s32 = ssub.s32 %s24, %s31
      %p33 = scmp.eq.s32.totalorder %s32, 0
      %s35 = sadd.s32 %s34, 1
      %s36 = scalar_select %p33, %s34, %s35
      %p39 = pneg %p33
      %p40 = scmp.eq.s32.totalorder %s24, 1
      %p41 = por %p39, %p40
      %p42 = scmp.ne.s32.totalorder %s34, %s37
      %p43 = scmp.eq.s32.totalorder %s24, 0
      %p44 = por %p42, %p43
      %p45 = scmp.ne.s32.totalorder %s34, %s37
      %p46 = scmp.eq.s32.totalorder %s29, 1
      %p47 = por %p45, %p46
      %p48 = scmp.ne.s32.totalorder %s37, %s38
      %p49 = scmp.eq.s32.totalorder %s29, 0
      %p50 = por %p48, %p49
      %p51 = scmp.ne.s32.totalorder %s37, %s38
      %p52 = scmp.eq.s32.totalorder %s30, 1
      %p53 = por %p51, %p52
      %p55 = scmp.ne.s32.totalorder %s38, %s54
      %p56 = scmp.eq.s32.totalorder %s30, 0
      %p57 = por %p55, %p56
      %s58 = ssub.s32 %s24, %s31
      %p59 = scmp.eq.s32.totalorder %s58, 0
      %s61 = sadd.s32 %s60, 1
      %s62 = scalar_select %p59, %s60, %s61
      %p65 = pneg %p59
      %p66 = scmp.eq.s32.totalorder %s24, 1
      %p67 = por %p65, %p66
      %p68 = scmp.ne.s32.totalorder %s60, %s63
      %p69 = scmp.eq.s32.totalorder %s24, 0
      %p70 = por %p68, %p69
      %p71 = scmp.ne.s32.totalorder %s60, %s63
      %p72 = scmp.eq.s32.totalorder %s29, 1
      %p73 = por %p71, %p72
      %p74 = scmp.ne.s32.totalorder %s63, %s64
      %p75 = scmp.eq.s32.totalorder %s29, 0
      %p76 = por %p74, %p75
      %p77 = scmp.ne.s32.totalorder %s63, %s64
      %p78 = scmp.eq.s32.totalorder %s30, 1
      %p79 = por %p77, %p78
      %p81 = scmp.ne.s32.totalorder %s64, %s80
      %p82 = scmp.eq.s32.totalorder %s30, 0
      %p83 = por %p81, %p82
      %s85 = sadd.s32 %s84, 1
      %p88 = scmp.eq.s32.totalorder %s24, 1
      %p89 = scmp.ne.s32.totalorder %s84, %s86
      %p90 = scmp.eq.s32.totalorder %s24, 0
      %p91 = por %p89, %p90
      %p92 = scmp.ne.s32.totalorder %s84, %s86
      %p93 = scmp.eq.s32.totalorder %s29, 1
      %p94 = por %p92, %p93
      %p95 = scmp.ne.s32.totalorder %s86, %s87
      %p96 = scmp.eq.s32.totalorder %s29, 0
      %p97 = por %p95, %p96
      %p98 = scmp.ne.s32.totalorder %s86, %s87
      %p99 = scmp.eq.s32.totalorder %s30, 1
      %p100 = por %p98, %p99
      %p102 = scmp.ne.s32.totalorder %s87, %s101
      %p103 = scmp.eq.s32.totalorder %s30, 0
      %p104 = por %p102, %p103
      %s106 = sadd.s32 %s105, 1
      %p109 = scmp.eq.s32.totalorder %s24, 1
      %p110 = scmp.ne.s32.totalorder %s105, %s107
      %p111 = scmp.eq.s32.totalorder %s24, 0
      %p112 = por %p110, %p111
      %p113 = scmp.ne.s32.totalorder %s105, %s107
      %p114 = scmp.eq.s32.totalorder %s29, 1
      %p115 = por %p113, %p114
      %p116 = scmp.ne.s32.totalorder %s107, %s108
      %p117 = scmp.eq.s32.totalorder %s29, 0
      %p118 = por %p116, %p117
      %p119 = scmp.ne.s32.totalorder %s107, %s108
      %p120 = scmp.eq.s32.totalorder %s30, 1
      %p121 = por %p119, %p120
      %p123 = scmp.ne.s32.totalorder %s108, %s122
      %p124 = scmp.eq.s32.totalorder %s30, 0
      %p125 = por %p123, %p124
      %s127 = sadd.s32 %s126, 1
      %p130 = scmp.eq.s32.totalorder %s24, 1
      %p131 = scmp.ne.s32.totalorder %s126, %s128
      %p132 = scmp.eq.s32.totalorder %s24, 0
      %p133 = por %p131, %p132
      %p134 = scmp.ne.s32.totalorder %s126, %s128
      %p135 = scmp.eq.s32.totalorder %s29, 1
      %p136 = por %p134, %p135
      %p137 = scmp.ne.s32.totalorder %s128, %s129
      %p138 = scmp.eq.s32.totalorder %s29, 0
      %p139 = por %p137, %p138
      %p140 = scmp.ne.s32.totalorder %s128, %s129
      %p141 = scmp.eq.s32.totalorder %s30, 1
      %p142 = por %p140, %p141
      %p144 = scmp.ne.s32.totalorder %s129, %s143
      %p145 = scmp.eq.s32.totalorder %s30, 0
      %p146 = por %p144, %p145
      %s148 = sadd.s32 %s147, 1
      %p151 = scmp.eq.s32.totalorder %s24, 1
      %p152 = scmp.ne.s32.totalorder %s147, %s149
      %p153 = scmp.eq.s32.totalorder %s24, 0
      %p154 = por %p152, %p153
      %p155 = scmp.ne.s32.totalorder %s147, %s149
      %p156 = scmp.eq.s32.totalorder %s29, 1
      %p157 = por %p155, %p156
      %p158 = scmp.ne.s32.totalorder %s149, %s150
      %p159 = scmp.eq.s32.totalorder %s29, 0
      %p160 = por %p158, %p159
      %p161 = scmp.ne.s32.totalorder %s149, %s150
      %p162 = scmp.eq.s32.totalorder %s30, 1
      %p163 = por %p161, %p162
      %p165 = scmp.ne.s32.totalorder %s150, %s164
      %p166 = scmp.eq.s32.totalorder %s30, 0
      %p167 = por %p165, %p166
      %s169 = sadd.s32 %s168, 1
      %p172 = scmp.eq.s32.totalorder %s24, 1
      %p173 = scmp.ne.s32.totalorder %s168, %s170
      %p174 = scmp.eq.s32.totalorder %s24, 0
      %p175 = por %p173, %p174
      %p176 = scmp.ne.s32.totalorder %s168, %s170
      %p177 = scmp.eq.s32.totalorder %s29, 1
      %p178 = por %p176, %p177
      %p179 = scmp.ne.s32.totalorder %s170, %s171
      %p180 = scmp.eq.s32.totalorder %s29, 0
      %p181 = por %p179, %p180
      %p182 = scmp.ne.s32.totalorder %s170, %s171
      %p183 = scmp.eq.s32.totalorder %s30, 1
      %p184 = por %p182, %p183
      %p186 = scmp.ne.s32.totalorder %s171, %s185
      %p187 = scmp.eq.s32.totalorder %s30, 0
      %p188 = por %p186, %p187
      %s190 = sadd.s32 %s189, 1
      %p193 = scmp.eq.s32.totalorder %s24, 1
      %p194 = scmp.ne.s32.totalorder %s189, %s191
      %p195 = scmp.eq.s32.totalorder %s24, 0
      %p196 = por %p194, %p195
      %p197 = scmp.ne.s32.totalorder %s189, %s191
      %p198 = scmp.eq.s32.totalorder %s29, 1
      %p199 = por %p197, %p198
      %p200 = scmp.ne.s32.totalorder %s191, %s192
      %p201 = scmp.eq.s32.totalorder %s29, 0
      %p202 = por %p200, %p201
      %p203 = scmp.ne.s32.totalorder %s191, %s192
      %p204 = scmp.eq.s32.totalorder %s30, 1
      %p205 = por %p203, %p204
      %p207 = scmp.ne.s32.totalorder %s192, %s206
      %p208 = scmp.eq.s32.totalorder %s30, 0
      %p209 = por %p207, %p208
      %s211 = sadd.s32 %s210, 1
      %p214 = scmp.eq.s32.totalorder %s24, 1
      %p215 = scmp.ne.s32.totalorder %s210, %s212
      %p216 = scmp.eq.s32.totalorder %s24, 0
      %p217 = por %p215, %p216
      %p218 = scmp.ne.s32.totalorder %s210, %s212
      %p219 = scmp.eq.s32.totalorder %s29, 1
      %p220 = por %p218, %p219
      %p221 = scmp.ne.s32.totalorder %s212, %s213
      %p222 = scmp.eq.s32.totalorder %s29, 0
      %p223 = por %p221, %p222
      %p224 = scmp.ne.s32.totalorder %s212, %s213
      %p225 = scmp.eq.s32.totalorder %s30, 1
      %p226 = por %p224, %p225
      %p228 = scmp.ne.s32.totalorder %s213, %s227
      %p229 = scmp.eq.s32.totalorder %s30, 0
      %p230 = por %p228, %p229
      %s232 = sadd.s32 %s231, 1
      %p235 = scmp.eq.s32.totalorder %s24, 1
      %p236 = scmp.ne.s32.totalorder %s231, %s233
      %p237 = scmp.eq.s32.totalorder %s24, 0
      %p238 = por %p236, %p237
      %p239 = scmp.ne.s32.totalorder %s231, %s233
      %p240 = scmp.eq.s32.totalorder %s29, 1
      %p241 = por %p239, %p240
      %p242 = scmp.ne.s32.totalorder %s233, %s234
      %p243 = scmp.eq.s32.totalorder %s29, 0
      %p244 = por %p242, %p243
      %p245 = scmp.ne.s32.totalorder %s233, %s234
      %p246 = scmp.eq.s32.totalorder %s30, 1
      %p247 = por %p245, %p246
      %p249 = scmp.ne.s32.totalorder %s234, %s248
      %p250 = scmp.eq.s32.totalorder %s30, 0
      %p251 = por %p249, %p250
      %s253 = sadd.s32 %s252, 1
      %p256 = scmp.eq.s32.totalorder %s24, 1
      %p257 = scmp.ne.s32.totalorder %s252, %s254
      %p258 = scmp.eq.s32.totalorder %s24, 0
      %p259 = por %p257, %p258
      %p260 = scmp.ne.s32.totalorder %s252, %s254
      %p261 = scmp.eq.s32.totalorder %s29, 1
      %p262 = por %p260, %p261
      %p263 = scmp.ne.s32.totalorder %s254, %s255
      %p264 = scmp.eq.s32.totalorder %s29, 0
      %p265 = por %p263, %p264
      %p266 = scmp.ne.s32.totalorder %s254, %s255
      %p267 = scmp.eq.s32.totalorder %s30, 1
      %p268 = por %p266, %p267
      %p270 = scmp.ne.s32.totalorder %s255, %s269
      %p271 = scmp.eq.s32.totalorder %s30, 0
      %p272 = por %p270, %p271
      %s274 = sadd.s32 %s273, 1
      %p277 = scmp.eq.s32.totalorder %s24, 1
      %p278 = scmp.ne.s32.totalorder %s273, %s275
      %p279 = scmp.eq.s32.totalorder %s24, 0
      %p280 = por %p278, %p279
      %p281 = scmp.ne.s32.totalorder %s273, %s275
      %p282 = scmp.eq.s32.totalorder %s29, 1
      %p283 = por %p281, %p282
      %p284 = scmp.ne.s32.totalorder %s275, %s276
      %p285 = scmp.eq.s32.totalorder %s29, 0
      %p286 = por %p284, %p285
      %p287 = scmp.ne.s32.totalorder %s275, %s276
      %p288 = scmp.eq.s32.totalorder %s30, 1
      %p289 = por %p287, %p288
      %p291 = scmp.ne.s32.totalorder %s276, %s290
      %p292 = scmp.eq.s32.totalorder %s30, 0
      %p293 = por %p291, %p292
      %s295 = sadd.s32 %s294, 1
      %p298 = scmp.eq.s32.totalorder %s24, 1
      %p299 = scmp.ne.s32.totalorder %s294, %s296
      %p300 = scmp.eq.s32.totalorder %s24, 0
      %p301 = por %p299, %p300
      %p302 = scmp.ne.s32.totalorder %s294, %s296
      %p303 = scmp.eq.s32.totalorder %s29, 1
      %p304 = por %p302, %p303
      %p305 = scmp.ne.s32.totalorder %s296, %s297
      %p306 = scmp.eq.s32.totalorder %s29, 0
      %p307 = por %p305, %p306
      %p308 = scmp.ne.s32.totalorder %s296, %s297
      %p309 = scmp.eq.s32.totalorder %s30, 1
      %p310 = por %p308, %p309
      %p312 = scmp.ne.s32.totalorder %s297, %s311
      %p313 = scmp.eq.s32.totalorder %s30, 0
      %p314 = por %p312, %p313
      %s315 = ssub.s32 %s24, %s31
      %p316 = scmp.eq.s32.totalorder %s315, 0
      %s318 = sadd.s32 %s317, 1
      %s319 = scalar_select %p316, %s317, %s318
      %p322 = pneg %p316
      %p323 = scmp.eq.s32.totalorder %s24, 1
      %p324 = por %p322, %p323
      %p325 = scmp.ne.s32.totalorder %s317, %s320
      %p326 = scmp.eq.s32.totalorder %s24, 0
      %p327 = por %p325, %p326
      %p328 = scmp.ne.s32.totalorder %s317, %s320
      %p329 = scmp.eq.s32.totalorder %s29, 1
      %p330 = por %p328, %p329
      %p331 = scmp.ne.s32.totalorder %s320, %s321
      %p332 = scmp.eq.s32.totalorder %s29, 0
      %p333 = por %p331, %p332
      %p334 = scmp.ne.s32.totalorder %s320, %s321
      %p335 = scmp.eq.s32.totalorder %s30, 1
      %p336 = por %p334, %p335
      %p338 = scmp.ne.s32.totalorder %s321, %s337
      %p339 = scmp.eq.s32.totalorder %s30, 0
      %p340 = por %p338, %p339
      %p341 = scmp.le.s32.totalorder 1, %s24
      %p342 = scmp.lt.s32.totalorder %s24, 3
      %p343 = pnand %p341, %p342
      %p344 = pneg %p343
      // Predicated region
      $region9: #{tpu_custom_call.1} parent=5 // pred_check
        _
      $region10: #{tpu_custom_call.1} parent=5 // pred_check_branch
        %346 = sbr.rel (%p343) target = $region12
      $region11: #{tpu_custom_call.1} parent=5 // pred_region
        %s347 = ssub.s32 %s24, 1
        // Predicated region
        $region13: #{tpu_custom_call.1} parent=11 // pred_check
          %p348 = pneg %p97
        $region14: #{tpu_custom_call.1} parent=11 // pred_check_branch
          %350 = sbr.rel (%p348) target = $region16
        $region15: #{tpu_custom_call.1} parent=11 // pred_region
          _
        $region16: #{tpu_custom_call.1} parent=11 // pred_fallthru
          _
        // Predicated region
        $region17: #{tpu_custom_call.1} parent=11 // pred_check
          %p351 = pneg %p118
        $region18: #{tpu_custom_call.1} parent=11 // pred_check_branch
          %353 = sbr.rel (%p351) target = $region20
        $region19: #{tpu_custom_call.1} parent=11 // pred_region
          _
        $region20: #{tpu_custom_call.1} parent=11 // pred_fallthru
          _
        // Predicated region
        $region21: #{tpu_custom_call.1} parent=11 // pred_check
          %p354 = pneg %p139
        $region22: #{tpu_custom_call.1} parent=11 // pred_check_branch
          %356 = sbr.rel (%p354) target = $region24
        $region23: #{tpu_custom_call.1} parent=11 // pred_region
          _
        $region24: #{tpu_custom_call.1} parent=11 // pred_fallthru
          _
        // Predicated region
        $region25: #{tpu_custom_call.1} parent=11 // pred_check
          %p357 = pneg %p160
        $region26: #{tpu_custom_call.1} parent=11 // pred_check_branch
          %359 = sbr.rel (%p357) target = $region28
        $region27: #{tpu_custom_call.1} parent=11 // pred_region
          _
        $region28: #{tpu_custom_call.1} parent=11 // pred_fallthru
          _
        // Predicated region
        $region29: #{tpu_custom_call.1} parent=11 // pred_check
          %p360 = pneg %p181
        $region30: #{tpu_custom_call.1} parent=11 // pred_check_branch
          %362 = sbr.rel (%p360) target = $region32
        $region31: #{tpu_custom_call.1} parent=11 // pred_region
          _
        $region32: #{tpu_custom_call.1} parent=11 // pred_fallthru
          _
        // Predicated region
        $region33: #{tpu_custom_call.1} parent=11 // pred_check
          %p363 = pneg %p202
        $region34: #{tpu_custom_call.1} parent=11 // pred_check_branch
          %365 = sbr.rel (%p363) target = $region36
        $region35: #{tpu_custom_call.1} parent=11 // pred_region
          _
        $region36: #{tpu_custom_call.1} parent=11 // pred_fallthru
          _
        // Predicated region
        $region37: #{tpu_custom_call.1} parent=11 // pred_check
          %p366 = pneg %p223
        $region38: #{tpu_custom_call.1} parent=11 // pred_check_branch
          %368 = sbr.rel (%p366) target = $region40
        $region39: #{tpu_custom_call.1} parent=11 // pred_region
          _
        $region40: #{tpu_custom_call.1} parent=11 // pred_fallthru
          _
        // Predicated region
        $region41: #{tpu_custom_call.1} parent=11 // pred_check
          %p369 = pneg %p244
        $region42: #{tpu_custom_call.1} parent=11 // pred_check_branch
          %371 = sbr.rel (%p369) target = $region44
        $region43: #{tpu_custom_call.1} parent=11 // pred_region
          _
        $region44: #{tpu_custom_call.1} parent=11 // pred_fallthru
          _
        // Predicated region
        $region45: #{tpu_custom_call.1} parent=11 // pred_check
          %p372 = pneg %p265
        $region46: #{tpu_custom_call.1} parent=11 // pred_check_branch
          %374 = sbr.rel (%p372) target = $region48
        $region47: #{tpu_custom_call.1} parent=11 // pred_region
          _
        $region48: #{tpu_custom_call.1} parent=11 // pred_fallthru
          _
        // Predicated region
        $region49: #{tpu_custom_call.1} parent=11 // pred_check
          %p375 = pneg %p286
        $region50: #{tpu_custom_call.1} parent=11 // pred_check_branch
          %377 = sbr.rel (%p375) target = $region52
        $region51: #{tpu_custom_call.1} parent=11 // pred_region
          _
        $region52: #{tpu_custom_call.1} parent=11 // pred_fallthru
          _
        // Predicated region
        $region53: #{tpu_custom_call.1} parent=11 // pred_check
          %p378 = pneg %p307
        $region54: #{tpu_custom_call.1} parent=11 // pred_check_branch
          %380 = sbr.rel (%p378) target = $region56
        $region55: #{tpu_custom_call.1} parent=11 // pred_region
          _
        $region56: #{tpu_custom_call.1} parent=11 // pred_fallthru
          _
      $region12: #{tpu_custom_call.1} parent=5 // pred_fallthru
        _
      %p381 = scmp.lt.s32.totalorder %s24, 2
      // Predicated region
      $region57: #{tpu_custom_call.1} parent=5 // pred_check
        %p382 = pneg %p381
      $region58: #{tpu_custom_call.1} parent=5 // pred_check_branch
        %384 = sbr.rel (%p382) target = $region60
      $region59: #{tpu_custom_call.1} parent=5 // pred_region
        // Predicated region
        $region61: #{tpu_custom_call.1} parent=59 // pred_check
          %p385 = pneg %p44
        $region62: #{tpu_custom_call.1} parent=59 // pred_check_branch
          %387 = sbr.rel (%p385) target = $region64
        $region63: #{tpu_custom_call.1} parent=59 // pred_region
          %s388 = smul.u32 32, %s24
          %p389 = scmp.lt.s32.totalorder %s388, 63
          %s390 = scalar_select %p389, %s388, 63
          %s391 = smul.addr %s390, 8
          %s392 = scalar_lea.vmem %s0, %s391
          %s393 = smul.u32 32, %s24
        $region64: #{tpu_custom_call.1} parent=59 // pred_fallthru
          _
        // Predicated region
        $region65: #{tpu_custom_call.1} parent=59 // pred_check
          %p394 = pneg %p70
        $region66: #{tpu_custom_call.1} parent=59 // pred_check_branch
          %396 = sbr.rel (%p394) target = $region68
        $region67: #{tpu_custom_call.1} parent=59 // pred_region
          %s397 = smul.u32 32, %s24
          %p398 = scmp.lt.s32.totalorder %s397, 63
          %s399 = scalar_select %p398, %s397, 63
          %s400 = smul.addr %s399, 8
          %s401 = scalar_lea.vmem %s1, %s400
          %s402 = smul.u32 32, %s24
        $region68: #{tpu_custom_call.1} parent=59 // pred_fallthru
          _
      $region60: #{tpu_custom_call.1} parent=5 // pred_fallthru
        _
      %p403 = scmp.le.s32.totalorder 1, %s24
      %p404 = scmp.lt.s32.totalorder %s24, 3
      %p405 = pnand %p403, %p404
      %p406 = pneg %p405
      // Predicated region
      $region69: #{tpu_custom_call.1} parent=5 // pred_check
        _
      $region70: #{tpu_custom_call.1} parent=5 // pred_check_branch
        %408 = sbr.rel (%p405) target = $region72
      $region71: #{tpu_custom_call.1} parent=5 // pred_region
        %s409 = ssub.s32 %s24, 1
        %s410 = smul.u32 32, %s29
        %p411 = scmp.lt.s32.totalorder %s410, 63
        %s412 = scalar_select %p411, %s410, 63
        %s413 = smul.addr %s412, 8
        %s414 = scalar_lea.vmem %s0, %s413
        %p415 = pneg %p50
        %p416 = pneg %p47
        %s417 = smul.u32 32, %s29
        %p418 = scmp.lt.s32.totalorder %s417, 63
        %s419 = scalar_select %p418, %s417, 63
        %s420 = smul.addr %s419, 8
        %s421 = scalar_lea.vmem %s1, %s420
        %p422 = pneg %p76
        %p423 = pneg %p73
        %p424 = pneg %p97
        %p425 = pneg %p94
        %p426 = pneg %p118
        %p427 = pneg %p115
        %p428 = pneg %p139
        %p429 = pneg %p136
        %p430 = pneg %p160
        %p431 = pneg %p157
        %p432 = pneg %p181
        %p433 = pneg %p178
        %p434 = pneg %p202
        %p435 = pneg %p199
        %p436 = pneg %p223
        %p437 = pneg %p220
        %p438 = pneg %p244
        %p439 = pneg %p241
        %p440 = pneg %p265
        %p441 = pneg %p262
        %p442 = pneg %p286
        %p443 = pneg %p283
        %p444 = pneg %p307
        %p445 = pneg %p304
        %p446 = pneg %p333
        %p447 = pneg %p330
        %s448 = sand.u32 %s320, 1
        %s449 = scalar_lea.sflag [#allocation4], %s448
        %s450 = sand.u32 %s320, 1
        %s451 = smul.addr %s450, 2
        %s452 = scalar_lea.vmem [#allocation3], %s451
        %s453 = smul.u32 32, %s29
        %p454 = scmp.lt.s32.totalorder %s453, 63
        %s455 = scalar_select %p454, %s453, 63
        %s456 = smul.addr %s455, 8
        %s457 = scalar_lea.vmem %s0, %s456
        %s458 = smul.u32 32, %s29
        %s459 = smul.u32 32, %s29
        %p460 = scmp.lt.s32.totalorder %s459, 63
        %s461 = scalar_select %p460, %s459, 63
        %s462 = smul.addr %s461, 8
        %s463 = scalar_lea.vmem %s1, %s462
        %s464 = smul.u32 32, %s29
        %s465 = smul.u32 2, %s29
        %v467 = vlaneseq
        %v468 = vand.u32 %v467, 127
        %v469 = vld [vmem:[%s457] sm:$0xff]
        %v470 = vld [vmem:[%s457 + $0x8] sm:$0xff]
        %v471 = vld [vmem:[%s457 + $0x10] sm:$0xff]
        %v472 = vld [vmem:[%s457 + $0x18] sm:$0xff]
        %v473 = vld [vmem:[%s457 + $0x20] sm:$0xff]
        %v474 = vld [vmem:[%s457 + $0x28] sm:$0xff]
        %v475 = vld [vmem:[%s457 + $0x30] sm:$0xff]
        %v476 = vld [vmem:[%s457 + $0x38] sm:$0xff]
        %v477 = vld [vmem:[%s457 + $0x40] sm:$0xff]
        %v478 = vld [vmem:[%s457 + $0x48] sm:$0xff]
        %v479 = vld [vmem:[%s457 + $0x50] sm:$0xff]
        %v480 = vld [vmem:[%s457 + $0x58] sm:$0xff]
        %v481 = vld [vmem:[%s457 + $0x60] sm:$0xff]
        %v482 = vld [vmem:[%s457 + $0x68] sm:$0xff]
        %v483 = vld [vmem:[%s457 + $0x70] sm:$0xff]
        %v484 = vld [vmem:[%s457 + $0x78] sm:$0xff]
        %v485 = vld [vmem:[%s457 + $0x80] sm:$0xff]
        %v486 = vld [vmem:[%s457 + $0x88] sm:$0xff]
        %v487 = vld [vmem:[%s457 + $0x90] sm:$0xff]
        %v488 = vld [vmem:[%s457 + $0x98] sm:$0xff]
        %v489 = vld [vmem:[%s457 + $0xa0] sm:$0xff]
        %v490 = vld [vmem:[%s457 + $0xa8] sm:$0xff]
        %v491 = vld [vmem:[%s457 + $0xb0] sm:$0xff]
        %v492 = vld [vmem:[%s457 + $0xb8] sm:$0xff]
        %v493 = vld [vmem:[%s457 + $0xc0] sm:$0xff]
        %v494 = vld [vmem:[%s457 + $0xc8] sm:$0xff]
        %v495 = vld [vmem:[%s457 + $0xd0] sm:$0xff]
        %v496 = vld [vmem:[%s457 + $0xd8] sm:$0xff]
        %v497 = vld [vmem:[%s457 + $0xe0] sm:$0xff]
        %v498 = vld [vmem:[%s457 + $0xe8] sm:$0xff]
        %v499 = vld [vmem:[%s457 + $0xf0] sm:$0xff]
        %v500 = vld [vmem:[%s457 + $0xf8] sm:$0xff]
        %501 = vset.pattern.permute.xlu0 0
        %502 = vperm.xlu0 %501, %v469
        %v503 = vpop.permute.xlu0 %502
        %504 = vset.pattern.permute.xlu0 0
        %505 = vperm.xlu0 %504, %v470
        %v506 = vpop.permute.xlu0 %505
        %507 = vset.pattern.permute.xlu0 0
        %508 = vperm.xlu0 %507, %v471
        %v509 = vpop.permute.xlu0 %508
        %510 = vset.pattern.permute.xlu0 0
        %511 = vperm.xlu0 %510, %v472
        %v512 = vpop.permute.xlu0 %511
        %513 = vset.pattern.permute.xlu0 0
        %514 = vperm.xlu0 %513, %v473
        %v515 = vpop.permute.xlu0 %514
        %516 = vset.pattern.permute.xlu0 0
        %517 = vperm.xlu0 %516, %v474
        %v518 = vpop.permute.xlu0 %517
        %519 = vset.pattern.permute.xlu0 0
        %520 = vperm.xlu0 %519, %v475
        %v521 = vpop.permute.xlu0 %520
        %522 = vset.pattern.permute.xlu0 0
        %523 = vperm.xlu0 %522, %v476
        %v524 = vpop.permute.xlu0 %523
        %525 = vset.pattern.permute.xlu0 0
        %526 = vperm.xlu0 %525, %v477
        %v527 = vpop.permute.xlu0 %526
        %528 = vset.pattern.permute.xlu0 0
        %529 = vperm.xlu0 %528, %v478
        %v530 = vpop.permute.xlu0 %529
        %531 = vset.pattern.permute.xlu0 0
        %532 = vperm.xlu0 %531, %v479
        %v533 = vpop.permute.xlu0 %532
        %534 = vset.pattern.permute.xlu0 0
        %535 = vperm.xlu0 %534, %v480
        %v536 = vpop.permute.xlu0 %535
        %537 = vset.pattern.permute.xlu0 0
        %538 = vperm.xlu0 %537, %v481
        %v539 = vpop.permute.xlu0 %538
        %540 = vset.pattern.permute.xlu0 0
        %541 = vperm.xlu0 %540, %v482
        %v542 = vpop.permute.xlu0 %541
        %543 = vset.pattern.permute.xlu0 0
        %544 = vperm.xlu0 %543, %v483
        %v545 = vpop.permute.xlu0 %544
        %546 = vset.pattern.permute.xlu0 0
        %547 = vperm.xlu0 %546, %v484
        %v548 = vpop.permute.xlu0 %547
        %549 = vset.pattern.permute.xlu0 0
        %550 = vperm.xlu0 %549, %v485
        %v551 = vpop.permute.xlu0 %550
        %552 = vset.pattern.permute.xlu0 0
        %553 = vperm.xlu0 %552, %v486
        %v554 = vpop.permute.xlu0 %553
        %555 = vset.pattern.permute.xlu0 0
        %556 = vperm.xlu0 %555, %v487
        %v557 = vpop.permute.xlu0 %556
        %558 = vset.pattern.permute.xlu0 0
        %559 = vperm.xlu0 %558, %v488
        %v560 = vpop.permute.xlu0 %559
        %561 = vset.pattern.permute.xlu0 0
        %562 = vperm.xlu0 %561, %v489
        %v563 = vpop.permute.xlu0 %562
        %564 = vset.pattern.permute.xlu0 0
        %565 = vperm.xlu0 %564, %v490
        %v566 = vpop.permute.xlu0 %565
        %567 = vset.pattern.permute.xlu0 0
        %568 = vperm.xlu0 %567, %v491
        %v569 = vpop.permute.xlu0 %568
        %570 = vset.pattern.permute.xlu0 0
        %571 = vperm.xlu0 %570, %v492
        %v572 = vpop.permute.xlu0 %571
        %573 = vset.pattern.permute.xlu0 0
        %574 = vperm.xlu0 %573, %v493
        %v575 = vpop.permute.xlu0 %574
        %576 = vset.pattern.permute.xlu0 0
        %577 = vperm.xlu0 %576, %v494
        %v578 = vpop.permute.xlu0 %577
        %579 = vset.pattern.permute.xlu0 0
        %580 = vperm.xlu0 %579, %v495
        %v581 = vpop.permute.xlu0 %580
        %582 = vset.pattern.permute.xlu0 0
        %583 = vperm.xlu0 %582, %v496
        %v584 = vpop.permute.xlu0 %583
        %585 = vset.pattern.permute.xlu0 0
        %586 = vperm.xlu0 %585, %v497
        %v587 = vpop.permute.xlu0 %586
        %588 = vset.pattern.permute.xlu0 0
        %589 = vperm.xlu0 %588, %v498
        %v590 = vpop.permute.xlu0 %589
        %591 = vset.pattern.permute.xlu0 0
        %592 = vperm.xlu0 %591, %v499
        %v593 = vpop.permute.xlu0 %592
        %594 = vset.pattern.permute.xlu0 0
        %595 = vperm.xlu0 %594, %v500
        %v596 = vpop.permute.xlu0 %595
        %vm597 = vcmp.eq.s32.totalorder %v468, %v503
        %vm598 = vcmp.eq.s32.totalorder %v468, %v506
        %vm599 = vcmp.eq.s32.totalorder %v468, %v509
        %vm600 = vcmp.eq.s32.totalorder %v468, %v512
        %vm601 = vcmp.eq.s32.totalorder %v468, %v515
        %vm602 = vcmp.eq.s32.totalorder %v468, %v518
        %vm603 = vcmp.eq.s32.totalorder %v468, %v521
        %vm604 = vcmp.eq.s32.totalorder %v468, %v524
        %vm605 = vcmp.eq.s32.totalorder %v468, %v527
        %vm606 = vcmp.eq.s32.totalorder %v468, %v530
        %vm607 = vcmp.eq.s32.totalorder %v468, %v533
        %vm608 = vcmp.eq.s32.totalorder %v468, %v536
        %vm609 = vcmp.eq.s32.totalorder %v468, %v539
        %vm610 = vcmp.eq.s32.totalorder %v468, %v542
        %vm611 = vcmp.eq.s32.totalorder %v468, %v545
        %vm612 = vcmp.eq.s32.totalorder %v468, %v548
        %vm613 = vcmp.eq.s32.totalorder %v468, %v551
        %vm614 = vcmp.eq.s32.totalorder %v468, %v554
        %vm615 = vcmp.eq.s32.totalorder %v468, %v557
        %vm616 = vcmp.eq.s32.totalorder %v468, %v560
        %vm617 = vcmp.eq.s32.totalorder %v468, %v563
        %vm618 = vcmp.eq.s32.totalorder %v468, %v566
        %vm619 = vcmp.eq.s32.totalorder %v468, %v569
        %vm620 = vcmp.eq.s32.totalorder %v468, %v572
        %vm621 = vcmp.eq.s32.totalorder %v468, %v575
        %vm622 = vcmp.eq.s32.totalorder %v468, %v578
        %vm623 = vcmp.eq.s32.totalorder %v468, %v581
        %vm624 = vcmp.eq.s32.totalorder %v468, %v584
        %vm625 = vcmp.eq.s32.totalorder %v468, %v587
        %vm626 = vcmp.eq.s32.totalorder %v468, %v590
        %vm627 = vcmp.eq.s32.totalorder %v468, %v593
        %vm628 = vcmp.eq.s32.totalorder %v468, %v596
        %v629 = vsel %vm597, 1, 0
        %v630 = vsel %vm598, 1, 0
        %v631 = vsel %vm599, 1, 0
        %v632 = vsel %vm600, 1, 0
        %v633 = vsel %vm601, 1, 0
        %v634 = vsel %vm602, 1, 0
        %v635 = vsel %vm603, 1, 0
        %v636 = vsel %vm604, 1, 0
        %v637 = vsel %vm605, 1, 0
        %v638 = vsel %vm606, 1, 0
        %v639 = vsel %vm607, 1, 0
        %v640 = vsel %vm608, 1, 0
        %v641 = vsel %vm609, 1, 0
        %v642 = vsel %vm610, 1, 0
        %v643 = vsel %vm611, 1, 0
        %v644 = vsel %vm612, 1, 0
        %v645 = vsel %vm613, 1, 0
        %v646 = vsel %vm614, 1, 0
        %v647 = vsel %vm615, 1, 0
        %v648 = vsel %vm616, 1, 0
        %v649 = vsel %vm617, 1, 0
        %v650 = vsel %vm618, 1, 0
        %v651 = vsel %vm619, 1, 0
        %v652 = vsel %vm620, 1, 0
        %v653 = vsel %vm621, 1, 0
        %v654 = vsel %vm622, 1, 0
        %v655 = vsel %vm623, 1, 0
        %v656 = vsel %vm624, 1, 0
        %v657 = vsel %vm625, 1, 0
        %v658 = vsel %vm626, 1, 0
        %v659 = vsel %vm627, 1, 0
        %v660 = vsel %vm628, 1, 0
        %v661 = vcvt.s32.f32 %v629
        %v662 = vcvt.s32.f32 %v630
        %v663 = vcvt.s32.f32 %v631
        %v664 = vcvt.s32.f32 %v632
        %v665 = vcvt.s32.f32 %v633
        %v666 = vcvt.s32.f32 %v634
        %v667 = vcvt.s32.f32 %v635
        %v668 = vcvt.s32.f32 %v636
        %v669 = vcvt.s32.f32 %v637
        %v670 = vcvt.s32.f32 %v638
        %v671 = vcvt.s32.f32 %v639
        %v672 = vcvt.s32.f32 %v640
        %v673 = vcvt.s32.f32 %v641
        %v674 = vcvt.s32.f32 %v642
        %v675 = vcvt.s32.f32 %v643
        %v676 = vcvt.s32.f32 %v644
        %v677 = vcvt.s32.f32 %v645
        %v678 = vcvt.s32.f32 %v646
        %v679 = vcvt.s32.f32 %v647
        %v680 = vcvt.s32.f32 %v648
        %v681 = vcvt.s32.f32 %v649
        %v682 = vcvt.s32.f32 %v650
        %v683 = vcvt.s32.f32 %v651
        %v684 = vcvt.s32.f32 %v652
        %v685 = vcvt.s32.f32 %v653
        %v686 = vcvt.s32.f32 %v654
        %v687 = vcvt.s32.f32 %v655
        %v688 = vcvt.s32.f32 %v656
        %v689 = vcvt.s32.f32 %v657
        %v690 = vcvt.s32.f32 %v658
        %v691 = vcvt.s32.f32 %v659
        %v692 = vcvt.s32.f32 %v660
        %v693 = vpack.c.bf16 %v662, %v661
        %v694 = vpack.c.bf16 %v664, %v663
        %v695 = vpack.c.bf16 %v666, %v665
        %v696 = vpack.c.bf16 %v668, %v667
        %v697 = vpack.c.bf16 %v670, %v669
        %v698 = vpack.c.bf16 %v672, %v671
        %v699 = vpack.c.bf16 %v674, %v673
        %v700 = vpack.c.bf16 %v676, %v675
        %v701 = vpack.c.bf16 %v678, %v677
        %v702 = vpack.c.bf16 %v680, %v679
        %v703 = vpack.c.bf16 %v682, %v681
        %v704 = vpack.c.bf16 %v684, %v683
        %v705 = vpack.c.bf16 %v686, %v685
        %v706 = vpack.c.bf16 %v688, %v687
        %v707 = vpack.c.bf16 %v690, %v689
        %v708 = vpack.c.bf16 %v692, %v691
        %v709 = vld [vmem:[%s463] sm:$0xff]
        %v710 = vld [vmem:[%s463 + $0x8] sm:$0xff]
        %v711 = vld [vmem:[%s463 + $0x10] sm:$0xff]
        %v712 = vld [vmem:[%s463 + $0x18] sm:$0xff]
        %v713 = vld [vmem:[%s463 + $0x20] sm:$0xff]
        %v714 = vld [vmem:[%s463 + $0x28] sm:$0xff]
        %v715 = vld [vmem:[%s463 + $0x30] sm:$0xff]
        %v716 = vld [vmem:[%s463 + $0x38] sm:$0xff]
        %v717 = vld [vmem:[%s463 + $0x40] sm:$0xff]
        %v718 = vld [vmem:[%s463 + $0x48] sm:$0xff]
        %v719 = vld [vmem:[%s463 + $0x50] sm:$0xff]
        %v720 = vld [vmem:[%s463 + $0x58] sm:$0xff]
        %v721 = vld [vmem:[%s463 + $0x60] sm:$0xff]
        %v722 = vld [vmem:[%s463 + $0x68] sm:$0xff]
        %v723 = vld [vmem:[%s463 + $0x70] sm:$0xff]
        %v724 = vld [vmem:[%s463 + $0x78] sm:$0xff]
        %v725 = vld [vmem:[%s463 + $0x80] sm:$0xff]
        %v726 = vld [vmem:[%s463 + $0x88] sm:$0xff]
        %v727 = vld [vmem:[%s463 + $0x90] sm:$0xff]
        %v728 = vld [vmem:[%s463 + $0x98] sm:$0xff]
        %v729 = vld [vmem:[%s463 + $0xa0] sm:$0xff]
        %v730 = vld [vmem:[%s463 + $0xa8] sm:$0xff]
        %v731 = vld [vmem:[%s463 + $0xb0] sm:$0xff]
        %v732 = vld [vmem:[%s463 + $0xb8] sm:$0xff]
        %v733 = vld [vmem:[%s463 + $0xc0] sm:$0xff]
        %v734 = vld [vmem:[%s463 + $0xc8] sm:$0xff]
        %v735 = vld [vmem:[%s463 + $0xd0] sm:$0xff]
        %v736 = vld [vmem:[%s463 + $0xd8] sm:$0xff]
        %v737 = vld [vmem:[%s463 + $0xe0] sm:$0xff]
        %v738 = vld [vmem:[%s463 + $0xe8] sm:$0xff]
        %v739 = vld [vmem:[%s463 + $0xf0] sm:$0xff]
        %v740 = vld [vmem:[%s463 + $0xf8] sm:$0xff]
        %741 = vset.pattern.permute.xlu0 0
        %742 = vperm.xlu0 %741, %v709
        %v743 = vpop.permute.xlu0 %742
        %744 = vset.pattern.permute.xlu0 0
        %745 = vperm.xlu0 %744, %v710
        %v746 = vpop.permute.xlu0 %745
        %747 = vset.pattern.permute.xlu0 0
        %748 = vperm.xlu0 %747, %v711
        %v749 = vpop.permute.xlu0 %748
        %750 = vset.pattern.permute.xlu0 0
        %751 = vperm.xlu0 %750, %v712
        %v752 = vpop.permute.xlu0 %751
        %753 = vset.pattern.permute.xlu0 0
        %754 = vperm.xlu0 %753, %v713
        %v755 = vpop.permute.xlu0 %754
        %756 = vset.pattern.permute.xlu0 0
        %757 = vperm.xlu0 %756, %v714
        %v758 = vpop.permute.xlu0 %757
        %759 = vset.pattern.permute.xlu0 0
        %760 = vperm.xlu0 %759, %v715
        %v761 = vpop.permute.xlu0 %760
        %762 = vset.pattern.permute.xlu0 0
        %763 = vperm.xlu0 %762, %v716
        %v764 = vpop.permute.xlu0 %763
        %765 = vset.pattern.permute.xlu0 0
        %766 = vperm.xlu0 %765, %v717
        %v767 = vpop.permute.xlu0 %766
        %768 = vset.pattern.permute.xlu0 0
        %769 = vperm.xlu0 %768, %v718
        %v770 = vpop.permute.xlu0 %769
        %771 = vset.pattern.permute.xlu0 0
        %772 = vperm.xlu0 %771, %v719
        %v773 = vpop.permute.xlu0 %772
        %774 = vset.pattern.permute.xlu0 0
        %775 = vperm.xlu0 %774, %v720
        %v776 = vpop.permute.xlu0 %775
        %777 = vset.pattern.permute.xlu0 0
        %778 = vperm.xlu0 %777, %v721
        %v779 = vpop.permute.xlu0 %778
        %780 = vset.pattern.permute.xlu0 0
        %781 = vperm.xlu0 %780, %v722
        %v782 = vpop.permute.xlu0 %781
        %783 = vset.pattern.permute.xlu0 0
        %784 = vperm.xlu0 %783, %v723
        %v785 = vpop.permute.xlu0 %784
        %786 = vset.pattern.permute.xlu0 0
        %787 = vperm.xlu0 %786, %v724
        %v788 = vpop.permute.xlu0 %787
        %789 = vset.pattern.permute.xlu0 0
        %790 = vperm.xlu0 %789, %v725
        %v791 = vpop.permute.xlu0 %790
        %792 = vset.pattern.permute.xlu0 0
        %793 = vperm.xlu0 %792, %v726
        %v794 = vpop.permute.xlu0 %793
        %795 = vset.pattern.permute.xlu0 0
        %796 = vperm.xlu0 %795, %v727
        %v797 = vpop.permute.xlu0 %796
        %798 = vset.pattern.permute.xlu0 0
        %799 = vperm.xlu0 %798, %v728
        %v800 = vpop.permute.xlu0 %799
        %801 = vset.pattern.permute.xlu0 0
        %802 = vperm.xlu0 %801, %v729
        %v803 = vpop.permute.xlu0 %802
        %804 = vset.pattern.permute.xlu0 0
        %805 = vperm.xlu0 %804, %v730
        %v806 = vpop.permute.xlu0 %805
        %807 = vset.pattern.permute.xlu0 0
        %808 = vperm.xlu0 %807, %v731
        %v809 = vpop.permute.xlu0 %808
        %810 = vset.pattern.permute.xlu0 0
        %811 = vperm.xlu0 %810, %v732
        %v812 = vpop.permute.xlu0 %811
        %813 = vset.pattern.permute.xlu0 0
        %814 = vperm.xlu0 %813, %v733
        %v815 = vpop.permute.xlu0 %814
        %816 = vset.pattern.permute.xlu0 0
        %817 = vperm.xlu0 %816, %v734
        %v818 = vpop.permute.xlu0 %817
        %819 = vset.pattern.permute.xlu0 0
        %820 = vperm.xlu0 %819, %v735
        %v821 = vpop.permute.xlu0 %820
        %822 = vset.pattern.permute.xlu0 0
        %823 = vperm.xlu0 %822, %v736
        %v824 = vpop.permute.xlu0 %823
        %825 = vset.pattern.permute.xlu0 0
        %826 = vperm.xlu0 %825, %v737
        %v827 = vpop.permute.xlu0 %826
        %828 = vset.pattern.permute.xlu0 0
        %829 = vperm.xlu0 %828, %v738
        %v830 = vpop.permute.xlu0 %829
        %831 = vset.pattern.permute.xlu0 0
        %832 = vperm.xlu0 %831, %v739
        %v833 = vpop.permute.xlu0 %832
        %834 = vset.pattern.permute.xlu0 0
        %835 = vperm.xlu0 %834, %v740
        %v836 = vpop.permute.xlu0 %835
        %vm837 = vcmp.eq.s32.totalorder %v468, %v743
        %vm838 = vcmp.eq.s32.totalorder %v468, %v746
        %vm839 = vcmp.eq.s32.totalorder %v468, %v749
        %vm840 = vcmp.eq.s32.totalorder %v468, %v752
        %vm841 = vcmp.eq.s32.totalorder %v468, %v755
        %vm842 = vcmp.eq.s32.totalorder %v468, %v758
        %vm843 = vcmp.eq.s32.totalorder %v468, %v761
        %vm844 = vcmp.eq.s32.totalorder %v468, %v764
        %vm845 = vcmp.eq.s32.totalorder %v468, %v767
        %vm846 = vcmp.eq.s32.totalorder %v468, %v770
        %vm847 = vcmp.eq.s32.totalorder %v468, %v773
        %vm848 = vcmp.eq.s32.totalorder %v468, %v776
        %vm849 = vcmp.eq.s32.totalorder %v468, %v779
        %vm850 = vcmp.eq.s32.totalorder %v468, %v782
        %vm851 = vcmp.eq.s32.totalorder %v468, %v785
        %vm852 = vcmp.eq.s32.totalorder %v468, %v788
        %vm853 = vcmp.eq.s32.totalorder %v468, %v791
        %vm854 = vcmp.eq.s32.totalorder %v468, %v794
        %vm855 = vcmp.eq.s32.totalorder %v468, %v797
        %vm856 = vcmp.eq.s32.totalorder %v468, %v800
        %vm857 = vcmp.eq.s32.totalorder %v468, %v803
        %vm858 = vcmp.eq.s32.totalorder %v468, %v806
        %vm859 = vcmp.eq.s32.totalorder %v468, %v809
        %vm860 = vcmp.eq.s32.totalorder %v468, %v812
        %vm861 = vcmp.eq.s32.totalorder %v468, %v815
        %vm862 = vcmp.eq.s32.totalorder %v468, %v818
        %vm863 = vcmp.eq.s32.totalorder %v468, %v821
        %vm864 = vcmp.eq.s32.totalorder %v468, %v824
        %vm865 = vcmp.eq.s32.totalorder %v468, %v827
        %vm866 = vcmp.eq.s32.totalorder %v468, %v830
        %vm867 = vcmp.eq.s32.totalorder %v468, %v833
        %vm868 = vcmp.eq.s32.totalorder %v468, %v836
        %v869 = vsel %vm837, 1, 0
        %v870 = vsel %vm838, 1, 0
        %v871 = vsel %vm839, 1, 0
        %v872 = vsel %vm840, 1, 0
        %v873 = vsel %vm841, 1, 0
        %v874 = vsel %vm842, 1, 0
        %v875 = vsel %vm843, 1, 0
        %v876 = vsel %vm844, 1, 0
        %v877 = vsel %vm845, 1, 0
        %v878 = vsel %vm846, 1, 0
        %v879 = vsel %vm847, 1, 0
        %v880 = vsel %vm848, 1, 0
        %v881 = vsel %vm849, 1, 0
        %v882 = vsel %vm850, 1, 0
        %v883 = vsel %vm851, 1, 0
        %v884 = vsel %vm852, 1, 0
        %v885 = vsel %vm853, 1, 0
        %v886 = vsel %vm854, 1, 0
        %v887 = vsel %vm855, 1, 0
        %v888 = vsel %vm856, 1, 0
        %v889 = vsel %vm857, 1, 0
        %v890 = vsel %vm858, 1, 0
        %v891 = vsel %vm859, 1, 0
        %v892 = vsel %vm860, 1, 0
        %v893 = vsel %vm861, 1, 0
        %v894 = vsel %vm862, 1, 0
        %v895 = vsel %vm863, 1, 0
        %v896 = vsel %vm864, 1, 0
        %v897 = vsel %vm865, 1, 0
        %v898 = vsel %vm866, 1, 0
        %v899 = vsel %vm867, 1, 0
        %v900 = vsel %vm868, 1, 0
        %v901 = vcvt.s32.f32 %v869
        %v902 = vcvt.s32.f32 %v870
        %v903 = vcvt.s32.f32 %v871
        %v904 = vcvt.s32.f32 %v872
        %v905 = vcvt.s32.f32 %v873
        %v906 = vcvt.s32.f32 %v874
        %v907 = vcvt.s32.f32 %v875
        %v908 = vcvt.s32.f32 %v876
        %v909 = vcvt.s32.f32 %v877
        %v910 = vcvt.s32.f32 %v878
        %v911 = vcvt.s32.f32 %v879
        %v912 = vcvt.s32.f32 %v880
        %v913 = vcvt.s32.f32 %v881
        %v914 = vcvt.s32.f32 %v882
        %v915 = vcvt.s32.f32 %v883
        %v916 = vcvt.s32.f32 %v884
        %v917 = vcvt.s32.f32 %v885
        %v918 = vcvt.s32.f32 %v886
        %v919 = vcvt.s32.f32 %v887
        %v920 = vcvt.s32.f32 %v888
        %v921 = vcvt.s32.f32 %v889
        %v922 = vcvt.s32.f32 %v890
        %v923 = vcvt.s32.f32 %v891
        %v924 = vcvt.s32.f32 %v892
        %v925 = vcvt.s32.f32 %v893
        %v926 = vcvt.s32.f32 %v894
        %v927 = vcvt.s32.f32 %v895
        %v928 = vcvt.s32.f32 %v896
        %v929 = vcvt.s32.f32 %v897
        %v930 = vcvt.s32.f32 %v898
        %v931 = vcvt.s32.f32 %v899
        %v932 = vcvt.s32.f32 %v900
        %v933 = vpack.c.bf16 %v902, %v901
        %v934 = vpack.c.bf16 %v904, %v903
        %v935 = vpack.c.bf16 %v906, %v905
        %v936 = vpack.c.bf16 %v908, %v907
        %v937 = vpack.c.bf16 %v910, %v909
        %v938 = vpack.c.bf16 %v912, %v911
        %v939 = vpack.c.bf16 %v914, %v913
        %v940 = vpack.c.bf16 %v916, %v915
        %v941 = vpack.c.bf16 %v918, %v917
        %v942 = vpack.c.bf16 %v920, %v919
        %v943 = vpack.c.bf16 %v922, %v921
        %v944 = vpack.c.bf16 %v924, %v923
        %v945 = vpack.c.bf16 %v926, %v925
        %v946 = vpack.c.bf16 %v928, %v927
        %v947 = vpack.c.bf16 %v930, %v929
        %v948 = vpack.c.bf16 %v932, %v931
        %v949 = vld [vmem:[%s2] sm:$0xf]
        %v950 = vld [vmem:[%s2 + $0x4] sm:$0xf]
        %v951 = vld [vmem:[%s2 + $0x8] sm:$0xf]
        %v952 = vld [vmem:[%s2 + $0xc] sm:$0xf]
        %v953 = vld [vmem:[%s2 + $0x10] sm:$0xf]
        %v954 = vld [vmem:[%s2 + $0x14] sm:$0xf]
        %v955 = vld [vmem:[%s2 + $0x18] sm:$0xf]
        %v956 = vld [vmem:[%s2 + $0x1c] sm:$0xf]
        %v957 = vld [vmem:[%s2 + $0x20] sm:$0xf]
        %v958 = vld [vmem:[%s2 + $0x24] sm:$0xf]
        %v959 = vld [vmem:[%s2 + $0x28] sm:$0xf]
        %v960 = vld [vmem:[%s2 + $0x2c] sm:$0xf]
        %v961 = vld [vmem:[%s2 + $0x30] sm:$0xf]
        %v962 = vld [vmem:[%s2 + $0x34] sm:$0xf]
        %v963 = vld [vmem:[%s2 + $0x38] sm:$0xf]
        %v964 = vld [vmem:[%s2 + $0x3c] sm:$0xf]
        %v981 = vunpack.c.l.b16 %v949
        %v982 = vunpack.c.l.b16 %v950
        %v983 = vunpack.c.l.b16 %v951
        %v984 = vunpack.c.l.b16 %v952
        %v985 = vunpack.c.l.b16 %v953
        %v986 = vunpack.c.l.b16 %v954
        %v987 = vunpack.c.l.b16 %v955
        %v988 = vunpack.c.l.b16 %v956
        %v989 = vunpack.c.l.b16 %v957
        %v990 = vunpack.c.l.b16 %v958
        %v991 = vunpack.c.l.b16 %v959
        %v992 = vunpack.c.l.b16 %v960
        %v993 = vunpack.c.l.b16 %v961
        %v994 = vunpack.c.l.b16 %v962
        %v995 = vunpack.c.l.b16 %v963
        %v996 = vunpack.c.l.b16 %v964
        %v997 = vpack.c.b16 %v982, %v981
        %v998 = vpack.c.b16 %v984, %v983
        %v999 = vpack.c.b16 %v986, %v985
        %v1000 = vpack.c.b16 %v988, %v987
        %v1001 = vpack.c.b16 %v990, %v989
        %v1002 = vpack.c.b16 %v992, %v991
        %v1003 = vpack.c.b16 %v994, %v993
        %v1004 = vpack.c.b16 %v996, %v995
        %1013 = vmatprep.subr.bf16.mxu0 0
        %1014 = vmatpush1.bf16.msra.mxu0 %v997
        %1015 = vmatprep.subr.bf16.mxu0 0
        %1016 = vmatpush1.bf16.msra.mxu0 %v998
        %1017 = vmatprep.subr.bf16.mxu0 0
        %1018 = vmatpush1.bf16.msra.mxu0 %v999
        %1019 = vmatprep.subr.bf16.mxu0 0
        %1020 = vmatpush1.bf16.msra.mxu0 %v1000
        %1021 = vmatprep.subr.bf16.mxu0 0
        %1022 = vmatpush1.bf16.msra.mxu0 %v1001
        %1023 = vmatprep.subr.bf16.mxu0 0
        %1024 = vmatpush1.bf16.msra.mxu0 %v1002
        %1025 = vmatprep.subr.bf16.mxu0 0
        %1026 = vmatpush1.bf16.msra.mxu0 %v1003
        %1027 = vmatprep.subr.bf16.mxu0 0
        %1028 = vmatpush1.bf16.msra.mxu0 %v1004
        %1029 = vmatprep.subr.bf16.mxu0 0
        %1030 = vmatpush1.bf16.msra.mxu0 0
        %1031 = vmatprep.subr.bf16.mxu0 0
        %1032 = vmatpush1.bf16.msra.mxu0 0
        %1033 = vmatprep.subr.bf16.mxu0 0
        %1034 = vmatpush1.bf16.msra.mxu0 0
        %1035 = vmatprep.subr.bf16.mxu0 0
        %1036 = vmatpush1.bf16.msra.mxu0 0
        %1037 = vmatprep.subr.bf16.mxu0 0
        %1038 = vmatpush1.bf16.msra.mxu0 0
        %1039 = vmatprep.subr.bf16.mxu0 0
        %1040 = vmatpush1.bf16.msra.mxu0 0
        %1041 = vmatprep.subr.bf16.mxu0 0
        %1042 = vmatpush1.bf16.msra.mxu0 0
        %1043 = vmatprep.subr.bf16.mxu0 0
        %1044 = vmatpush1.bf16.msra.mxu0 0
        %1045 = vmatprep.mubr.bf16.mxu0 0
        %1046 = vmatmul.mubr.bf16.gmra.mrb[0].mxu0 %v693
        %v1047 = vpop.f32.mrb[0].mxu0
        %v1048 = vadd.f32 0.0, %v1047
        %v1049 = vpop.f32.mrb[0].mxu0
        %v1050 = vpop.f32.mrb[0].mxu0
        %v1051 = vadd.f32 0.0, %v1050
        %v1052 = vpop.f32.mrb[0].mxu0
        %1053 = vmatprep.mubr.bf16.mxu0 0
        %1054 = vmatmul.mubr.bf16.gmra.mrb[0].mxu0 %v694
        %v1055 = vpop.f32.mrb[0].mxu0
        %v1056 = vadd.f32 0.0, %v1055
        %v1057 = vpop.f32.mrb[0].mxu0
        %v1058 = vpop.f32.mrb[0].mxu0
        %v1059 = vadd.f32 0.0, %v1058
        %v1060 = vpop.f32.mrb[0].mxu0
        %1061 = vmatprep.mubr.bf16.mxu0 0
        %1062 = vmatmul.mubr.bf16.gmra.mrb[0].mxu0 %v695
        %v1063 = vpop.f32.mrb[0].mxu0
        %v1064 = vadd.f32 0.0, %v1063
        %v1065 = vpop.f32.mrb[0].mxu0
        %v1066 = vpop.f32.mrb[0].mxu0
        %v1067 = vadd.f32 0.0, %v1066
        %v1068 = vpop.f32.mrb[0].mxu0
        %1069 = vmatprep.mubr.bf16.mxu0 0
        %1070 = vmatmul.mubr.bf16.gmra.mrb[0].mxu0 %v696
        %v1071 = vpop.f32.mrb[0].mxu0
        %v1072 = vadd.f32 0.0, %v1071
        %v1073 = vpop.f32.mrb[0].mxu0
        %v1074 = vpop.f32.mrb[0].mxu0
        %v1075 = vadd.f32 0.0, %v1074
        %v1076 = vpop.f32.mrb[0].mxu0
        %1077 = vmatprep.mubr.bf16.mxu0 0
        %1078 = vmatmul.mubr.bf16.gmra.mrb[0].mxu0 %v697
        %v1079 = vpop.f32.mrb[0].mxu0
        %v1080 = vadd.f32 0.0, %v1079
        %v1081 = vpop.f32.mrb[0].mxu0
        %v1082 = vpop.f32.mrb[0].mxu0
        %v1083 = vadd.f32 0.0, %v1082
        %v1084 = vpop.f32.mrb[0].mxu0
        %1085 = vmatprep.mubr.bf16.mxu0 0
        %1086 = vmatmul.mubr.bf16.gmra.mrb[0].mxu0 %v698
        %v1087 = vpop.f32.mrb[0].mxu0
        %v1088 = vadd.f32 0.0, %v1087
        %v1089 = vpop.f32.mrb[0].mxu0
        %v1090 = vpop.f32.mrb[0].mxu0
        %v1091 = vadd.f32 0.0, %v1090
        %v1092 = vpop.f32.mrb[0].mxu0
        %1093 = vmatprep.mubr.bf16.mxu0 0
        %1094 = vmatmul.mubr.bf16.gmra.mrb[0].mxu0 %v699
        %v1095 = vpop.f32.mrb[0].mxu0
        %v1096 = vadd.f32 0.0, %v1095
        %v1097 = vpop.f32.mrb[0].mxu0
        %v1098 = vpop.f32.mrb[0].mxu0
        %v1099 = vadd.f32 0.0, %v1098
        %v1100 = vpop.f32.mrb[0].mxu0
        %1101 = vmatprep.mubr.bf16.mxu0 0
        %1102 = vmatmul.mubr.bf16.gmra.mrb[0].mxu0 %v700
        %v1103 = vpop.f32.mrb[0].mxu0
        %v1104 = vadd.f32 0.0, %v1103
        %v1105 = vpop.f32.mrb[0].mxu0
        %v1106 = vpop.f32.mrb[0].mxu0
        %v1107 = vadd.f32 0.0, %v1106
        %v1108 = vpop.f32.mrb[0].mxu0
        %1109 = vmatprep.mubr.bf16.mxu0 0
        %1110 = vmatmul.mubr.bf16.gmra.mrb[0].mxu0 %v701
        %v1111 = vpop.f32.mrb[0].mxu0
        %v1112 = vadd.f32 0.0, %v1111
        %v1113 = vpop.f32.mrb[0].mxu0
        %v1114 = vpop.f32.mrb[0].mxu0
        %v1115 = vadd.f32 0.0, %v1114
        %v1116 = vpop.f32.mrb[0].mxu0
        %1117 = vmatprep.mubr.bf16.mxu0 0
        %1118 = vmatmul.mubr.bf16.gmra.mrb[0].mxu0 %v702
        %v1119 = vpop.f32.mrb[0].mxu0
        %v1120 = vadd.f32 0.0, %v1119
        %v1121 = vpop.f32.mrb[0].mxu0
        %v1122 = vpop.f32.mrb[0].mxu0
        %v1123 = vadd.f32 0.0, %v1122
        %v1124 = vpop.f32.mrb[0].mxu0
        %1125 = vmatprep.mubr.bf16.mxu0 0
        %1126 = vmatmul.mubr.bf16.gmra.mrb[0].mxu0 %v703
        %v1127 = vpop.f32.mrb[0].mxu0
        %v1128 = vadd.f32 0.0, %v1127
        %v1129 = vpop.f32.mrb[0].mxu0
        %v1130 = vpop.f32.mrb[0].mxu0
        %v1131 = vadd.f32 0.0, %v1130
        %v1132 = vpop.f32.mrb[0].mxu0
        %1133 = vmatprep.mubr.bf16.mxu0 0
        %1134 = vmatmul.mubr.bf16.gmra.mrb[0].mxu0 %v704
        %v1135 = vpop.f32.mrb[0].mxu0
        %v1136 = vadd.f32 0.0, %v1135
        %v1137 = vpop.f32.mrb[0].mxu0
        %v1138 = vpop.f32.mrb[0].mxu0
        %v1139 = vadd.f32 0.0, %v1138
        %v1140 = vpop.f32.mrb[0].mxu0
        %1141 = vmatprep.mubr.bf16.mxu0 0
        %1142 = vmatmul.mubr.bf16.gmra.mrb[0].mxu0 %v705
        %v1143 = vpop.f32.mrb[0].mxu0
        %v1144 = vadd.f32 0.0, %v1143
        %v1145 = vpop.f32.mrb[0].mxu0
        %v1146 = vpop.f32.mrb[0].mxu0
        %v1147 = vadd.f32 0.0, %v1146
        %v1148 = vpop.f32.mrb[0].mxu0
        %1149 = vmatprep.mubr.bf16.mxu0 0
        %1150 = vmatmul.mubr.bf16.gmra.mrb[0].mxu0 %v706
        %v1151 = vpop.f32.mrb[0].mxu0
        %v1152 = vadd.f32 0.0, %v1151
        %v1153 = vpop.f32.mrb[0].mxu0
        %v1154 = vpop.f32.mrb[0].mxu0
        %v1155 = vadd.f32 0.0, %v1154
        %v1156 = vpop.f32.mrb[0].mxu0
        %1157 = vmatprep.mubr.bf16.mxu0 0
        %1158 = vmatmul.mubr.bf16.gmra.mrb[0].mxu0 %v707
        %v1159 = vpop.f32.mrb[0].mxu0
        %v1160 = vadd.f32 0.0, %v1159
        %v1161 = vpop.f32.mrb[0].mxu0
        %v1162 = vpop.f32.mrb[0].mxu0
        %v1163 = vadd.f32 0.0, %v1162
        %v1164 = vpop.f32.mrb[0].mxu0
        %1165 = vmatprep.mubr.bf16.mxu0 0
        %1166 = vmatmul.mubr.bf16.gmra.mrb[0].mxu0 %v708
        %v1167 = vpop.f32.mrb[0].mxu0
        %v1168 = vadd.f32 0.0, %v1167
        %v1169 = vpop.f32.mrb[0].mxu0
        %v1170 = vpop.f32.mrb[0].mxu0
        %v1171 = vadd.f32 0.0, %v1170
        %v1172 = vpop.f32.mrb[0].mxu0
        %1173 = vdwg.mxu0
        %v1174 = vpack.c.bf16 %v1051, %v1048
        %v1175 = vpack.c.bf16 %v1059, %v1056
        %v1176 = vpack.c.bf16 %v1067, %v1064
        %v1177 = vpack.c.bf16 %v1075, %v1072
        %v1178 = vpack.c.bf16 %v1083, %v1080
        %v1179 = vpack.c.bf16 %v1091, %v1088
        %v1180 = vpack.c.bf16 %v1099, %v1096
        %v1181 = vpack.c.bf16 %v1107, %v1104
        %v1182 = vpack.c.bf16 %v1115, %v1112
        %v1183 = vpack.c.bf16 %v1123, %v1120
        %v1184 = vpack.c.bf16 %v1131, %v1128
        %v1185 = vpack.c.bf16 %v1139, %v1136
        %v1186 = vpack.c.bf16 %v1147, %v1144
        %v1187 = vpack.c.bf16 %v1155, %v1152
        %v1188 = vpack.c.bf16 %v1163, %v1160
        %v1189 = vpack.c.bf16 %v1171, %v1168
        %v1190 = vld [vmem:[%s3] sm:$0xf]
        %v1191 = vld [vmem:[%s3 + $0x4] sm:$0xf]
        %v1192 = vld [vmem:[%s3 + $0x8] sm:$0xf]
        %v1193 = vld [vmem:[%s3 + $0xc] sm:$0xf]
        %v1194 = vld [vmem:[%s3 + $0x10] sm:$0xf]
        %v1195 = vld [vmem:[%s3 + $0x14] sm:$0xf]
        %v1196 = vld [vmem:[%s3 + $0x18] sm:$0xf]
        %v1197 = vld [vmem:[%s3 + $0x1c] sm:$0xf]
        %v1198 = vld [vmem:[%s3 + $0x20] sm:$0xf]
        %v1199 = vld [vmem:[%s3 + $0x24] sm:$0xf]
        %v1200 = vld [vmem:[%s3 + $0x28] sm:$0xf]
        %v1201 = vld [vmem:[%s3 + $0x2c] sm:$0xf]
        %v1202 = vld [vmem:[%s3 + $0x30] sm:$0xf]
        %v1203 = vld [vmem:[%s3 + $0x34] sm:$0xf]
        %v1204 = vld [vmem:[%s3 + $0x38] sm:$0xf]
        %v1205 = vld [vmem:[%s3 + $0x3c] sm:$0xf]
        %v1222 = vunpack.c.l.b16 %v1190
        %v1223 = vunpack.c.l.b16 %v1191
        %v1224 = vunpack.c.l.b16 %v1192
        %v1225 = vunpack.c.l.b16 %v1193
        %v1226 = vunpack.c.l.b16 %v1194
        %v1227 = vunpack.c.l.b16 %v1195
        %v1228 = vunpack.c.l.b16 %v1196
        %v1229 = vunpack.c.l.b16 %v1197
        %v1230 = vunpack.c.l.b16 %v1198
        %v1231 = vunpack.c.l.b16 %v1199
        %v1232 = vunpack.c.l.b16 %v1200
        %v1233 = vunpack.c.l.b16 %v1201
        %v1234 = vunpack.c.l.b16 %v1202
        %v1235 = vunpack.c.l.b16 %v1203
        %v1236 = vunpack.c.l.b16 %v1204
        %v1237 = vunpack.c.l.b16 %v1205
        %v1238 = vpack.c.b16 %v1223, %v1222
        %v1239 = vpack.c.b16 %v1225, %v1224
        %v1240 = vpack.c.b16 %v1227, %v1226
        %v1241 = vpack.c.b16 %v1229, %v1228
        %v1242 = vpack.c.b16 %v1231, %v1230
        %v1243 = vpack.c.b16 %v1233, %v1232
        %v1244 = vpack.c.b16 %v1235, %v1234
        %v1245 = vpack.c.b16 %v1237, %v1236
        %1254 = vmatprep.subr.bf16.mxu0 0
        %1255 = vmatpush1.bf16.msra.mxu0 %v1238
        %1256 = vmatprep.subr.bf16.mxu0 0
        %1257 = vmatpush1.bf16.msra.mxu0 %v1239
        %1258 = vmatprep.subr.bf16.mxu0 0
        %1259 = vmatpush1.bf16.msra.mxu0 %v1240
        %1260 = vmatprep.subr.bf16.mxu0 0
        %1261 = vmatpush1.bf16.msra.mxu0 %v1241
        %1262 = vmatprep.subr.bf16.mxu0 0
        %1263 = vmatpush1.bf16.msra.mxu0 %v1242
        %1264 = vmatprep.subr.bf16.mxu0 0
        %1265 = vmatpush1.bf16.msra.mxu0 %v1243
        %1266 = vmatprep.subr.bf16.mxu0 0
        %1267 = vmatpush1.bf16.msra.mxu0 %v1244
        %1268 = vmatprep.subr.bf16.mxu0 0
        %1269 = vmatpush1.bf16.msra.mxu0 %v1245
        %1270 = vmatprep.subr.bf16.mxu0 0
        %1271 = vmatpush1.bf16.msra.mxu0 0
        %1272 = vmatprep.subr.bf16.mxu0 0
        %1273 = vmatpush1.bf16.msra.mxu0 0
        %1274 = vmatprep.subr.bf16.mxu0 0
        %1275 = vmatpush1.bf16.msra.mxu0 0
        %1276 = vmatprep.subr.bf16.mxu0 0
        %1277 = vmatpush1.bf16.msra.mxu0 0
        %1278 = vmatprep.subr.bf16.mxu0 0
        %1279 = vmatpush1.bf16.msra.mxu0 0
        %1280 = vmatprep.subr.bf16.mxu0 0
        %1281 = vmatpush1.bf16.msra.mxu0 0
        %1282 = vmatprep.subr.bf16.mxu0 0
        %1283 = vmatpush1.bf16.msra.mxu0 0
        %1284 = vmatprep.subr.bf16.mxu0 0
        %1285 = vmatpush1.bf16.msra.mxu0 0
        %1286 = vmatprep.mubr.bf16.mxu0 0
        %1287 = vmatmul.mubr.bf16.gmra.mrb[0].mxu0 %v933
        %v1288 = vpop.f32.mrb[0].mxu0
        %v1289 = vadd.f32 0.0, %v1288
        %v1290 = vpop.f32.mrb[0].mxu0
        %v1291 = vpop.f32.mrb[0].mxu0
        %v1292 = vadd.f32 0.0, %v1291
        %v1293 = vpop.f32.mrb[0].mxu0
        %1294 = vmatprep.mubr.bf16.mxu0 0
        %1295 = vmatmul.mubr.bf16.gmra.mrb[0].mxu0 %v934
        %v1296 = vpop.f32.mrb[0].mxu0
        %v1297 = vadd.f32 0.0, %v1296
        %v1298 = vpop.f32.mrb[0].mxu0
        %v1299 = vpop.f32.mrb[0].mxu0
        %v1300 = vadd.f32 0.0, %v1299
        %v1301 = vpop.f32.mrb[0].mxu0
        %1302 = vmatprep.mubr.bf16.mxu0 0
        %1303 = vmatmul.mubr.bf16.gmra.mrb[0].mxu0 %v935
        %v1304 = vpop.f32.mrb[0].mxu0
        %v1305 = vadd.f32 0.0, %v1304
        %v1306 = vpop.f32.mrb[0].mxu0
        %v1307 = vpop.f32.mrb[0].mxu0
        %v1308 = vadd.f32 0.0, %v1307
        %v1309 = vpop.f32.mrb[0].mxu0
        %1310 = vmatprep.mubr.bf16.mxu0 0
        %1311 = vmatmul.mubr.bf16.gmra.mrb[0].mxu0 %v936
        %v1312 = vpop.f32.mrb[0].mxu0
        %v1313 = vadd.f32 0.0, %v1312
        %v1314 = vpop.f32.mrb[0].mxu0
        %v1315 = vpop.f32.mrb[0].mxu0
        %v1316 = vadd.f32 0.0, %v1315
        %v1317 = vpop.f32.mrb[0].mxu0
        %1318 = vmatprep.mubr.bf16.mxu0 0
        %1319 = vmatmul.mubr.bf16.gmra.mrb[0].mxu0 %v937
        %v1320 = vpop.f32.mrb[0].mxu0
        %v1321 = vadd.f32 0.0, %v1320
        %v1322 = vpop.f32.mrb[0].mxu0
        %v1323 = vpop.f32.mrb[0].mxu0
        %v1324 = vadd.f32 0.0, %v1323
        %v1325 = vpop.f32.mrb[0].mxu0
        %1326 = vmatprep.mubr.bf16.mxu0 0
        %1327 = vmatmul.mubr.bf16.gmra.mrb[0].mxu0 %v938
        %v1328 = vpop.f32.mrb[0].mxu0
        %v1329 = vadd.f32 0.0, %v1328
        %v1330 = vpop.f32.mrb[0].mxu0
        %v1331 = vpop.f32.mrb[0].mxu0
        %v1332 = vadd.f32 0.0, %v1331
        %v1333 = vpop.f32.mrb[0].mxu0
        %1334 = vmatprep.mubr.bf16.mxu0 0
        %1335 = vmatmul.mubr.bf16.gmra.mrb[0].mxu0 %v939
        %v1336 = vpop.f32.mrb[0].mxu0
        %v1337 = vadd.f32 0.0, %v1336
        %v1338 = vpop.f32.mrb[0].mxu0
        %v1339 = vpop.f32.mrb[0].mxu0
        %v1340 = vadd.f32 0.0, %v1339
        %v1341 = vpop.f32.mrb[0].mxu0
        %1342 = vmatprep.mubr.bf16.mxu0 0
        %1343 = vmatmul.mubr.bf16.gmra.mrb[0].mxu0 %v940
        %v1344 = vpop.f32.mrb[0].mxu0
        %v1345 = vadd.f32 0.0, %v1344
        %v1346 = vpop.f32.mrb[0].mxu0
        %v1347 = vpop.f32.mrb[0].mxu0
        %v1348 = vadd.f32 0.0, %v1347
        %v1349 = vpop.f32.mrb[0].mxu0
        %1350 = vmatprep.mubr.bf16.mxu0 0
        %1351 = vmatmul.mubr.bf16.gmra.mrb[0].mxu0 %v941
        %v1352 = vpop.f32.mrb[0].mxu0
        %v1353 = vadd.f32 0.0, %v1352
        %v1354 = vpop.f32.mrb[0].mxu0
        %v1355 = vpop.f32.mrb[0].mxu0
        %v1356 = vadd.f32 0.0, %v1355
        %v1357 = vpop.f32.mrb[0].mxu0
        %1358 = vmatprep.mubr.bf16.mxu0 0
        %1359 = vmatmul.mubr.bf16.gmra.mrb[0].mxu0 %v942
        %v1360 = vpop.f32.mrb[0].mxu0
        %v1361 = vadd.f32 0.0, %v1360
        %v1362 = vpop.f32.mrb[0].mxu0
        %v1363 = vpop.f32.mrb[0].mxu0
        %v1364 = vadd.f32 0.0, %v1363
        %v1365 = vpop.f32.mrb[0].mxu0
        %1366 = vmatprep.mubr.bf16.mxu0 0
        %1367 = vmatmul.mubr.bf16.gmra.mrb[0].mxu0 %v943
        %v1368 = vpop.f32.mrb[0].mxu0
        %v1369 = vadd.f32 0.0, %v1368
        %v1370 = vpop.f32.mrb[0].mxu0
        %v1371 = vpop.f32.mrb[0].mxu0
        %v1372 = vadd.f32 0.0, %v1371
        %v1373 = vpop.f32.mrb[0].mxu0
        %1374 = vmatprep.mubr.bf16.mxu0 0
        %1375 = vmatmul.mubr.bf16.gmra.mrb[0].mxu0 %v944
        %v1376 = vpop.f32.mrb[0].mxu0
        %v1377 = vadd.f32 0.0, %v1376
        %v1378 = vpop.f32.mrb[0].mxu0
        %v1379 = vpop.f32.mrb[0].mxu0
        %v1380 = vadd.f32 0.0, %v1379
        %v1381 = vpop.f32.mrb[0].mxu0
        %1382 = vmatprep.mubr.bf16.mxu0 0
        %1383 = vmatmul.mubr.bf16.gmra.mrb[0].mxu0 %v945
        %v1384 = vpop.f32.mrb[0].mxu0
        %v1385 = vadd.f32 0.0, %v1384
        %v1386 = vpop.f32.mrb[0].mxu0
        %v1387 = vpop.f32.mrb[0].mxu0
        %v1388 = vadd.f32 0.0, %v1387
        %v1389 = vpop.f32.mrb[0].mxu0
        %1390 = vmatprep.mubr.bf16.mxu0 0
        %1391 = vmatmul.mubr.bf16.gmra.mrb[0].mxu0 %v946
        %v1392 = vpop.f32.mrb[0].mxu0
        %v1393 = vadd.f32 0.0, %v1392
        %v1394 = vpop.f32.mrb[0].mxu0
        %v1395 = vpop.f32.mrb[0].mxu0
        %v1396 = vadd.f32 0.0, %v1395
        %v1397 = vpop.f32.mrb[0].mxu0
        %1398 = vmatprep.mubr.bf16.mxu0 0
        %1399 = vmatmul.mubr.bf16.gmra.mrb[0].mxu0 %v947
        %v1400 = vpop.f32.mrb[0].mxu0
        %v1401 = vadd.f32 0.0, %v1400
        %v1402 = vpop.f32.mrb[0].mxu0
        %v1403 = vpop.f32.mrb[0].mxu0
        %v1404 = vadd.f32 0.0, %v1403
        %v1405 = vpop.f32.mrb[0].mxu0
        %1406 = vmatprep.mubr.bf16.mxu0 0
        %1407 = vmatmul.mubr.bf16.gmra.mrb[0].mxu0 %v948
        %v1408 = vpop.f32.mrb[0].mxu0
        %v1409 = vadd.f32 0.0, %v1408
        %v1410 = vpop.f32.mrb[0].mxu0
        %v1411 = vpop.f32.mrb[0].mxu0
        %v1412 = vadd.f32 0.0, %v1411
        %v1413 = vpop.f32.mrb[0].mxu0
        %1414 = vdwg.mxu0
        %v1415 = vpack.c.bf16 %v1292, %v1289
        %v1416 = vpack.c.bf16 %v1300, %v1297
        %v1417 = vpack.c.bf16 %v1308, %v1305
        %v1418 = vpack.c.bf16 %v1316, %v1313
        %v1419 = vpack.c.bf16 %v1324, %v1321
        %v1420 = vpack.c.bf16 %v1332, %v1329
        %v1421 = vpack.c.bf16 %v1340, %v1337
        %v1422 = vpack.c.bf16 %v1348, %v1345
        %v1423 = vpack.c.bf16 %v1356, %v1353
        %v1424 = vpack.c.bf16 %v1364, %v1361
        %v1425 = vpack.c.bf16 %v1372, %v1369
        %v1426 = vpack.c.bf16 %v1380, %v1377
        %v1427 = vpack.c.bf16 %v1388, %v1385
        %v1428 = vpack.c.bf16 %v1396, %v1393
        %v1429 = vpack.c.bf16 %v1404, %v1401
        %v1430 = vpack.c.bf16 %v1412, %v1409
        %v1431 = vld [vmem:[%s4] sm:$0xff]
        %v1432 = vld [vmem:[%s4 + $0x8] sm:$0xff]
        %v1433 = vld [vmem:[%s4 + $0x10] sm:$0xff]
        %v1434 = vld [vmem:[%s4 + $0x18] sm:$0xff]
        %v1435 = vld [vmem:[%s4 + $0x20] sm:$0xff]
        %v1436 = vld [vmem:[%s4 + $0x28] sm:$0xff]
        %v1437 = vld [vmem:[%s4 + $0x30] sm:$0xff]
        %v1438 = vld [vmem:[%s4 + $0x38] sm:$0xff]
        %v1439 = vld [vmem:[%s5] sm:$0xff]
        %v1440 = vld [vmem:[%s5 + $0x8] sm:$0xff]
        %v1441 = vld [vmem:[%s5 + $0x10] sm:$0xff]
        %v1442 = vld [vmem:[%s5 + $0x18] sm:$0xff]
        %v1443 = vld [vmem:[%s5 + $0x20] sm:$0xff]
        %v1444 = vld [vmem:[%s5 + $0x28] sm:$0xff]
        %v1445 = vld [vmem:[%s5 + $0x30] sm:$0xff]
        %v1446 = vld [vmem:[%s5 + $0x38] sm:$0xff]
        %v1455 = vunpack.c.l.b16 %v1439
        %v1456 = vunpack.c.h.b16 %v1439
        %v1457 = vunpack.c.l.b16 %v1440
        %v1458 = vunpack.c.h.b16 %v1440
        %v1459 = vunpack.c.l.b16 %v1441
        %v1460 = vunpack.c.h.b16 %v1441
        %v1461 = vunpack.c.l.b16 %v1442
        %v1462 = vunpack.c.h.b16 %v1442
        %v1463 = vunpack.c.l.b16 %v1443
        %v1464 = vunpack.c.h.b16 %v1443
        %v1465 = vunpack.c.l.b16 %v1444
        %v1466 = vunpack.c.h.b16 %v1444
        %v1467 = vunpack.c.l.b16 %v1445
        %v1468 = vunpack.c.h.b16 %v1445
        %v1469 = vunpack.c.l.b16 %v1446
        %v1470 = vunpack.c.h.b16 %v1446
        %v1471 = vpack.c.b16 %v1457, %v1455
        %v1472 = vpack.c.b16 %v1458, %v1456
        %v1473 = vpack.c.b16 %v1461, %v1459
        %v1474 = vpack.c.b16 %v1462, %v1460
        %v1475 = vpack.c.b16 %v1465, %v1463
        %v1476 = vpack.c.b16 %v1466, %v1464
        %v1477 = vpack.c.b16 %v1469, %v1467
        %v1478 = vpack.c.b16 %v1470, %v1468
        %vm1487 = vcmask 523264
        %v1489 = vsel %vm1487, %v1415, 0
        %v1492 = vsel %vm1487, %v1416, 0
        %v1495 = vsel %vm1487, %v1417, 0
        %v1498 = vsel %vm1487, %v1418, 0
        %v1501 = vsel %vm1487, %v1419, 0
        %v1504 = vsel %vm1487, %v1420, 0
        %v1507 = vsel %vm1487, %v1421, 0
        %v1510 = vsel %vm1487, %v1422, 0
        %v1513 = vsel %vm1487, %v1423, 0
        %v1516 = vsel %vm1487, %v1424, 0
        %v1519 = vsel %vm1487, %v1425, 0
        %v1522 = vsel %vm1487, %v1426, 0
        %v1525 = vsel %vm1487, %v1427, 0
        %v1528 = vsel %vm1487, %v1428, 0
        %v1531 = vsel %vm1487, %v1429, 0
        %v1534 = vsel %vm1487, %v1430, 0
        %1536 = vmatprep.subr.bf16.mxu0 %v1472
        %1537 = vmatpush1.bf16.msra.mxu0 %v1471
        %1538 = vmatprep.subr.bf16.mxu0 %v1474
        %1539 = vmatpush1.bf16.msra.mxu0 %v1473
        %1540 = vmatprep.subr.bf16.mxu0 %v1476
        %1541 = vmatpush1.bf16.msra.mxu0 %v1475
        %1542 = vmatprep.subr.bf16.mxu0 %v1478
        %1543 = vmatpush1.bf16.msra.mxu0 %v1477
        %1544 = vmatprep.subr.bf16.mxu0 0
        %1545 = vmatpush1.bf16.msra.mxu0 0
        %1546 = vmatprep.subr.bf16.mxu0 0
        %1547 = vmatpush1.bf16.msra.mxu0 0
        %1548 = vmatprep.subr.bf16.mxu0 0
        %1549 = vmatpush1.bf16.msra.mxu0 0
        %1550 = vmatprep.subr.bf16.mxu0 0
        %1551 = vmatpush1.bf16.msra.mxu0 0
        %1552 = vmatprep.subr.bf16.mxu0 0
        %1553 = vmatpush1.bf16.msra.mxu0 0
        %1554 = vmatprep.subr.bf16.mxu0 0
        %1555 = vmatpush1.bf16.msra.mxu0 0
        %1556 = vmatprep.subr.bf16.mxu0 0
        %1557 = vmatpush1.bf16.msra.mxu0 0
        %1558 = vmatprep.subr.bf16.mxu0 0
        %1559 = vmatpush1.bf16.msra.mxu0 0
        %1560 = vmatprep.subr.bf16.mxu0 0
        %1561 = vmatpush1.bf16.msra.mxu0 0
        %1562 = vmatprep.subr.bf16.mxu0 0
        %1563 = vmatpush1.bf16.msra.mxu0 0
        %1564 = vmatprep.subr.bf16.mxu0 0
        %1565 = vmatpush1.bf16.msra.mxu0 0
        %1566 = vmatprep.subr.bf16.mxu0 0
        %1567 = vmatpush1.bf16.msra.mxu0 0
        %1568 = vmatprep.mubr.bf16.mxu0 0
        %1569 = vmatmul.mubr.bf16.gmra.mrb[0].mxu0 %v1489
        %v1570 = vpop.f32.mrb[0].mxu0
        %v1571 = vadd.f32 0.0, %v1570
        %v1572 = vpop.f32.mrb[0].mxu0
        %v1573 = vadd.f32 0.0, %v1572
        %v1574 = vpop.f32.mrb[0].mxu0
        %v1575 = vadd.f32 0.0, %v1574
        %v1576 = vpop.f32.mrb[0].mxu0
        %v1577 = vadd.f32 0.0, %v1576
        %1578 = vmatprep.mubr.bf16.mxu0 0
        %1579 = vmatmul.mubr.bf16.gmra.mrb[0].mxu0 %v1492
        %v1580 = vpop.f32.mrb[0].mxu0
        %v1581 = vadd.f32 0.0, %v1580
        %v1582 = vpop.f32.mrb[0].mxu0
        %v1583 = vadd.f32 0.0, %v1582
        %v1584 = vpop.f32.mrb[0].mxu0
        %v1585 = vadd.f32 0.0, %v1584
        %v1586 = vpop.f32.mrb[0].mxu0
        %v1587 = vadd.f32 0.0, %v1586
        %1588 = vmatprep.mubr.bf16.mxu0 0
        %1589 = vmatmul.mubr.bf16.gmra.mrb[0].mxu0 %v1495
        %v1590 = vpop.f32.mrb[0].mxu0
        %v1591 = vadd.f32 0.0, %v1590
        %v1592 = vpop.f32.mrb[0].mxu0
        %v1593 = vadd.f32 0.0, %v1592
        %v1594 = vpop.f32.mrb[0].mxu0
        %v1595 = vadd.f32 0.0, %v1594
        %v1596 = vpop.f32.mrb[0].mxu0
        %v1597 = vadd.f32 0.0, %v1596
        %1598 = vmatprep.mubr.bf16.mxu0 0
        %1599 = vmatmul.mubr.bf16.gmra.mrb[0].mxu0 %v1498
        %v1600 = vpop.f32.mrb[0].mxu0
        %v1601 = vadd.f32 0.0, %v1600
        %v1602 = vpop.f32.mrb[0].mxu0
        %v1603 = vadd.f32 0.0, %v1602
        %v1604 = vpop.f32.mrb[0].mxu0
        %v1605 = vadd.f32 0.0, %v1604
        %v1606 = vpop.f32.mrb[0].mxu0
        %v1607 = vadd.f32 0.0, %v1606
        %1608 = vmatprep.mubr.bf16.mxu0 0
        %1609 = vmatmul.mubr.bf16.gmra.mrb[0].mxu0 %v1501
        %v1610 = vpop.f32.mrb[0].mxu0
        %v1611 = vadd.f32 0.0, %v1610
        %v1612 = vpop.f32.mrb[0].mxu0
        %v1613 = vadd.f32 0.0, %v1612
        %v1614 = vpop.f32.mrb[0].mxu0
        %v1615 = vadd.f32 0.0, %v1614
        %v1616 = vpop.f32.mrb[0].mxu0
        %v1617 = vadd.f32 0.0, %v1616
        %1618 = vmatprep.mubr.bf16.mxu0 0
        %1619 = vmatmul.mubr.bf16.gmra.mrb[0].mxu0 %v1504
        %v1620 = vpop.f32.mrb[0].mxu0
        %v1621 = vadd.f32 0.0, %v1620
        %v1622 = vpop.f32.mrb[0].mxu0
        %v1623 = vadd.f32 0.0, %v1622
        %v1624 = vpop.f32.mrb[0].mxu0
        %v1625 = vadd.f32 0.0, %v1624
        %v1626 = vpop.f32.mrb[0].mxu0
        %v1627 = vadd.f32 0.0, %v1626
        %1628 = vmatprep.mubr.bf16.mxu0 0
        %1629 = vmatmul.mubr.bf16.gmra.mrb[0].mxu0 %v1507
        %v1630 = vpop.f32.mrb[0].mxu0
        %v1631 = vadd.f32 0.0, %v1630
        %v1632 = vpop.f32.mrb[0].mxu0
        %v1633 = vadd.f32 0.0, %v1632
        %v1634 = vpop.f32.mrb[0].mxu0
        %v1635 = vadd.f32 0.0, %v1634
        %v1636 = vpop.f32.mrb[0].mxu0
        %v1637 = vadd.f32 0.0, %v1636
        %1638 = vmatprep.mubr.bf16.mxu0 0
        %1639 = vmatmul.mubr.bf16.gmra.mrb[0].mxu0 %v1510
        %v1640 = vpop.f32.mrb[0].mxu0
        %v1641 = vadd.f32 0.0, %v1640
        %v1642 = vpop.f32.mrb[0].mxu0
        %v1643 = vadd.f32 0.0, %v1642
        %v1644 = vpop.f32.mrb[0].mxu0
        %v1645 = vadd.f32 0.0, %v1644
        %v1646 = vpop.f32.mrb[0].mxu0
        %v1647 = vadd.f32 0.0, %v1646
        %1648 = vmatprep.mubr.bf16.mxu0 0
        %1649 = vmatmul.mubr.bf16.gmra.mrb[0].mxu0 %v1513
        %v1650 = vpop.f32.mrb[0].mxu0
        %v1651 = vadd.f32 0.0, %v1650
        %v1652 = vpop.f32.mrb[0].mxu0
        %v1653 = vadd.f32 0.0, %v1652
        %v1654 = vpop.f32.mrb[0].mxu0
        %v1655 = vadd.f32 0.0, %v1654
        %v1656 = vpop.f32.mrb[0].mxu0
        %v1657 = vadd.f32 0.0, %v1656
        %1658 = vmatprep.mubr.bf16.mxu0 0
        %1659 = vmatmul.mubr.bf16.gmra.mrb[0].mxu0 %v1516
        %v1660 = vpop.f32.mrb[0].mxu0
        %v1661 = vadd.f32 0.0, %v1660
        %v1662 = vpop.f32.mrb[0].mxu0
        %v1663 = vadd.f32 0.0, %v1662
        %v1664 = vpop.f32.mrb[0].mxu0
        %v1665 = vadd.f32 0.0, %v1664
        %v1666 = vpop.f32.mrb[0].mxu0
        %v1667 = vadd.f32 0.0, %v1666
        %1668 = vmatprep.mubr.bf16.mxu0 0
        %1669 = vmatmul.mubr.bf16.gmra.mrb[0].mxu0 %v1519
        %v1670 = vpop.f32.mrb[0].mxu0
        %v1671 = vadd.f32 0.0, %v1670
        %v1672 = vpop.f32.mrb[0].mxu0
        %v1673 = vadd.f32 0.0, %v1672
        %v1674 = vpop.f32.mrb[0].mxu0
        %v1675 = vadd.f32 0.0, %v1674
        %v1676 = vpop.f32.mrb[0].mxu0
        %v1677 = vadd.f32 0.0, %v1676
        %1678 = vmatprep.mubr.bf16.mxu0 0
        %1679 = vmatmul.mubr.bf16.gmra.mrb[0].mxu0 %v1522
        %v1680 = vpop.f32.mrb[0].mxu0
        %v1681 = vadd.f32 0.0, %v1680
        %v1682 = vpop.f32.mrb[0].mxu0
        %v1683 = vadd.f32 0.0, %v1682
        %v1684 = vpop.f32.mrb[0].mxu0
        %v1685 = vadd.f32 0.0, %v1684
        %v1686 = vpop.f32.mrb[0].mxu0
        %v1687 = vadd.f32 0.0, %v1686
        %1688 = vmatprep.mubr.bf16.mxu0 0
        %1689 = vmatmul.mubr.bf16.gmra.mrb[0].mxu0 %v1525
        %v1690 = vpop.f32.mrb[0].mxu0
        %v1691 = vadd.f32 0.0, %v1690
        %v1692 = vpop.f32.mrb[0].mxu0
        %v1693 = vadd.f32 0.0, %v1692
        %v1694 = vpop.f32.mrb[0].mxu0
        %v1695 = vadd.f32 0.0, %v1694
        %v1696 = vpop.f32.mrb[0].mxu0
        %v1697 = vadd.f32 0.0, %v1696
        %1698 = vmatprep.mubr.bf16.mxu0 0
        %1699 = vmatmul.mubr.bf16.gmra.mrb[0].mxu0 %v1528
        %v1700 = vpop.f32.mrb[0].mxu0
        %v1701 = vadd.f32 0.0, %v1700
        %v1702 = vpop.f32.mrb[0].mxu0
        %v1703 = vadd.f32 0.0, %v1702
        %v1704 = vpop.f32.mrb[0].mxu0
        %v1705 = vadd.f32 0.0, %v1704
        %v1706 = vpop.f32.mrb[0].mxu0
        %v1707 = vadd.f32 0.0, %v1706
        %1708 = vmatprep.mubr.bf16.mxu0 0
        %1709 = vmatmul.mubr.bf16.gmra.mrb[0].mxu0 %v1531
        %v1710 = vpop.f32.mrb[0].mxu0
        %v1711 = vadd.f32 0.0, %v1710
        %v1712 = vpop.f32.mrb[0].mxu0
        %v1713 = vadd.f32 0.0, %v1712
        %v1714 = vpop.f32.mrb[0].mxu0
        %v1715 = vadd.f32 0.0, %v1714
        %v1716 = vpop.f32.mrb[0].mxu0
        %v1717 = vadd.f32 0.0, %v1716
        %1718 = vmatprep.mubr.bf16.mxu0 0
        %1719 = vmatmul.mubr.bf16.gmra.mrb[0].mxu0 %v1534
        %v1720 = vpop.f32.mrb[0].mxu0
        %v1721 = vadd.f32 0.0, %v1720
        %v1722 = vpop.f32.mrb[0].mxu0
        %v1723 = vadd.f32 0.0, %v1722
        %v1724 = vpop.f32.mrb[0].mxu0
        %v1725 = vadd.f32 0.0, %v1724
        %v1726 = vpop.f32.mrb[0].mxu0
        %v1727 = vadd.f32 0.0, %v1726
        %1728 = vdwg.mxu0
        %v1737 = vunpack.c.l.b16 %v1431
        %v1738 = vunpack.c.h.b16 %v1431
        %v1739 = vunpack.c.l.b16 %v1432
        %v1740 = vunpack.c.h.b16 %v1432
        %v1741 = vunpack.c.l.b16 %v1433
        %v1742 = vunpack.c.h.b16 %v1433
        %v1743 = vunpack.c.l.b16 %v1434
        %v1744 = vunpack.c.h.b16 %v1434
        %v1745 = vunpack.c.l.b16 %v1435
        %v1746 = vunpack.c.h.b16 %v1435
        %v1747 = vunpack.c.l.b16 %v1436
        %v1748 = vunpack.c.h.b16 %v1436
        %v1749 = vunpack.c.l.b16 %v1437
        %v1750 = vunpack.c.h.b16 %v1437
        %v1751 = vunpack.c.l.b16 %v1438
        %v1752 = vunpack.c.h.b16 %v1438
        %v1753 = vpack.c.b16 %v1739, %v1737
        %v1754 = vpack.c.b16 %v1740, %v1738
        %v1755 = vpack.c.b16 %v1743, %v1741
        %v1756 = vpack.c.b16 %v1744, %v1742
        %v1757 = vpack.c.b16 %v1747, %v1745
        %v1758 = vpack.c.b16 %v1748, %v1746
        %v1759 = vpack.c.b16 %v1751, %v1749
        %v1760 = vpack.c.b16 %v1752, %v1750
        %v1770 = vsel %vm1487, %v1174, 0
        %v1773 = vsel %vm1487, %v1175, 0
        %v1776 = vsel %vm1487, %v1176, 0
        %v1779 = vsel %vm1487, %v1177, 0
        %v1782 = vsel %vm1487, %v1178, 0
        %v1785 = vsel %vm1487, %v1179, 0
        %v1788 = vsel %vm1487, %v1180, 0
        %v1791 = vsel %vm1487, %v1181, 0
        %v1794 = vsel %vm1487, %v1182, 0
        %v1797 = vsel %vm1487, %v1183, 0
        %v1800 = vsel %vm1487, %v1184, 0
        %v1803 = vsel %vm1487, %v1185, 0
        %v1806 = vsel %vm1487, %v1186, 0
        %v1809 = vsel %vm1487, %v1187, 0
        %v1812 = vsel %vm1487, %v1188, 0
        %v1815 = vsel %vm1487, %v1189, 0
        %1817 = vmatprep.subr.bf16.mxu0 %v1754
        %1818 = vmatpush1.bf16.msra.mxu0 %v1753
        %1819 = vmatprep.subr.bf16.mxu0 %v1756
        %1820 = vmatpush1.bf16.msra.mxu0 %v1755
        %1821 = vmatprep.subr.bf16.mxu0 %v1758
        %1822 = vmatpush1.bf16.msra.mxu0 %v1757
        %1823 = vmatprep.subr.bf16.mxu0 %v1760
        %1824 = vmatpush1.bf16.msra.mxu0 %v1759
        %1825 = vmatprep.subr.bf16.mxu0 0
        %1826 = vmatpush1.bf16.msra.mxu0 0
        %1827 = vmatprep.subr.bf16.mxu0 0
        %1828 = vmatpush1.bf16.msra.mxu0 0
        %1829 = vmatprep.subr.bf16.mxu0 0
        %1830 = vmatpush1.bf16.msra.mxu0 0
        %1831 = vmatprep.subr.bf16.mxu0 0
        %1832 = vmatpush1.bf16.msra.mxu0 0
        %1833 = vmatprep.subr.bf16.mxu0 0
        %1834 = vmatpush1.bf16.msra.mxu0 0
        %1835 = vmatprep.subr.bf16.mxu0 0
        %1836 = vmatpush1.bf16.msra.mxu0 0
        %1837 = vmatprep.subr.bf16.mxu0 0
        %1838 = vmatpush1.bf16.msra.mxu0 0
        %1839 = vmatprep.subr.bf16.mxu0 0
        %1840 = vmatpush1.bf16.msra.mxu0 0
        %1841 = vmatprep.subr.bf16.mxu0 0
        %1842 = vmatpush1.bf16.msra.mxu0 0
        %1843 = vmatprep.subr.bf16.mxu0 0
        %1844 = vmatpush1.bf16.msra.mxu0 0
        %1845 = vmatprep.subr.bf16.mxu0 0
        %1846 = vmatpush1.bf16.msra.mxu0 0
        %1847 = vmatprep.subr.bf16.mxu0 0
        %1848 = vmatpush1.bf16.msra.mxu0 0
        %1849 = vmatprep.mubr.bf16.mxu0 0
        %1850 = vmatmul.mubr.bf16.gmra.mrb[0].mxu0 %v1770
        %v1851 = vpop.f32.mrb[0].mxu0
        %v1852 = vadd.f32 %v1571, %v1851
        %v1853 = vpop.f32.mrb[0].mxu0
        %v1854 = vadd.f32 %v1573, %v1853
        %v1855 = vpop.f32.mrb[0].mxu0
        %v1856 = vadd.f32 %v1575, %v1855
        %v1857 = vpop.f32.mrb[0].mxu0
        %v1858 = vadd.f32 %v1577, %v1857
        %1859 = vmatprep.mubr.bf16.mxu0 0
        %1860 = vmatmul.mubr.bf16.gmra.mrb[0].mxu0 %v1773
        %v1861 = vpop.f32.mrb[0].mxu0
        %v1862 = vadd.f32 %v1581, %v1861
        %v1863 = vpop.f32.mrb[0].mxu0
        %v1864 = vadd.f32 %v1583, %v1863
        %v1865 = vpop.f32.mrb[0].mxu0
        %v1866 = vadd.f32 %v1585, %v1865
        %v1867 = vpop.f32.mrb[0].mxu0
        %v1868 = vadd.f32 %v1587, %v1867
        %1869 = vmatprep.mubr.bf16.mxu0 0
        %1870 = vmatmul.mubr.bf16.gmra.mrb[0].mxu0 %v1776
        %v1871 = vpop.f32.mrb[0].mxu0
        %v1872 = vadd.f32 %v1591, %v1871
        %v1873 = vpop.f32.mrb[0].mxu0
        %v1874 = vadd.f32 %v1593, %v1873
        %v1875 = vpop.f32.mrb[0].mxu0
        %v1876 = vadd.f32 %v1595, %v1875
        %v1877 = vpop.f32.mrb[0].mxu0
        %v1878 = vadd.f32 %v1597, %v1877
        %1879 = vmatprep.mubr.bf16.mxu0 0
        %1880 = vmatmul.mubr.bf16.gmra.mrb[0].mxu0 %v1779
        %v1881 = vpop.f32.mrb[0].mxu0
        %v1882 = vadd.f32 %v1601, %v1881
        %v1883 = vpop.f32.mrb[0].mxu0
        %v1884 = vadd.f32 %v1603, %v1883
        %v1885 = vpop.f32.mrb[0].mxu0
        %v1886 = vadd.f32 %v1605, %v1885
        %v1887 = vpop.f32.mrb[0].mxu0
        %v1888 = vadd.f32 %v1607, %v1887
        %1889 = vmatprep.mubr.bf16.mxu0 0
        %1890 = vmatmul.mubr.bf16.gmra.mrb[0].mxu0 %v1782
        %v1891 = vpop.f32.mrb[0].mxu0
        %v1892 = vadd.f32 %v1611, %v1891
        %v1893 = vpop.f32.mrb[0].mxu0
        %v1894 = vadd.f32 %v1613, %v1893
        %v1895 = vpop.f32.mrb[0].mxu0
        %v1896 = vadd.f32 %v1615, %v1895
        %v1897 = vpop.f32.mrb[0].mxu0
        %v1898 = vadd.f32 %v1617, %v1897
        %1899 = vmatprep.mubr.bf16.mxu0 0
        %1900 = vmatmul.mubr.bf16.gmra.mrb[0].mxu0 %v1785
        %v1901 = vpop.f32.mrb[0].mxu0
        %v1902 = vadd.f32 %v1621, %v1901
        %v1903 = vpop.f32.mrb[0].mxu0
        %v1904 = vadd.f32 %v1623, %v1903
        %v1905 = vpop.f32.mrb[0].mxu0
        %v1906 = vadd.f32 %v1625, %v1905
        %v1907 = vpop.f32.mrb[0].mxu0
        %v1908 = vadd.f32 %v1627, %v1907
        %1909 = vmatprep.mubr.bf16.mxu0 0
        %1910 = vmatmul.mubr.bf16.gmra.mrb[0].mxu0 %v1788
        %v1911 = vpop.f32.mrb[0].mxu0
        %v1912 = vadd.f32 %v1631, %v1911
        %v1913 = vpop.f32.mrb[0].mxu0
        %v1914 = vadd.f32 %v1633, %v1913
        %v1915 = vpop.f32.mrb[0].mxu0
        %v1916 = vadd.f32 %v1635, %v1915
        %v1917 = vpop.f32.mrb[0].mxu0
        %v1918 = vadd.f32 %v1637, %v1917
        %1919 = vmatprep.mubr.bf16.mxu0 0
        %1920 = vmatmul.mubr.bf16.gmra.mrb[0].mxu0 %v1791
        %v1921 = vpop.f32.mrb[0].mxu0
        %v1922 = vadd.f32 %v1641, %v1921
        %v1923 = vpop.f32.mrb[0].mxu0
        %v1924 = vadd.f32 %v1643, %v1923
        %v1925 = vpop.f32.mrb[0].mxu0
        %v1926 = vadd.f32 %v1645, %v1925
        %v1927 = vpop.f32.mrb[0].mxu0
        %v1928 = vadd.f32 %v1647, %v1927
        %1929 = vmatprep.mubr.bf16.mxu0 0
        %1930 = vmatmul.mubr.bf16.gmra.mrb[0].mxu0 %v1794
        %v1931 = vpop.f32.mrb[0].mxu0
        %v1932 = vadd.f32 %v1651, %v1931
        %v1933 = vpop.f32.mrb[0].mxu0
        %v1934 = vadd.f32 %v1653, %v1933
        %v1935 = vpop.f32.mrb[0].mxu0
        %v1936 = vadd.f32 %v1655, %v1935
        %v1937 = vpop.f32.mrb[0].mxu0
        %v1938 = vadd.f32 %v1657, %v1937
        %1939 = vmatprep.mubr.bf16.mxu0 0
        %1940 = vmatmul.mubr.bf16.gmra.mrb[0].mxu0 %v1797
        %v1941 = vpop.f32.mrb[0].mxu0
        %v1942 = vadd.f32 %v1661, %v1941
        %v1943 = vpop.f32.mrb[0].mxu0
        %v1944 = vadd.f32 %v1663, %v1943
        %v1945 = vpop.f32.mrb[0].mxu0
        %v1946 = vadd.f32 %v1665, %v1945
        %v1947 = vpop.f32.mrb[0].mxu0
        %v1948 = vadd.f32 %v1667, %v1947
        %1949 = vmatprep.mubr.bf16.mxu0 0
        %1950 = vmatmul.mubr.bf16.gmra.mrb[0].mxu0 %v1800
        %v1951 = vpop.f32.mrb[0].mxu0
        %v1952 = vadd.f32 %v1671, %v1951
        %v1953 = vpop.f32.mrb[0].mxu0
        %v1954 = vadd.f32 %v1673, %v1953
        %v1955 = vpop.f32.mrb[0].mxu0
        %v1956 = vadd.f32 %v1675, %v1955
        %v1957 = vpop.f32.mrb[0].mxu0
        %v1958 = vadd.f32 %v1677, %v1957
        %1959 = vmatprep.mubr.bf16.mxu0 0
        %1960 = vmatmul.mubr.bf16.gmra.mrb[0].mxu0 %v1803
        %v1961 = vpop.f32.mrb[0].mxu0
        %v1962 = vadd.f32 %v1681, %v1961
        %v1963 = vpop.f32.mrb[0].mxu0
        %v1964 = vadd.f32 %v1683, %v1963
        %v1965 = vpop.f32.mrb[0].mxu0
        %v1966 = vadd.f32 %v1685, %v1965
        %v1967 = vpop.f32.mrb[0].mxu0
        %v1968 = vadd.f32 %v1687, %v1967
        %1969 = vmatprep.mubr.bf16.mxu0 0
        %1970 = vmatmul.mubr.bf16.gmra.mrb[0].mxu0 %v1806
        %v1971 = vpop.f32.mrb[0].mxu0
        %v1972 = vadd.f32 %v1691, %v1971
        %v1973 = vpop.f32.mrb[0].mxu0
        %v1974 = vadd.f32 %v1693, %v1973
        %v1975 = vpop.f32.mrb[0].mxu0
        %v1976 = vadd.f32 %v1695, %v1975
        %v1977 = vpop.f32.mrb[0].mxu0
        %v1978 = vadd.f32 %v1697, %v1977
        %1979 = vmatprep.mubr.bf16.mxu0 0
        %1980 = vmatmul.mubr.bf16.gmra.mrb[0].mxu0 %v1809
        %v1981 = vpop.f32.mrb[0].mxu0
        %v1982 = vadd.f32 %v1701, %v1981
        %v1983 = vpop.f32.mrb[0].mxu0
        %v1984 = vadd.f32 %v1703, %v1983
        %v1985 = vpop.f32.mrb[0].mxu0
        %v1986 = vadd.f32 %v1705, %v1985
        %v1987 = vpop.f32.mrb[0].mxu0
        %v1988 = vadd.f32 %v1707, %v1987
        %1989 = vmatprep.mubr.bf16.mxu0 0
        %1990 = vmatmul.mubr.bf16.gmra.mrb[0].mxu0 %v1812
        %v1991 = vpop.f32.mrb[0].mxu0
        %v1992 = vadd.f32 %v1711, %v1991
        %v1993 = vpop.f32.mrb[0].mxu0
        %v1994 = vadd.f32 %v1713, %v1993
        %v1995 = vpop.f32.mrb[0].mxu0
        %v1996 = vadd.f32 %v1715, %v1995
        %v1997 = vpop.f32.mrb[0].mxu0
        %v1998 = vadd.f32 %v1717, %v1997
        %1999 = vmatprep.mubr.bf16.mxu0 0
        %2000 = vmatmul.mubr.bf16.gmra.mrb[0].mxu0 %v1815
        %v2001 = vpop.f32.mrb[0].mxu0
        %v2002 = vadd.f32 %v1721, %v2001
        %v2003 = vpop.f32.mrb[0].mxu0
        %v2004 = vadd.f32 %v1723, %v2003
        %v2005 = vpop.f32.mrb[0].mxu0
        %v2006 = vadd.f32 %v1725, %v2005
        %v2007 = vpop.f32.mrb[0].mxu0
        %v2008 = vadd.f32 %v1727, %v2007
        %2009 = vdwg.mxu0
        %v2010 = vld [vmem:[%s6] sm:$0x3]
        %v2012 = vlaneseq
        %v2013 = vshrl.u32 %v2012, 7
        %v2014 = vsub.s32 0, %v2013
        %v2015 = vrot.slane %v2010, %v2014
        %v2016 = vlaneseq
        %v2017 = vshrl.u32 %v2016, 7
        %v2018 = vsub.s32 1, %v2017
        %v2019 = vrot.slane %v2010, %v2018
        %v2022 = vadd.f32 %v1852, %v2015
        %v2023 = vadd.f32 %v1854, %v2019
        %v2024 = vadd.f32 %v1856, %v2015
        %v2025 = vadd.f32 %v1858, %v2019
        %v2026 = vadd.f32 %v1862, %v2015
        %v2027 = vadd.f32 %v1864, %v2019
        %v2028 = vadd.f32 %v1866, %v2015
        %v2029 = vadd.f32 %v1868, %v2019
        %v2030 = vadd.f32 %v1872, %v2015
        %v2031 = vadd.f32 %v1874, %v2019
        %v2032 = vadd.f32 %v1876, %v2015
        %v2033 = vadd.f32 %v1878, %v2019
        %v2034 = vadd.f32 %v1882, %v2015
        %v2035 = vadd.f32 %v1884, %v2019
        %v2036 = vadd.f32 %v1886, %v2015
        %v2037 = vadd.f32 %v1888, %v2019
        %v2038 = vadd.f32 %v1892, %v2015
        %v2039 = vadd.f32 %v1894, %v2019
        %v2040 = vadd.f32 %v1896, %v2015
        %v2041 = vadd.f32 %v1898, %v2019
        %v2042 = vadd.f32 %v1902, %v2015
        %v2043 = vadd.f32 %v1904, %v2019
        %v2044 = vadd.f32 %v1906, %v2015
        %v2045 = vadd.f32 %v1908, %v2019
        %v2046 = vadd.f32 %v1912, %v2015
        %v2047 = vadd.f32 %v1914, %v2019
        %v2048 = vadd.f32 %v1916, %v2015
        %v2049 = vadd.f32 %v1918, %v2019
        %v2050 = vadd.f32 %v1922, %v2015
        %v2051 = vadd.f32 %v1924, %v2019
        %v2052 = vadd.f32 %v1926, %v2015
        %v2053 = vadd.f32 %v1928, %v2019
        %v2054 = vadd.f32 %v1932, %v2015
        %v2055 = vadd.f32 %v1934, %v2019
        %v2056 = vadd.f32 %v1936, %v2015
        %v2057 = vadd.f32 %v1938, %v2019
        %v2058 = vadd.f32 %v1942, %v2015
        %v2059 = vadd.f32 %v1944, %v2019
        %v2060 = vadd.f32 %v1946, %v2015
        %v2061 = vadd.f32 %v1948, %v2019
        %v2062 = vadd.f32 %v1952, %v2015
        %v2063 = vadd.f32 %v1954, %v2019
        %v2064 = vadd.f32 %v1956, %v2015
        %v2065 = vadd.f32 %v1958, %v2019
        %v2066 = vadd.f32 %v1962, %v2015
        %v2067 = vadd.f32 %v1964, %v2019
        %v2068 = vadd.f32 %v1966, %v2015
        %v2069 = vadd.f32 %v1968, %v2019
        %v2070 = vadd.f32 %v1972, %v2015
        %v2071 = vadd.f32 %v1974, %v2019
        %v2072 = vadd.f32 %v1976, %v2015
        %v2073 = vadd.f32 %v1978, %v2019
        %v2074 = vadd.f32 %v1982, %v2015
        %v2075 = vadd.f32 %v1984, %v2019
        %v2076 = vadd.f32 %v1986, %v2015
        %v2077 = vadd.f32 %v1988, %v2019
        %v2078 = vadd.f32 %v1992, %v2015
        %v2079 = vadd.f32 %v1994, %v2019
        %v2080 = vadd.f32 %v1996, %v2015
        %v2081 = vadd.f32 %v1998, %v2019
        %v2082 = vadd.f32 %v2002, %v2015
        %v2083 = vadd.f32 %v2004, %v2019
        %v2084 = vadd.f32 %v2006, %v2015
        %v2085 = vadd.f32 %v2008, %v2019
        %v2086 = vmax.f32 %v2022, 0.0
        %v2087 = vmax.f32 %v2023, 0.0
        %v2088 = vmax.f32 %v2024, 0.0
        %v2089 = vmax.f32 %v2025, 0.0
        %v2090 = vmax.f32 %v2026, 0.0
        %v2091 = vmax.f32 %v2027, 0.0
        %v2092 = vmax.f32 %v2028, 0.0
        %v2093 = vmax.f32 %v2029, 0.0
        %v2094 = vmax.f32 %v2030, 0.0
        %v2095 = vmax.f32 %v2031, 0.0
        %v2096 = vmax.f32 %v2032, 0.0
        %v2097 = vmax.f32 %v2033, 0.0
        %v2098 = vmax.f32 %v2034, 0.0
        %v2099 = vmax.f32 %v2035, 0.0
        %v2100 = vmax.f32 %v2036, 0.0
        %v2101 = vmax.f32 %v2037, 0.0
        %v2102 = vmax.f32 %v2038, 0.0
        %v2103 = vmax.f32 %v2039, 0.0
        %v2104 = vmax.f32 %v2040, 0.0
        %v2105 = vmax.f32 %v2041, 0.0
        %v2106 = vmax.f32 %v2042, 0.0
        %v2107 = vmax.f32 %v2043, 0.0
        %v2108 = vmax.f32 %v2044, 0.0
        %v2109 = vmax.f32 %v2045, 0.0
        %v2110 = vmax.f32 %v2046, 0.0
        %v2111 = vmax.f32 %v2047, 0.0
        %v2112 = vmax.f32 %v2048, 0.0
        %v2113 = vmax.f32 %v2049, 0.0
        %v2114 = vmax.f32 %v2050, 0.0
        %v2115 = vmax.f32 %v2051, 0.0
        %v2116 = vmax.f32 %v2052, 0.0
        %v2117 = vmax.f32 %v2053, 0.0
        %v2118 = vmax.f32 %v2054, 0.0
        %v2119 = vmax.f32 %v2055, 0.0
        %v2120 = vmax.f32 %v2056, 0.0
        %v2121 = vmax.f32 %v2057, 0.0
        %v2122 = vmax.f32 %v2058, 0.0
        %v2123 = vmax.f32 %v2059, 0.0
        %v2124 = vmax.f32 %v2060, 0.0
        %v2125 = vmax.f32 %v2061, 0.0
        %v2126 = vmax.f32 %v2062, 0.0
        %v2127 = vmax.f32 %v2063, 0.0
        %v2128 = vmax.f32 %v2064, 0.0
        %v2129 = vmax.f32 %v2065, 0.0
        %v2130 = vmax.f32 %v2066, 0.0
        %v2131 = vmax.f32 %v2067, 0.0
        %v2132 = vmax.f32 %v2068, 0.0
        %v2133 = vmax.f32 %v2069, 0.0
        %v2134 = vmax.f32 %v2070, 0.0
        %v2135 = vmax.f32 %v2071, 0.0
        %v2136 = vmax.f32 %v2072, 0.0
        %v2137 = vmax.f32 %v2073, 0.0
        %v2138 = vmax.f32 %v2074, 0.0
        %v2139 = vmax.f32 %v2075, 0.0
        %v2140 = vmax.f32 %v2076, 0.0
        %v2141 = vmax.f32 %v2077, 0.0
        %v2142 = vmax.f32 %v2078, 0.0
        %v2143 = vmax.f32 %v2079, 0.0
        %v2144 = vmax.f32 %v2080, 0.0
        %v2145 = vmax.f32 %v2081, 0.0
        %v2146 = vmax.f32 %v2082, 0.0
        %v2147 = vmax.f32 %v2083, 0.0
        %v2148 = vmax.f32 %v2084, 0.0
        %v2149 = vmax.f32 %v2085, 0.0
        %v2150 = vpack.c.bf16 %v2088, %v2086
        %v2151 = vpack.c.bf16 %v2089, %v2087
        %v2152 = vpack.c.bf16 %v2092, %v2090
        %v2153 = vpack.c.bf16 %v2093, %v2091
        %v2154 = vpack.c.bf16 %v2096, %v2094
        %v2155 = vpack.c.bf16 %v2097, %v2095
        %v2156 = vpack.c.bf16 %v2100, %v2098
        %v2157 = vpack.c.bf16 %v2101, %v2099
        %v2158 = vpack.c.bf16 %v2104, %v2102
        %v2159 = vpack.c.bf16 %v2105, %v2103
        %v2160 = vpack.c.bf16 %v2108, %v2106
        %v2161 = vpack.c.bf16 %v2109, %v2107
        %v2162 = vpack.c.bf16 %v2112, %v2110
        %v2163 = vpack.c.bf16 %v2113, %v2111
        %v2164 = vpack.c.bf16 %v2116, %v2114
        %v2165 = vpack.c.bf16 %v2117, %v2115
        %v2166 = vpack.c.bf16 %v2120, %v2118
        %v2167 = vpack.c.bf16 %v2121, %v2119
        %v2168 = vpack.c.bf16 %v2124, %v2122
        %v2169 = vpack.c.bf16 %v2125, %v2123
        %v2170 = vpack.c.bf16 %v2128, %v2126
        %v2171 = vpack.c.bf16 %v2129, %v2127
        %v2172 = vpack.c.bf16 %v2132, %v2130
        %v2173 = vpack.c.bf16 %v2133, %v2131
        %v2174 = vpack.c.bf16 %v2136, %v2134
        %v2175 = vpack.c.bf16 %v2137, %v2135
        %v2176 = vpack.c.bf16 %v2140, %v2138
        %v2177 = vpack.c.bf16 %v2141, %v2139
        %v2178 = vpack.c.bf16 %v2144, %v2142
        %v2179 = vpack.c.bf16 %v2145, %v2143
        %v2180 = vpack.c.bf16 %v2148, %v2146
        %v2181 = vpack.c.bf16 %v2149, %v2147
        %v2182 = vld [vmem:[%s7] sm:$0xf]
        %v2183 = vld [vmem:[%s7 + $0x4] sm:$0xf]
        %v2184 = vld [vmem:[%s7 + $0x8] sm:$0xf]
        %v2185 = vld [vmem:[%s7 + $0xc] sm:$0xf]
        %v2186 = vld [vmem:[%s7 + $0x10] sm:$0xf]
        %v2187 = vld [vmem:[%s7 + $0x14] sm:$0xf]
        %v2188 = vld [vmem:[%s7 + $0x18] sm:$0xf]
        %v2189 = vld [vmem:[%s7 + $0x1c] sm:$0xf]
        %v2190 = vld [vmem:[%s7 + $0x20] sm:$0xf]
        %v2191 = vld [vmem:[%s7 + $0x24] sm:$0xf]
        %v2192 = vld [vmem:[%s7 + $0x28] sm:$0xf]
        %v2193 = vld [vmem:[%s7 + $0x2c] sm:$0xf]
        %v2194 = vld [vmem:[%s7 + $0x30] sm:$0xf]
        %v2195 = vld [vmem:[%s7 + $0x34] sm:$0xf]
        %v2196 = vld [vmem:[%s7 + $0x38] sm:$0xf]
        %v2197 = vld [vmem:[%s7 + $0x3c] sm:$0xf]
        %v2198 = vld [vmem:[%s7 + $0x40] sm:$0xf]
        %v2199 = vld [vmem:[%s7 + $0x44] sm:$0xf]
        %v2200 = vld [vmem:[%s7 + $0x48] sm:$0xf]
        %v2201 = vld [vmem:[%s7 + $0x4c] sm:$0xf]
        %v2202 = vld [vmem:[%s7 + $0x50] sm:$0xf]
        %v2203 = vld [vmem:[%s7 + $0x54] sm:$0xf]
        %v2204 = vld [vmem:[%s7 + $0x58] sm:$0xf]
        %v2205 = vld [vmem:[%s7 + $0x5c] sm:$0xf]
        %v2206 = vld [vmem:[%s7 + $0x60] sm:$0xf]
        %v2207 = vld [vmem:[%s7 + $0x64] sm:$0xf]
        %v2208 = vld [vmem:[%s7 + $0x68] sm:$0xf]
        %v2209 = vld [vmem:[%s7 + $0x6c] sm:$0xf]
        %v2210 = vld [vmem:[%s7 + $0x70] sm:$0xf]
        %v2211 = vld [vmem:[%s7 + $0x74] sm:$0xf]
        %v2212 = vld [vmem:[%s7 + $0x78] sm:$0xf]
        %v2213 = vld [vmem:[%s7 + $0x7c] sm:$0xf]
        %v2214 = vld [vmem:[%s8] sm:$0x1]
        %v2216 = vlaneseq
        %v2217 = vshrl.u32 %v2216, 7
        %v2218 = vsub.s32 0, %v2217
        %v2219 = vrot.slane %v2214, %v2218
        %v2253 = vunpack.c.l.b16 %v2182
        %v2254 = vunpack.c.l.b16 %v2183
        %v2255 = vunpack.c.l.b16 %v2184
        %v2256 = vunpack.c.l.b16 %v2185
        %v2257 = vunpack.c.l.b16 %v2186
        %v2258 = vunpack.c.l.b16 %v2187
        %v2259 = vunpack.c.l.b16 %v2188
        %v2260 = vunpack.c.l.b16 %v2189
        %v2261 = vunpack.c.l.b16 %v2190
        %v2262 = vunpack.c.l.b16 %v2191
        %v2263 = vunpack.c.l.b16 %v2192
        %v2264 = vunpack.c.l.b16 %v2193
        %v2265 = vunpack.c.l.b16 %v2194
        %v2266 = vunpack.c.l.b16 %v2195
        %v2267 = vunpack.c.l.b16 %v2196
        %v2268 = vunpack.c.l.b16 %v2197
        %v2269 = vunpack.c.l.b16 %v2198
        %v2270 = vunpack.c.l.b16 %v2199
        %v2271 = vunpack.c.l.b16 %v2200
        %v2272 = vunpack.c.l.b16 %v2201
        %v2273 = vunpack.c.l.b16 %v2202
        %v2274 = vunpack.c.l.b16 %v2203
        %v2275 = vunpack.c.l.b16 %v2204
        %v2276 = vunpack.c.l.b16 %v2205
        %v2277 = vunpack.c.l.b16 %v2206
        %v2278 = vunpack.c.l.b16 %v2207
        %v2279 = vunpack.c.l.b16 %v2208
        %v2280 = vunpack.c.l.b16 %v2209
        %v2281 = vunpack.c.l.b16 %v2210
        %v2282 = vunpack.c.l.b16 %v2211
        %v2283 = vunpack.c.l.b16 %v2212
        %v2284 = vunpack.c.l.b16 %v2213
        %v2285 = vpack.c.b16 %v2254, %v2253
        %v2286 = vpack.c.b16 %v2256, %v2255
        %v2287 = vpack.c.b16 %v2258, %v2257
        %v2288 = vpack.c.b16 %v2260, %v2259
        %v2289 = vpack.c.b16 %v2262, %v2261
        %v2290 = vpack.c.b16 %v2264, %v2263
        %v2291 = vpack.c.b16 %v2266, %v2265
        %v2292 = vpack.c.b16 %v2268, %v2267
        %v2293 = vpack.c.b16 %v2270, %v2269
        %v2294 = vpack.c.b16 %v2272, %v2271
        %v2295 = vpack.c.b16 %v2274, %v2273
        %v2296 = vpack.c.b16 %v2276, %v2275
        %v2297 = vpack.c.b16 %v2278, %v2277
        %v2298 = vpack.c.b16 %v2280, %v2279
        %v2299 = vpack.c.b16 %v2282, %v2281
        %v2300 = vpack.c.b16 %v2284, %v2283
        %2317 = vmatprep.subr.bf16.mxu0 0
        %2318 = vmatpush1.bf16.msra.mxu0 %v2285
        %2319 = vmatprep.subr.bf16.mxu0 0
        %2320 = vmatpush1.bf16.msra.mxu0 %v2286
        %2321 = vmatprep.subr.bf16.mxu0 0
        %2322 = vmatpush1.bf16.msra.mxu0 %v2287
        %2323 = vmatprep.subr.bf16.mxu0 0
        %2324 = vmatpush1.bf16.msra.mxu0 %v2288
        %2325 = vmatprep.subr.bf16.mxu0 0
        %2326 = vmatpush1.bf16.msra.mxu0 %v2289
        %2327 = vmatprep.subr.bf16.mxu0 0
        %2328 = vmatpush1.bf16.msra.mxu0 %v2290
        %2329 = vmatprep.subr.bf16.mxu0 0
        %2330 = vmatpush1.bf16.msra.mxu0 %v2291
        %2331 = vmatprep.subr.bf16.mxu0 0
        %2332 = vmatpush1.bf16.msra.mxu0 %v2292
        %2333 = vmatprep.subr.bf16.mxu0 0
        %2334 = vmatpush1.bf16.msra.mxu0 %v2293
        %2335 = vmatprep.subr.bf16.mxu0 0
        %2336 = vmatpush1.bf16.msra.mxu0 %v2294
        %2337 = vmatprep.subr.bf16.mxu0 0
        %2338 = vmatpush1.bf16.msra.mxu0 %v2295
        %2339 = vmatprep.subr.bf16.mxu0 0
        %2340 = vmatpush1.bf16.msra.mxu0 %v2296
        %2341 = vmatprep.subr.bf16.mxu0 0
        %2342 = vmatpush1.bf16.msra.mxu0 %v2297
        %2343 = vmatprep.subr.bf16.mxu0 0
        %2344 = vmatpush1.bf16.msra.mxu0 %v2298
        %2345 = vmatprep.subr.bf16.mxu0 0
        %2346 = vmatpush1.bf16.msra.mxu0 %v2299
        %2347 = vmatprep.subr.bf16.mxu0 0
        %2348 = vmatpush1.bf16.msra.mxu0 %v2300
        %2349 = vmatprep.mubr.bf16.mxu0 %v2151
        %2350 = vmatmul.mubr.bf16.gmra.mrb[0].mxu0 %v2150
        %v2351 = vpop.f32.mrb[0].mxu0
        %v2352 = vadd.f32 %v2219, %v2351
        %v2353 = vpop.f32.mrb[0].mxu0
        %v2354 = vpop.f32.mrb[0].mxu0
        %v2355 = vadd.f32 %v2219, %v2354
        %v2356 = vpop.f32.mrb[0].mxu0
        %2357 = vmatprep.mubr.bf16.mxu0 %v2153
        %2358 = vmatmul.mubr.bf16.gmra.mrb[0].mxu0 %v2152
        %v2359 = vpop.f32.mrb[0].mxu0
        %v2360 = vadd.f32 %v2219, %v2359
        %v2361 = vpop.f32.mrb[0].mxu0
        %v2362 = vpop.f32.mrb[0].mxu0
        %v2363 = vadd.f32 %v2219, %v2362
        %v2364 = vpop.f32.mrb[0].mxu0
        %2365 = vmatprep.mubr.bf16.mxu0 %v2155
        %2366 = vmatmul.mubr.bf16.gmra.mrb[0].mxu0 %v2154
        %v2367 = vpop.f32.mrb[0].mxu0
        %v2368 = vadd.f32 %v2219, %v2367
        %v2369 = vpop.f32.mrb[0].mxu0
        %v2370 = vpop.f32.mrb[0].mxu0
        %v2371 = vadd.f32 %v2219, %v2370
        %v2372 = vpop.f32.mrb[0].mxu0
        %2373 = vmatprep.mubr.bf16.mxu0 %v2157
        %2374 = vmatmul.mubr.bf16.gmra.mrb[0].mxu0 %v2156
        %v2375 = vpop.f32.mrb[0].mxu0
        %v2376 = vadd.f32 %v2219, %v2375
        %v2377 = vpop.f32.mrb[0].mxu0
        %v2378 = vpop.f32.mrb[0].mxu0
        %v2379 = vadd.f32 %v2219, %v2378
        %v2380 = vpop.f32.mrb[0].mxu0
        %2381 = vmatprep.mubr.bf16.mxu0 %v2159
        %2382 = vmatmul.mubr.bf16.gmra.mrb[0].mxu0 %v2158
        %v2383 = vpop.f32.mrb[0].mxu0
        %v2384 = vadd.f32 %v2219, %v2383
        %v2385 = vpop.f32.mrb[0].mxu0
        %v2386 = vpop.f32.mrb[0].mxu0
        %v2387 = vadd.f32 %v2219, %v2386
        %v2388 = vpop.f32.mrb[0].mxu0
        %2389 = vmatprep.mubr.bf16.mxu0 %v2161
        %2390 = vmatmul.mubr.bf16.gmra.mrb[0].mxu0 %v2160
        %v2391 = vpop.f32.mrb[0].mxu0
        %v2392 = vadd.f32 %v2219, %v2391
        %v2393 = vpop.f32.mrb[0].mxu0
        %v2394 = vpop.f32.mrb[0].mxu0
        %v2395 = vadd.f32 %v2219, %v2394
        %v2396 = vpop.f32.mrb[0].mxu0
        %2397 = vmatprep.mubr.bf16.mxu0 %v2163
        %2398 = vmatmul.mubr.bf16.gmra.mrb[0].mxu0 %v2162
        %v2399 = vpop.f32.mrb[0].mxu0
        %v2400 = vadd.f32 %v2219, %v2399
        %v2401 = vpop.f32.mrb[0].mxu0
        %v2402 = vpop.f32.mrb[0].mxu0
        %v2403 = vadd.f32 %v2219, %v2402
        %v2404 = vpop.f32.mrb[0].mxu0
        %2405 = vmatprep.mubr.bf16.mxu0 %v2165
        %2406 = vmatmul.mubr.bf16.gmra.mrb[0].mxu0 %v2164
        %v2407 = vpop.f32.mrb[0].mxu0
        %v2408 = vadd.f32 %v2219, %v2407
        %v2409 = vpop.f32.mrb[0].mxu0
        %v2410 = vpop.f32.mrb[0].mxu0
        %v2411 = vadd.f32 %v2219, %v2410
        %v2412 = vpop.f32.mrb[0].mxu0
        %2413 = vmatprep.mubr.bf16.mxu0 %v2167
        %2414 = vmatmul.mubr.bf16.gmra.mrb[0].mxu0 %v2166
        %v2415 = vpop.f32.mrb[0].mxu0
        %v2416 = vadd.f32 %v2219, %v2415
        %v2417 = vpop.f32.mrb[0].mxu0
        %v2418 = vpop.f32.mrb[0].mxu0
        %v2419 = vadd.f32 %v2219, %v2418
        %v2420 = vpop.f32.mrb[0].mxu0
        %2421 = vmatprep.mubr.bf16.mxu0 %v2169
        %2422 = vmatmul.mubr.bf16.gmra.mrb[0].mxu0 %v2168
        %v2423 = vpop.f32.mrb[0].mxu0
        %v2424 = vadd.f32 %v2219, %v2423
        %v2425 = vpop.f32.mrb[0].mxu0
        %v2426 = vpop.f32.mrb[0].mxu0
        %v2427 = vadd.f32 %v2219, %v2426
        %v2428 = vpop.f32.mrb[0].mxu0
        %2429 = vmatprep.mubr.bf16.mxu0 %v2171
        %2430 = vmatmul.mubr.bf16.gmra.mrb[0].mxu0 %v2170
        %v2431 = vpop.f32.mrb[0].mxu0
        %v2432 = vadd.f32 %v2219, %v2431
        %v2433 = vpop.f32.mrb[0].mxu0
        %v2434 = vpop.f32.mrb[0].mxu0
        %v2435 = vadd.f32 %v2219, %v2434
        %v2436 = vpop.f32.mrb[0].mxu0
        %2437 = vmatprep.mubr.bf16.mxu0 %v2173
        %2438 = vmatmul.mubr.bf16.gmra.mrb[0].mxu0 %v2172
        %v2439 = vpop.f32.mrb[0].mxu0
        %v2440 = vadd.f32 %v2219, %v2439
        %v2441 = vpop.f32.mrb[0].mxu0
        %v2442 = vpop.f32.mrb[0].mxu0
        %v2443 = vadd.f32 %v2219, %v2442
        %v2444 = vpop.f32.mrb[0].mxu0
        %2445 = vmatprep.mubr.bf16.mxu0 %v2175
        %2446 = vmatmul.mubr.bf16.gmra.mrb[0].mxu0 %v2174
        %v2447 = vpop.f32.mrb[0].mxu0
        %v2448 = vadd.f32 %v2219, %v2447
        %v2449 = vpop.f32.mrb[0].mxu0
        %v2450 = vpop.f32.mrb[0].mxu0
        %v2451 = vadd.f32 %v2219, %v2450
        %v2452 = vpop.f32.mrb[0].mxu0
        %2453 = vmatprep.mubr.bf16.mxu0 %v2177
        %2454 = vmatmul.mubr.bf16.gmra.mrb[0].mxu0 %v2176
        %v2455 = vpop.f32.mrb[0].mxu0
        %v2456 = vadd.f32 %v2219, %v2455
        %v2457 = vpop.f32.mrb[0].mxu0
        %v2458 = vpop.f32.mrb[0].mxu0
        %v2459 = vadd.f32 %v2219, %v2458
        %v2460 = vpop.f32.mrb[0].mxu0
        %2461 = vmatprep.mubr.bf16.mxu0 %v2179
        %2462 = vmatmul.mubr.bf16.gmra.mrb[0].mxu0 %v2178
        %v2463 = vpop.f32.mrb[0].mxu0
        %v2464 = vadd.f32 %v2219, %v2463
        %v2465 = vpop.f32.mrb[0].mxu0
        %v2466 = vpop.f32.mrb[0].mxu0
        %v2467 = vadd.f32 %v2219, %v2466
        %v2468 = vpop.f32.mrb[0].mxu0
        %2469 = vmatprep.mubr.bf16.mxu0 %v2181
        %2470 = vmatmul.mubr.bf16.gmra.mrb[0].mxu0 %v2180
        %v2471 = vpop.f32.mrb[0].mxu0
        %v2472 = vadd.f32 %v2219, %v2471
        %v2473 = vpop.f32.mrb[0].mxu0
        %v2474 = vpop.f32.mrb[0].mxu0
        %v2475 = vadd.f32 %v2219, %v2474
        %v2476 = vpop.f32.mrb[0].mxu0
        %2477 = vdwg.mxu0
        %v2478 = vmax.f32 %v2352, 0.0
        %v2479 = vmax.f32 %v2355, 0.0
        %v2480 = vmax.f32 %v2360, 0.0
        %v2481 = vmax.f32 %v2363, 0.0
        %v2482 = vmax.f32 %v2368, 0.0
        %v2483 = vmax.f32 %v2371, 0.0
        %v2484 = vmax.f32 %v2376, 0.0
        %v2485 = vmax.f32 %v2379, 0.0
        %v2486 = vmax.f32 %v2384, 0.0
        %v2487 = vmax.f32 %v2387, 0.0
        %v2488 = vmax.f32 %v2392, 0.0
        %v2489 = vmax.f32 %v2395, 0.0
        %v2490 = vmax.f32 %v2400, 0.0
        %v2491 = vmax.f32 %v2403, 0.0
        %v2492 = vmax.f32 %v2408, 0.0
        %v2493 = vmax.f32 %v2411, 0.0
        %v2494 = vmax.f32 %v2416, 0.0
        %v2495 = vmax.f32 %v2419, 0.0
        %v2496 = vmax.f32 %v2424, 0.0
        %v2497 = vmax.f32 %v2427, 0.0
        %v2498 = vmax.f32 %v2432, 0.0
        %v2499 = vmax.f32 %v2435, 0.0
        %v2500 = vmax.f32 %v2440, 0.0
        %v2501 = vmax.f32 %v2443, 0.0
        %v2502 = vmax.f32 %v2448, 0.0
        %v2503 = vmax.f32 %v2451, 0.0
        %v2504 = vmax.f32 %v2456, 0.0
        %v2505 = vmax.f32 %v2459, 0.0
        %v2506 = vmax.f32 %v2464, 0.0
        %v2507 = vmax.f32 %v2467, 0.0
        %v2508 = vmax.f32 %v2472, 0.0
        %v2509 = vmax.f32 %v2475, 0.0
        %v2510 = vpack.c.bf16 %v2479, %v2478
        %v2511 = vpack.c.bf16 %v2481, %v2480
        %v2512 = vpack.c.bf16 %v2483, %v2482
        %v2513 = vpack.c.bf16 %v2485, %v2484
        %v2514 = vpack.c.bf16 %v2487, %v2486
        %v2515 = vpack.c.bf16 %v2489, %v2488
        %v2516 = vpack.c.bf16 %v2491, %v2490
        %v2517 = vpack.c.bf16 %v2493, %v2492
        %v2518 = vpack.c.bf16 %v2495, %v2494
        %v2519 = vpack.c.bf16 %v2497, %v2496
        %v2520 = vpack.c.bf16 %v2499, %v2498
        %v2521 = vpack.c.bf16 %v2501, %v2500
        %v2522 = vpack.c.bf16 %v2503, %v2502
        %v2523 = vpack.c.bf16 %v2505, %v2504
        %v2524 = vpack.c.bf16 %v2507, %v2506
        %v2525 = vpack.c.bf16 %v2509, %v2508
        %v2526 = vld [vmem:[%s9] sm:$0xf]
        %v2527 = vld [vmem:[%s9 + $0x4] sm:$0xf]
        %v2528 = vld [vmem:[%s9 + $0x8] sm:$0xf]
        %v2529 = vld [vmem:[%s9 + $0xc] sm:$0xf]
        %v2530 = vld [vmem:[%s9 + $0x10] sm:$0xf]
        %v2531 = vld [vmem:[%s9 + $0x14] sm:$0xf]
        %v2532 = vld [vmem:[%s9 + $0x18] sm:$0xf]
        %v2533 = vld [vmem:[%s9 + $0x1c] sm:$0xf]
        %v2534 = vld [vmem:[%s9 + $0x20] sm:$0xf]
        %v2535 = vld [vmem:[%s9 + $0x24] sm:$0xf]
        %v2536 = vld [vmem:[%s9 + $0x28] sm:$0xf]
        %v2537 = vld [vmem:[%s9 + $0x2c] sm:$0xf]
        %v2538 = vld [vmem:[%s9 + $0x30] sm:$0xf]
        %v2539 = vld [vmem:[%s9 + $0x34] sm:$0xf]
        %v2540 = vld [vmem:[%s9 + $0x38] sm:$0xf]
        %v2541 = vld [vmem:[%s9 + $0x3c] sm:$0xf]
        %v2542 = vld [vmem:[%s10] sm:$0x1]
        %v2544 = vlaneseq
        %v2545 = vshrl.u32 %v2544, 7
        %v2546 = vsub.s32 0, %v2545
        %v2547 = vrot.slane %v2542, %v2546
        %v2565 = vunpack.c.l.b16 %v2526
        %v2566 = vunpack.c.l.b16 %v2527
        %v2567 = vunpack.c.l.b16 %v2528
        %v2568 = vunpack.c.l.b16 %v2529
        %v2569 = vunpack.c.l.b16 %v2530
        %v2570 = vunpack.c.l.b16 %v2531
        %v2571 = vunpack.c.l.b16 %v2532
        %v2572 = vunpack.c.l.b16 %v2533
        %v2573 = vunpack.c.l.b16 %v2534
        %v2574 = vunpack.c.l.b16 %v2535
        %v2575 = vunpack.c.l.b16 %v2536
        %v2576 = vunpack.c.l.b16 %v2537
        %v2577 = vunpack.c.l.b16 %v2538
        %v2578 = vunpack.c.l.b16 %v2539
        %v2579 = vunpack.c.l.b16 %v2540
        %v2580 = vunpack.c.l.b16 %v2541
        %v2581 = vpack.c.b16 %v2566, %v2565
        %v2582 = vpack.c.b16 %v2568, %v2567
        %v2583 = vpack.c.b16 %v2570, %v2569
        %v2584 = vpack.c.b16 %v2572, %v2571
        %v2585 = vpack.c.b16 %v2574, %v2573
        %v2586 = vpack.c.b16 %v2576, %v2575
        %v2587 = vpack.c.b16 %v2578, %v2577
        %v2588 = vpack.c.b16 %v2580, %v2579
        %2597 = vmatprep.subr.bf16.mxu0 0
        %2598 = vmatpush1.bf16.msra.mxu0 %v2581
        %2599 = vmatprep.subr.bf16.mxu0 0
        %2600 = vmatpush1.bf16.msra.mxu0 %v2582
        %2601 = vmatprep.subr.bf16.mxu0 0
        %2602 = vmatpush1.bf16.msra.mxu0 %v2583
        %2603 = vmatprep.subr.bf16.mxu0 0
        %2604 = vmatpush1.bf16.msra.mxu0 %v2584
        %2605 = vmatprep.subr.bf16.mxu0 0
        %2606 = vmatpush1.bf16.msra.mxu0 %v2585
        %2607 = vmatprep.subr.bf16.mxu0 0
        %2608 = vmatpush1.bf16.msra.mxu0 %v2586
        %2609 = vmatprep.subr.bf16.mxu0 0
        %2610 = vmatpush1.bf16.msra.mxu0 %v2587
        %2611 = vmatprep.subr.bf16.mxu0 0
        %2612 = vmatpush1.bf16.msra.mxu0 %v2588
        %2613 = vmatprep.subr.bf16.mxu0 0
        %2614 = vmatpush1.bf16.msra.mxu0 0
        %2615 = vmatprep.subr.bf16.mxu0 0
        %2616 = vmatpush1.bf16.msra.mxu0 0
        %2617 = vmatprep.subr.bf16.mxu0 0
        %2618 = vmatpush1.bf16.msra.mxu0 0
        %2619 = vmatprep.subr.bf16.mxu0 0
        %2620 = vmatpush1.bf16.msra.mxu0 0
        %2621 = vmatprep.subr.bf16.mxu0 0
        %2622 = vmatpush1.bf16.msra.mxu0 0
        %2623 = vmatprep.subr.bf16.mxu0 0
        %2624 = vmatpush1.bf16.msra.mxu0 0
        %2625 = vmatprep.subr.bf16.mxu0 0
        %2626 = vmatpush1.bf16.msra.mxu0 0
        %2627 = vmatprep.subr.bf16.mxu0 0
        %2628 = vmatpush1.bf16.msra.mxu0 0
        %2629 = vmatprep.mubr.bf16.mxu0 0
        %2630 = vmatmul.mubr.bf16.gmra.mrb[0].mxu0 %v2510
        %v2631 = vpop.f32.mrb[0].mxu0
        %v2632 = vadd.f32 %v2547, %v2631
        %v2633 = vpop.f32.mrb[0].mxu0
        %v2634 = vpop.f32.mrb[0].mxu0
        %v2635 = vadd.f32 %v2547, %v2634
        %v2636 = vpop.f32.mrb[0].mxu0
        %2637 = vmatprep.mubr.bf16.mxu0 0
        %2638 = vmatmul.mubr.bf16.gmra.mrb[0].mxu0 %v2511
        %v2639 = vpop.f32.mrb[0].mxu0
        %v2640 = vadd.f32 %v2547, %v2639
        %v2641 = vpop.f32.mrb[0].mxu0
        %v2642 = vpop.f32.mrb[0].mxu0
        %v2643 = vadd.f32 %v2547, %v2642
        %v2644 = vpop.f32.mrb[0].mxu0
        %2645 = vmatprep.mubr.bf16.mxu0 0
        %2646 = vmatmul.mubr.bf16.gmra.mrb[0].mxu0 %v2512
        %v2647 = vpop.f32.mrb[0].mxu0
        %v2648 = vadd.f32 %v2547, %v2647
        %v2649 = vpop.f32.mrb[0].mxu0
        %v2650 = vpop.f32.mrb[0].mxu0
        %v2651 = vadd.f32 %v2547, %v2650
        %v2652 = vpop.f32.mrb[0].mxu0
        %2653 = vmatprep.mubr.bf16.mxu0 0
        %2654 = vmatmul.mubr.bf16.gmra.mrb[0].mxu0 %v2513
        %v2655 = vpop.f32.mrb[0].mxu0
        %v2656 = vadd.f32 %v2547, %v2655
        %v2657 = vpop.f32.mrb[0].mxu0
        %v2658 = vpop.f32.mrb[0].mxu0
        %v2659 = vadd.f32 %v2547, %v2658
        %v2660 = vpop.f32.mrb[0].mxu0
        %2661 = vmatprep.mubr.bf16.mxu0 0
        %2662 = vmatmul.mubr.bf16.gmra.mrb[0].mxu0 %v2514
        %v2663 = vpop.f32.mrb[0].mxu0
        %v2664 = vadd.f32 %v2547, %v2663
        %v2665 = vpop.f32.mrb[0].mxu0
        %v2666 = vpop.f32.mrb[0].mxu0
        %v2667 = vadd.f32 %v2547, %v2666
        %v2668 = vpop.f32.mrb[0].mxu0
        %2669 = vmatprep.mubr.bf16.mxu0 0
        %2670 = vmatmul.mubr.bf16.gmra.mrb[0].mxu0 %v2515
        %v2671 = vpop.f32.mrb[0].mxu0
        %v2672 = vadd.f32 %v2547, %v2671
        %v2673 = vpop.f32.mrb[0].mxu0
        %v2674 = vpop.f32.mrb[0].mxu0
        %v2675 = vadd.f32 %v2547, %v2674
        %v2676 = vpop.f32.mrb[0].mxu0
        %2677 = vmatprep.mubr.bf16.mxu0 0
        %2678 = vmatmul.mubr.bf16.gmra.mrb[0].mxu0 %v2516
        %v2679 = vpop.f32.mrb[0].mxu0
        %v2680 = vadd.f32 %v2547, %v2679
        %v2681 = vpop.f32.mrb[0].mxu0
        %v2682 = vpop.f32.mrb[0].mxu0
        %v2683 = vadd.f32 %v2547, %v2682
        %v2684 = vpop.f32.mrb[0].mxu0
        %2685 = vmatprep.mubr.bf16.mxu0 0
        %2686 = vmatmul.mubr.bf16.gmra.mrb[0].mxu0 %v2517
        %v2687 = vpop.f32.mrb[0].mxu0
        %v2688 = vadd.f32 %v2547, %v2687
        %v2689 = vpop.f32.mrb[0].mxu0
        %v2690 = vpop.f32.mrb[0].mxu0
        %v2691 = vadd.f32 %v2547, %v2690
        %v2692 = vpop.f32.mrb[0].mxu0
        %2693 = vmatprep.mubr.bf16.mxu0 0
        %2694 = vmatmul.mubr.bf16.gmra.mrb[0].mxu0 %v2518
        %v2695 = vpop.f32.mrb[0].mxu0
        %v2696 = vadd.f32 %v2547, %v2695
        %v2697 = vpop.f32.mrb[0].mxu0
        %v2698 = vpop.f32.mrb[0].mxu0
        %v2699 = vadd.f32 %v2547, %v2698
        %v2700 = vpop.f32.mrb[0].mxu0
        %2701 = vmatprep.mubr.bf16.mxu0 0
        %2702 = vmatmul.mubr.bf16.gmra.mrb[0].mxu0 %v2519
        %v2703 = vpop.f32.mrb[0].mxu0
        %v2704 = vadd.f32 %v2547, %v2703
        %v2705 = vpop.f32.mrb[0].mxu0
        %v2706 = vpop.f32.mrb[0].mxu0
        %v2707 = vadd.f32 %v2547, %v2706
        %v2708 = vpop.f32.mrb[0].mxu0
        %2709 = vmatprep.mubr.bf16.mxu0 0
        %2710 = vmatmul.mubr.bf16.gmra.mrb[0].mxu0 %v2520
        %v2711 = vpop.f32.mrb[0].mxu0
        %v2712 = vadd.f32 %v2547, %v2711
        %v2713 = vpop.f32.mrb[0].mxu0
        %v2714 = vpop.f32.mrb[0].mxu0
        %v2715 = vadd.f32 %v2547, %v2714
        %v2716 = vpop.f32.mrb[0].mxu0
        %2717 = vmatprep.mubr.bf16.mxu0 0
        %2718 = vmatmul.mubr.bf16.gmra.mrb[0].mxu0 %v2521
        %v2719 = vpop.f32.mrb[0].mxu0
        %v2720 = vadd.f32 %v2547, %v2719
        %v2721 = vpop.f32.mrb[0].mxu0
        %v2722 = vpop.f32.mrb[0].mxu0
        %v2723 = vadd.f32 %v2547, %v2722
        %v2724 = vpop.f32.mrb[0].mxu0
        %2725 = vmatprep.mubr.bf16.mxu0 0
        %2726 = vmatmul.mubr.bf16.gmra.mrb[0].mxu0 %v2522
        %v2727 = vpop.f32.mrb[0].mxu0
        %v2728 = vadd.f32 %v2547, %v2727
        %v2729 = vpop.f32.mrb[0].mxu0
        %v2730 = vpop.f32.mrb[0].mxu0
        %v2731 = vadd.f32 %v2547, %v2730
        %v2732 = vpop.f32.mrb[0].mxu0
        %2733 = vmatprep.mubr.bf16.mxu0 0
        %2734 = vmatmul.mubr.bf16.gmra.mrb[0].mxu0 %v2523
        %v2735 = vpop.f32.mrb[0].mxu0
        %v2736 = vadd.f32 %v2547, %v2735
        %v2737 = vpop.f32.mrb[0].mxu0
        %v2738 = vpop.f32.mrb[0].mxu0
        %v2739 = vadd.f32 %v2547, %v2738
        %v2740 = vpop.f32.mrb[0].mxu0
        %2741 = vmatprep.mubr.bf16.mxu0 0
        %2742 = vmatmul.mubr.bf16.gmra.mrb[0].mxu0 %v2524
        %v2743 = vpop.f32.mrb[0].mxu0
        %v2744 = vadd.f32 %v2547, %v2743
        %v2745 = vpop.f32.mrb[0].mxu0
        %v2746 = vpop.f32.mrb[0].mxu0
        %v2747 = vadd.f32 %v2547, %v2746
        %v2748 = vpop.f32.mrb[0].mxu0
        %2749 = vmatprep.mubr.bf16.mxu0 0
        %2750 = vmatmul.mubr.bf16.gmra.mrb[0].mxu0 %v2525
        %v2751 = vpop.f32.mrb[0].mxu0
        %v2752 = vadd.f32 %v2547, %v2751
        %v2753 = vpop.f32.mrb[0].mxu0
        %v2754 = vpop.f32.mrb[0].mxu0
        %v2755 = vadd.f32 %v2547, %v2754
        %v2756 = vpop.f32.mrb[0].mxu0
        %2757 = vdwg.mxu0
        %v2758 = vmax.f32 %v2632, 0.0
        %v2759 = vmax.f32 %v2635, 0.0
        %v2760 = vmax.f32 %v2640, 0.0
        %v2761 = vmax.f32 %v2643, 0.0
        %v2762 = vmax.f32 %v2648, 0.0
        %v2763 = vmax.f32 %v2651, 0.0
        %v2764 = vmax.f32 %v2656, 0.0
        %v2765 = vmax.f32 %v2659, 0.0
        %v2766 = vmax.f32 %v2664, 0.0
        %v2767 = vmax.f32 %v2667, 0.0
        %v2768 = vmax.f32 %v2672, 0.0
        %v2769 = vmax.f32 %v2675, 0.0
        %v2770 = vmax.f32 %v2680, 0.0
        %v2771 = vmax.f32 %v2683, 0.0
        %v2772 = vmax.f32 %v2688, 0.0
        %v2773 = vmax.f32 %v2691, 0.0
        %v2774 = vmax.f32 %v2696, 0.0
        %v2775 = vmax.f32 %v2699, 0.0
        %v2776 = vmax.f32 %v2704, 0.0
        %v2777 = vmax.f32 %v2707, 0.0
        %v2778 = vmax.f32 %v2712, 0.0
        %v2779 = vmax.f32 %v2715, 0.0
        %v2780 = vmax.f32 %v2720, 0.0
        %v2781 = vmax.f32 %v2723, 0.0
        %v2782 = vmax.f32 %v2728, 0.0
        %v2783 = vmax.f32 %v2731, 0.0
        %v2784 = vmax.f32 %v2736, 0.0
        %v2785 = vmax.f32 %v2739, 0.0
        %v2786 = vmax.f32 %v2744, 0.0
        %v2787 = vmax.f32 %v2747, 0.0
        %v2788 = vmax.f32 %v2752, 0.0
        %v2789 = vmax.f32 %v2755, 0.0
        %v2790 = vld [vmem:[%s11] sm:$0x1]
        %v2792 = vlaneseq
        %v2793 = vshrl.u32 %v2792, 7
        %v2794 = vsub.s32 0, %v2793
        %v2795 = vrot.slane %v2790, %v2794
        %v2797 = vmul.f32 %v2758, %v2795
        %v2798 = vmul.f32 %v2759, %v2795
        %v2799 = vmul.f32 %v2760, %v2795
        %v2800 = vmul.f32 %v2761, %v2795
        %v2801 = vmul.f32 %v2762, %v2795
        %v2802 = vmul.f32 %v2763, %v2795
        %v2803 = vmul.f32 %v2764, %v2795
        %v2804 = vmul.f32 %v2765, %v2795
        %v2805 = vmul.f32 %v2766, %v2795
        %v2806 = vmul.f32 %v2767, %v2795
        %v2807 = vmul.f32 %v2768, %v2795
        %v2808 = vmul.f32 %v2769, %v2795
        %v2809 = vmul.f32 %v2770, %v2795
        %v2810 = vmul.f32 %v2771, %v2795
        %v2811 = vmul.f32 %v2772, %v2795
        %v2812 = vmul.f32 %v2773, %v2795
        %v2813 = vmul.f32 %v2774, %v2795
        %v2814 = vmul.f32 %v2775, %v2795
        %v2815 = vmul.f32 %v2776, %v2795
        %v2816 = vmul.f32 %v2777, %v2795
        %v2817 = vmul.f32 %v2778, %v2795
        %v2818 = vmul.f32 %v2779, %v2795
        %v2819 = vmul.f32 %v2780, %v2795
        %v2820 = vmul.f32 %v2781, %v2795
        %v2821 = vmul.f32 %v2782, %v2795
        %v2822 = vmul.f32 %v2783, %v2795
        %v2823 = vmul.f32 %v2784, %v2795
        %v2824 = vmul.f32 %v2785, %v2795
        %v2825 = vmul.f32 %v2786, %v2795
        %v2826 = vmul.f32 %v2787, %v2795
        %v2827 = vmul.f32 %v2788, %v2795
        %v2828 = vmul.f32 %v2789, %v2795
        %2829 = vadd.xlane.f32.xlu0 %v2797
        %v2830 = vpop.xlane.xlu0 %2829
        %2831 = vadd.xlane.f32.xlu0 %v2798
        %v2832 = vpop.xlane.xlu0 %2831
        %2833 = vadd.xlane.f32.xlu0 %v2799
        %v2834 = vpop.xlane.xlu0 %2833
        %2835 = vadd.xlane.f32.xlu0 %v2800
        %v2836 = vpop.xlane.xlu0 %2835
        %2837 = vadd.xlane.f32.xlu0 %v2801
        %v2838 = vpop.xlane.xlu0 %2837
        %2839 = vadd.xlane.f32.xlu0 %v2802
        %v2840 = vpop.xlane.xlu0 %2839
        %2841 = vadd.xlane.f32.xlu0 %v2803
        %v2842 = vpop.xlane.xlu0 %2841
        %2843 = vadd.xlane.f32.xlu0 %v2804
        %v2844 = vpop.xlane.xlu0 %2843
        %2845 = vadd.xlane.f32.xlu0 %v2805
        %v2846 = vpop.xlane.xlu0 %2845
        %2847 = vadd.xlane.f32.xlu0 %v2806
        %v2848 = vpop.xlane.xlu0 %2847
        %2849 = vadd.xlane.f32.xlu0 %v2807
        %v2850 = vpop.xlane.xlu0 %2849
        %2851 = vadd.xlane.f32.xlu0 %v2808
        %v2852 = vpop.xlane.xlu0 %2851
        %2853 = vadd.xlane.f32.xlu0 %v2809
        %v2854 = vpop.xlane.xlu0 %2853
        %2855 = vadd.xlane.f32.xlu0 %v2810
        %v2856 = vpop.xlane.xlu0 %2855
        %2857 = vadd.xlane.f32.xlu0 %v2811
        %v2858 = vpop.xlane.xlu0 %2857
        %2859 = vadd.xlane.f32.xlu0 %v2812
        %v2860 = vpop.xlane.xlu0 %2859
        %2861 = vadd.xlane.f32.xlu0 %v2813
        %v2862 = vpop.xlane.xlu0 %2861
        %2863 = vadd.xlane.f32.xlu0 %v2814
        %v2864 = vpop.xlane.xlu0 %2863
        %2865 = vadd.xlane.f32.xlu0 %v2815
        %v2866 = vpop.xlane.xlu0 %2865
        %2867 = vadd.xlane.f32.xlu0 %v2816
        %v2868 = vpop.xlane.xlu0 %2867
        %2869 = vadd.xlane.f32.xlu0 %v2817
        %v2870 = vpop.xlane.xlu0 %2869
        %2871 = vadd.xlane.f32.xlu0 %v2818
        %v2872 = vpop.xlane.xlu0 %2871
        %2873 = vadd.xlane.f32.xlu0 %v2819
        %v2874 = vpop.xlane.xlu0 %2873
        %2875 = vadd.xlane.f32.xlu0 %v2820
        %v2876 = vpop.xlane.xlu0 %2875
        %2877 = vadd.xlane.f32.xlu0 %v2821
        %v2878 = vpop.xlane.xlu0 %2877
        %2879 = vadd.xlane.f32.xlu0 %v2822
        %v2880 = vpop.xlane.xlu0 %2879
        %2881 = vadd.xlane.f32.xlu0 %v2823
        %v2882 = vpop.xlane.xlu0 %2881
        %2883 = vadd.xlane.f32.xlu0 %v2824
        %v2884 = vpop.xlane.xlu0 %2883
        %2885 = vadd.xlane.f32.xlu0 %v2825
        %v2886 = vpop.xlane.xlu0 %2885
        %2887 = vadd.xlane.f32.xlu0 %v2826
        %v2888 = vpop.xlane.xlu0 %2887
        %2889 = vadd.xlane.f32.xlu0 %v2827
        %v2890 = vpop.xlane.xlu0 %2889
        %2891 = vadd.xlane.f32.xlu0 %v2828
        %v2892 = vpop.xlane.xlu0 %2891
        %v2893 = vld [vmem:[#allocation2] sm:$0x1]
        %2895 = vset.pattern.permute.xlu0 0
        %2896 = vperm.xlu0 %2895, %v2893
        %v2897 = vpop.permute.xlu0 %2896
        %v2899 = vlaneseq
        %v2900 = vshrl.u32 %v2899, 7
        %v2901 = vsub.s32 0, %v2900
        %v2902 = vrot.slane %v2897, %v2901
        %v2903 = vadd.f32 %v2830, %v2902
        %v2904 = vadd.f32 %v2832, %v2902
        %v2905 = vadd.f32 %v2834, %v2902
        %v2906 = vadd.f32 %v2836, %v2902
        %v2907 = vadd.f32 %v2838, %v2902
        %v2908 = vadd.f32 %v2840, %v2902
        %v2909 = vadd.f32 %v2842, %v2902
        %v2910 = vadd.f32 %v2844, %v2902
        %v2911 = vadd.f32 %v2846, %v2902
        %v2912 = vadd.f32 %v2848, %v2902
        %v2913 = vadd.f32 %v2850, %v2902
        %v2914 = vadd.f32 %v2852, %v2902
        %v2915 = vadd.f32 %v2854, %v2902
        %v2916 = vadd.f32 %v2856, %v2902
        %v2917 = vadd.f32 %v2858, %v2902
        %v2918 = vadd.f32 %v2860, %v2902
        %v2919 = vadd.f32 %v2862, %v2902
        %v2920 = vadd.f32 %v2864, %v2902
        %v2921 = vadd.f32 %v2866, %v2902
        %v2922 = vadd.f32 %v2868, %v2902
        %v2923 = vadd.f32 %v2870, %v2902
        %v2924 = vadd.f32 %v2872, %v2902
        %v2925 = vadd.f32 %v2874, %v2902
        %v2926 = vadd.f32 %v2876, %v2902
        %v2927 = vadd.f32 %v2878, %v2902
        %v2928 = vadd.f32 %v2880, %v2902
        %v2929 = vadd.f32 %v2882, %v2902
        %v2930 = vadd.f32 %v2884, %v2902
        %v2931 = vadd.f32 %v2886, %v2902
        %v2932 = vadd.f32 %v2888, %v2902
        %v2933 = vadd.f32 %v2890, %v2902
        %v2934 = vadd.f32 %v2892, %v2902
        %v2967 = vlaneseq
        %v2968 = vshrl.u32 %v2967, 7
        %v2969 = vsub.s32 0, %v2968
        %v2970 = vrot.slane %v2903, %v2969
        %v2971 = vlaneseq
        %v2972 = vshrl.u32 %v2971, 7
        %v2973 = vsub.s32 1, %v2972
        %v2974 = vrot.slane %v2903, %v2973
        %v2975 = vlaneseq
        %v2976 = vshrl.u32 %v2975, 7
        %v2977 = vsub.s32 2, %v2976
        %v2978 = vrot.slane %v2903, %v2977
        %v2979 = vlaneseq
        %v2980 = vshrl.u32 %v2979, 7
        %v2981 = vsub.s32 3, %v2980
        %v2982 = vrot.slane %v2903, %v2981
        %v2983 = vlaneseq
        %v2984 = vshrl.u32 %v2983, 7
        %v2985 = vsub.s32 4, %v2984
        %v2986 = vrot.slane %v2903, %v2985
        %v2987 = vlaneseq
        %v2988 = vshrl.u32 %v2987, 7
        %v2989 = vsub.s32 5, %v2988
        %v2990 = vrot.slane %v2903, %v2989
        %v2991 = vlaneseq
        %v2992 = vshrl.u32 %v2991, 7
        %v2993 = vsub.s32 6, %v2992
        %v2994 = vrot.slane %v2903, %v2993
        %v2995 = vlaneseq
        %v2996 = vshrl.u32 %v2995, 7
        %v2997 = vsub.s32 7, %v2996
        %v2998 = vrot.slane %v2903, %v2997
        %v2999 = vlaneseq
        %v3000 = vshrl.u32 %v2999, 7
        %v3001 = vsub.s32 0, %v3000
        %v3002 = vrot.slane %v2904, %v3001
        %v3003 = vlaneseq
        %v3004 = vshrl.u32 %v3003, 7
        %v3005 = vsub.s32 1, %v3004
        %v3006 = vrot.slane %v2904, %v3005
        %v3007 = vlaneseq
        %v3008 = vshrl.u32 %v3007, 7
        %v3009 = vsub.s32 2, %v3008
        %v3010 = vrot.slane %v2904, %v3009
        %v3011 = vlaneseq
        %v3012 = vshrl.u32 %v3011, 7
        %v3013 = vsub.s32 3, %v3012
        %v3014 = vrot.slane %v2904, %v3013
        %v3015 = vlaneseq
        %v3016 = vshrl.u32 %v3015, 7
        %v3017 = vsub.s32 4, %v3016
        %v3018 = vrot.slane %v2904, %v3017
        %v3019 = vlaneseq
        %v3020 = vshrl.u32 %v3019, 7
        %v3021 = vsub.s32 5, %v3020
        %v3022 = vrot.slane %v2904, %v3021
        %v3023 = vlaneseq
        %v3024 = vshrl.u32 %v3023, 7
        %v3025 = vsub.s32 6, %v3024
        %v3026 = vrot.slane %v2904, %v3025
        %v3027 = vlaneseq
        %v3028 = vshrl.u32 %v3027, 7
        %v3029 = vsub.s32 7, %v3028
        %v3030 = vrot.slane %v2904, %v3029
        %v3031 = vlaneseq
        %v3032 = vshrl.u32 %v3031, 7
        %v3033 = vsub.s32 0, %v3032
        %v3034 = vrot.slane %v2905, %v3033
        %v3035 = vlaneseq
        %v3036 = vshrl.u32 %v3035, 7
        %v3037 = vsub.s32 1, %v3036
        %v3038 = vrot.slane %v2905, %v3037
        %v3039 = vlaneseq
        %v3040 = vshrl.u32 %v3039, 7
        %v3041 = vsub.s32 2, %v3040
        %v3042 = vrot.slane %v2905, %v3041
        %v3043 = vlaneseq
        %v3044 = vshrl.u32 %v3043, 7
        %v3045 = vsub.s32 3, %v3044
        %v3046 = vrot.slane %v2905, %v3045
        %v3047 = vlaneseq
        %v3048 = vshrl.u32 %v3047, 7
        %v3049 = vsub.s32 4, %v3048
        %v3050 = vrot.slane %v2905, %v3049
        %v3051 = vlaneseq
        %v3052 = vshrl.u32 %v3051, 7
        %v3053 = vsub.s32 5, %v3052
        %v3054 = vrot.slane %v2905, %v3053
        %v3055 = vlaneseq
        %v3056 = vshrl.u32 %v3055, 7
        %v3057 = vsub.s32 6, %v3056
        %v3058 = vrot.slane %v2905, %v3057
        %v3059 = vlaneseq
        %v3060 = vshrl.u32 %v3059, 7
        %v3061 = vsub.s32 7, %v3060
        %v3062 = vrot.slane %v2905, %v3061
        %v3063 = vlaneseq
        %v3064 = vshrl.u32 %v3063, 7
        %v3065 = vsub.s32 0, %v3064
        %v3066 = vrot.slane %v2906, %v3065
        %v3067 = vlaneseq
        %v3068 = vshrl.u32 %v3067, 7
        %v3069 = vsub.s32 1, %v3068
        %v3070 = vrot.slane %v2906, %v3069
        %v3071 = vlaneseq
        %v3072 = vshrl.u32 %v3071, 7
        %v3073 = vsub.s32 2, %v3072
        %v3074 = vrot.slane %v2906, %v3073
        %v3075 = vlaneseq
        %v3076 = vshrl.u32 %v3075, 7
        %v3077 = vsub.s32 3, %v3076
        %v3078 = vrot.slane %v2906, %v3077
        %v3079 = vlaneseq
        %v3080 = vshrl.u32 %v3079, 7
        %v3081 = vsub.s32 4, %v3080
        %v3082 = vrot.slane %v2906, %v3081
        %v3083 = vlaneseq
        %v3084 = vshrl.u32 %v3083, 7
        %v3085 = vsub.s32 5, %v3084
        %v3086 = vrot.slane %v2906, %v3085
        %v3087 = vlaneseq
        %v3088 = vshrl.u32 %v3087, 7
        %v3089 = vsub.s32 6, %v3088
        %v3090 = vrot.slane %v2906, %v3089
        %v3091 = vlaneseq
        %v3092 = vshrl.u32 %v3091, 7
        %v3093 = vsub.s32 7, %v3092
        %v3094 = vrot.slane %v2906, %v3093
        %v3095 = vlaneseq
        %v3096 = vshrl.u32 %v3095, 7
        %v3097 = vsub.s32 0, %v3096
        %v3098 = vrot.slane %v2907, %v3097
        %v3099 = vlaneseq
        %v3100 = vshrl.u32 %v3099, 7
        %v3101 = vsub.s32 1, %v3100
        %v3102 = vrot.slane %v2907, %v3101
        %v3103 = vlaneseq
        %v3104 = vshrl.u32 %v3103, 7
        %v3105 = vsub.s32 2, %v3104
        %v3106 = vrot.slane %v2907, %v3105
        %v3107 = vlaneseq
        %v3108 = vshrl.u32 %v3107, 7
        %v3109 = vsub.s32 3, %v3108
        %v3110 = vrot.slane %v2907, %v3109
        %v3111 = vlaneseq
        %v3112 = vshrl.u32 %v3111, 7
        %v3113 = vsub.s32 4, %v3112
        %v3114 = vrot.slane %v2907, %v3113
        %v3115 = vlaneseq
        %v3116 = vshrl.u32 %v3115, 7
        %v3117 = vsub.s32 5, %v3116
        %v3118 = vrot.slane %v2907, %v3117
        %v3119 = vlaneseq
        %v3120 = vshrl.u32 %v3119, 7
        %v3121 = vsub.s32 6, %v3120
        %v3122 = vrot.slane %v2907, %v3121
        %v3123 = vlaneseq
        %v3124 = vshrl.u32 %v3123, 7
        %v3125 = vsub.s32 7, %v3124
        %v3126 = vrot.slane %v2907, %v3125
        %v3127 = vlaneseq
        %v3128 = vshrl.u32 %v3127, 7
        %v3129 = vsub.s32 0, %v3128
        %v3130 = vrot.slane %v2908, %v3129
        %v3131 = vlaneseq
        %v3132 = vshrl.u32 %v3131, 7
        %v3133 = vsub.s32 1, %v3132
        %v3134 = vrot.slane %v2908, %v3133
        %v3135 = vlaneseq
        %v3136 = vshrl.u32 %v3135, 7
        %v3137 = vsub.s32 2, %v3136
        %v3138 = vrot.slane %v2908, %v3137
        %v3139 = vlaneseq
        %v3140 = vshrl.u32 %v3139, 7
        %v3141 = vsub.s32 3, %v3140
        %v3142 = vrot.slane %v2908, %v3141
        %v3143 = vlaneseq
        %v3144 = vshrl.u32 %v3143, 7
        %v3145 = vsub.s32 4, %v3144
        %v3146 = vrot.slane %v2908, %v3145
        %v3147 = vlaneseq
        %v3148 = vshrl.u32 %v3147, 7
        %v3149 = vsub.s32 5, %v3148
        %v3150 = vrot.slane %v2908, %v3149
        %v3151 = vlaneseq
        %v3152 = vshrl.u32 %v3151, 7
        %v3153 = vsub.s32 6, %v3152
        %v3154 = vrot.slane %v2908, %v3153
        %v3155 = vlaneseq
        %v3156 = vshrl.u32 %v3155, 7
        %v3157 = vsub.s32 7, %v3156
        %v3158 = vrot.slane %v2908, %v3157
        %v3159 = vlaneseq
        %v3160 = vshrl.u32 %v3159, 7
        %v3161 = vsub.s32 0, %v3160
        %v3162 = vrot.slane %v2909, %v3161
        %v3163 = vlaneseq
        %v3164 = vshrl.u32 %v3163, 7
        %v3165 = vsub.s32 1, %v3164
        %v3166 = vrot.slane %v2909, %v3165
        %v3167 = vlaneseq
        %v3168 = vshrl.u32 %v3167, 7
        %v3169 = vsub.s32 2, %v3168
        %v3170 = vrot.slane %v2909, %v3169
        %v3171 = vlaneseq
        %v3172 = vshrl.u32 %v3171, 7
        %v3173 = vsub.s32 3, %v3172
        %v3174 = vrot.slane %v2909, %v3173
        %v3175 = vlaneseq
        %v3176 = vshrl.u32 %v3175, 7
        %v3177 = vsub.s32 4, %v3176
        %v3178 = vrot.slane %v2909, %v3177
        %v3179 = vlaneseq
        %v3180 = vshrl.u32 %v3179, 7
        %v3181 = vsub.s32 5, %v3180
        %v3182 = vrot.slane %v2909, %v3181
        %v3183 = vlaneseq
        %v3184 = vshrl.u32 %v3183, 7
        %v3185 = vsub.s32 6, %v3184
        %v3186 = vrot.slane %v2909, %v3185
        %v3187 = vlaneseq
        %v3188 = vshrl.u32 %v3187, 7
        %v3189 = vsub.s32 7, %v3188
        %v3190 = vrot.slane %v2909, %v3189
        %v3191 = vlaneseq
        %v3192 = vshrl.u32 %v3191, 7
        %v3193 = vsub.s32 0, %v3192
        %v3194 = vrot.slane %v2910, %v3193
        %v3195 = vlaneseq
        %v3196 = vshrl.u32 %v3195, 7
        %v3197 = vsub.s32 1, %v3196
        %v3198 = vrot.slane %v2910, %v3197
        %v3199 = vlaneseq
        %v3200 = vshrl.u32 %v3199, 7
        %v3201 = vsub.s32 2, %v3200
        %v3202 = vrot.slane %v2910, %v3201
        %v3203 = vlaneseq
        %v3204 = vshrl.u32 %v3203, 7
        %v3205 = vsub.s32 3, %v3204
        %v3206 = vrot.slane %v2910, %v3205
        %v3207 = vlaneseq
        %v3208 = vshrl.u32 %v3207, 7
        %v3209 = vsub.s32 4, %v3208
        %v3210 = vrot.slane %v2910, %v3209
        %v3211 = vlaneseq
        %v3212 = vshrl.u32 %v3211, 7
        %v3213 = vsub.s32 5, %v3212
        %v3214 = vrot.slane %v2910, %v3213
        %v3215 = vlaneseq
        %v3216 = vshrl.u32 %v3215, 7
        %v3217 = vsub.s32 6, %v3216
        %v3218 = vrot.slane %v2910, %v3217
        %v3219 = vlaneseq
        %v3220 = vshrl.u32 %v3219, 7
        %v3221 = vsub.s32 7, %v3220
        %v3222 = vrot.slane %v2910, %v3221
        %v3223 = vlaneseq
        %v3224 = vshrl.u32 %v3223, 7
        %v3225 = vsub.s32 0, %v3224
        %v3226 = vrot.slane %v2911, %v3225
        %v3227 = vlaneseq
        %v3228 = vshrl.u32 %v3227, 7
        %v3229 = vsub.s32 1, %v3228
        %v3230 = vrot.slane %v2911, %v3229
        %v3231 = vlaneseq
        %v3232 = vshrl.u32 %v3231, 7
        %v3233 = vsub.s32 2, %v3232
        %v3234 = vrot.slane %v2911, %v3233
        %v3235 = vlaneseq
        %v3236 = vshrl.u32 %v3235, 7
        %v3237 = vsub.s32 3, %v3236
        %v3238 = vrot.slane %v2911, %v3237
        %v3239 = vlaneseq
        %v3240 = vshrl.u32 %v3239, 7
        %v3241 = vsub.s32 4, %v3240
        %v3242 = vrot.slane %v2911, %v3241
        %v3243 = vlaneseq
        %v3244 = vshrl.u32 %v3243, 7
        %v3245 = vsub.s32 5, %v3244
        %v3246 = vrot.slane %v2911, %v3245
        %v3247 = vlaneseq
        %v3248 = vshrl.u32 %v3247, 7
        %v3249 = vsub.s32 6, %v3248
        %v3250 = vrot.slane %v2911, %v3249
        %v3251 = vlaneseq
        %v3252 = vshrl.u32 %v3251, 7
        %v3253 = vsub.s32 7, %v3252
        %v3254 = vrot.slane %v2911, %v3253
        %v3255 = vlaneseq
        %v3256 = vshrl.u32 %v3255, 7
        %v3257 = vsub.s32 0, %v3256
        %v3258 = vrot.slane %v2912, %v3257
        %v3259 = vlaneseq
        %v3260 = vshrl.u32 %v3259, 7
        %v3261 = vsub.s32 1, %v3260
        %v3262 = vrot.slane %v2912, %v3261
        %v3263 = vlaneseq
        %v3264 = vshrl.u32 %v3263, 7
        %v3265 = vsub.s32 2, %v3264
        %v3266 = vrot.slane %v2912, %v3265
        %v3267 = vlaneseq
        %v3268 = vshrl.u32 %v3267, 7
        %v3269 = vsub.s32 3, %v3268
        %v3270 = vrot.slane %v2912, %v3269
        %v3271 = vlaneseq
        %v3272 = vshrl.u32 %v3271, 7
        %v3273 = vsub.s32 4, %v3272
        %v3274 = vrot.slane %v2912, %v3273
        %v3275 = vlaneseq
        %v3276 = vshrl.u32 %v3275, 7
        %v3277 = vsub.s32 5, %v3276
        %v3278 = vrot.slane %v2912, %v3277
        %v3279 = vlaneseq
        %v3280 = vshrl.u32 %v3279, 7
        %v3281 = vsub.s32 6, %v3280
        %v3282 = vrot.slane %v2912, %v3281
        %v3283 = vlaneseq
        %v3284 = vshrl.u32 %v3283, 7
        %v3285 = vsub.s32 7, %v3284
        %v3286 = vrot.slane %v2912, %v3285
        %v3287 = vlaneseq
        %v3288 = vshrl.u32 %v3287, 7
        %v3289 = vsub.s32 0, %v3288
        %v3290 = vrot.slane %v2913, %v3289
        %v3291 = vlaneseq
        %v3292 = vshrl.u32 %v3291, 7
        %v3293 = vsub.s32 1, %v3292
        %v3294 = vrot.slane %v2913, %v3293
        %v3295 = vlaneseq
        %v3296 = vshrl.u32 %v3295, 7
        %v3297 = vsub.s32 2, %v3296
        %v3298 = vrot.slane %v2913, %v3297
        %v3299 = vlaneseq
        %v3300 = vshrl.u32 %v3299, 7
        %v3301 = vsub.s32 3, %v3300
        %v3302 = vrot.slane %v2913, %v3301
        %v3303 = vlaneseq
        %v3304 = vshrl.u32 %v3303, 7
        %v3305 = vsub.s32 4, %v3304
        %v3306 = vrot.slane %v2913, %v3305
        %v3307 = vlaneseq
        %v3308 = vshrl.u32 %v3307, 7
        %v3309 = vsub.s32 5, %v3308
        %v3310 = vrot.slane %v2913, %v3309
        %v3311 = vlaneseq
        %v3312 = vshrl.u32 %v3311, 7
        %v3313 = vsub.s32 6, %v3312
        %v3314 = vrot.slane %v2913, %v3313
        %v3315 = vlaneseq
        %v3316 = vshrl.u32 %v3315, 7
        %v3317 = vsub.s32 7, %v3316
        %v3318 = vrot.slane %v2913, %v3317
        %v3319 = vlaneseq
        %v3320 = vshrl.u32 %v3319, 7
        %v3321 = vsub.s32 0, %v3320
        %v3322 = vrot.slane %v2914, %v3321
        %v3323 = vlaneseq
        %v3324 = vshrl.u32 %v3323, 7
        %v3325 = vsub.s32 1, %v3324
        %v3326 = vrot.slane %v2914, %v3325
        %v3327 = vlaneseq
        %v3328 = vshrl.u32 %v3327, 7
        %v3329 = vsub.s32 2, %v3328
        %v3330 = vrot.slane %v2914, %v3329
        %v3331 = vlaneseq
        %v3332 = vshrl.u32 %v3331, 7
        %v3333 = vsub.s32 3, %v3332
        %v3334 = vrot.slane %v2914, %v3333
        %v3335 = vlaneseq
        %v3336 = vshrl.u32 %v3335, 7
        %v3337 = vsub.s32 4, %v3336
        %v3338 = vrot.slane %v2914, %v3337
        %v3339 = vlaneseq
        %v3340 = vshrl.u32 %v3339, 7
        %v3341 = vsub.s32 5, %v3340
        %v3342 = vrot.slane %v2914, %v3341
        %v3343 = vlaneseq
        %v3344 = vshrl.u32 %v3343, 7
        %v3345 = vsub.s32 6, %v3344
        %v3346 = vrot.slane %v2914, %v3345
        %v3347 = vlaneseq
        %v3348 = vshrl.u32 %v3347, 7
        %v3349 = vsub.s32 7, %v3348
        %v3350 = vrot.slane %v2914, %v3349
        %v3351 = vlaneseq
        %v3352 = vshrl.u32 %v3351, 7
        %v3353 = vsub.s32 0, %v3352
        %v3354 = vrot.slane %v2915, %v3353
        %v3355 = vlaneseq
        %v3356 = vshrl.u32 %v3355, 7
        %v3357 = vsub.s32 1, %v3356
        %v3358 = vrot.slane %v2915, %v3357
        %v3359 = vlaneseq
        %v3360 = vshrl.u32 %v3359, 7
        %v3361 = vsub.s32 2, %v3360
        %v3362 = vrot.slane %v2915, %v3361
        %v3363 = vlaneseq
        %v3364 = vshrl.u32 %v3363, 7
        %v3365 = vsub.s32 3, %v3364
        %v3366 = vrot.slane %v2915, %v3365
        %v3367 = vlaneseq
        %v3368 = vshrl.u32 %v3367, 7
        %v3369 = vsub.s32 4, %v3368
        %v3370 = vrot.slane %v2915, %v3369
        %v3371 = vlaneseq
        %v3372 = vshrl.u32 %v3371, 7
        %v3373 = vsub.s32 5, %v3372
        %v3374 = vrot.slane %v2915, %v3373
        %v3375 = vlaneseq
        %v3376 = vshrl.u32 %v3375, 7
        %v3377 = vsub.s32 6, %v3376
        %v3378 = vrot.slane %v2915, %v3377
        %v3379 = vlaneseq
        %v3380 = vshrl.u32 %v3379, 7
        %v3381 = vsub.s32 7, %v3380
        %v3382 = vrot.slane %v2915, %v3381
        %v3383 = vlaneseq
        %v3384 = vshrl.u32 %v3383, 7
        %v3385 = vsub.s32 0, %v3384
        %v3386 = vrot.slane %v2916, %v3385
        %v3387 = vlaneseq
        %v3388 = vshrl.u32 %v3387, 7
        %v3389 = vsub.s32 1, %v3388
        %v3390 = vrot.slane %v2916, %v3389
        %v3391 = vlaneseq
        %v3392 = vshrl.u32 %v3391, 7
        %v3393 = vsub.s32 2, %v3392
        %v3394 = vrot.slane %v2916, %v3393
        %v3395 = vlaneseq
        %v3396 = vshrl.u32 %v3395, 7
        %v3397 = vsub.s32 3, %v3396
        %v3398 = vrot.slane %v2916, %v3397
        %v3399 = vlaneseq
        %v3400 = vshrl.u32 %v3399, 7
        %v3401 = vsub.s32 4, %v3400
        %v3402 = vrot.slane %v2916, %v3401
        %v3403 = vlaneseq
        %v3404 = vshrl.u32 %v3403, 7
        %v3405 = vsub.s32 5, %v3404
        %v3406 = vrot.slane %v2916, %v3405
        %v3407 = vlaneseq
        %v3408 = vshrl.u32 %v3407, 7
        %v3409 = vsub.s32 6, %v3408
        %v3410 = vrot.slane %v2916, %v3409
        %v3411 = vlaneseq
        %v3412 = vshrl.u32 %v3411, 7
        %v3413 = vsub.s32 7, %v3412
        %v3414 = vrot.slane %v2916, %v3413
        %v3415 = vlaneseq
        %v3416 = vshrl.u32 %v3415, 7
        %v3417 = vsub.s32 0, %v3416
        %v3418 = vrot.slane %v2917, %v3417
        %v3419 = vlaneseq
        %v3420 = vshrl.u32 %v3419, 7
        %v3421 = vsub.s32 1, %v3420
        %v3422 = vrot.slane %v2917, %v3421
        %v3423 = vlaneseq
        %v3424 = vshrl.u32 %v3423, 7
        %v3425 = vsub.s32 2, %v3424
        %v3426 = vrot.slane %v2917, %v3425
        %v3427 = vlaneseq
        %v3428 = vshrl.u32 %v3427, 7
        %v3429 = vsub.s32 3, %v3428
        %v3430 = vrot.slane %v2917, %v3429
        %v3431 = vlaneseq
        %v3432 = vshrl.u32 %v3431, 7
        %v3433 = vsub.s32 4, %v3432
        %v3434 = vrot.slane %v2917, %v3433
        %v3435 = vlaneseq
        %v3436 = vshrl.u32 %v3435, 7
        %v3437 = vsub.s32 5, %v3436
        %v3438 = vrot.slane %v2917, %v3437
        %v3439 = vlaneseq
        %v3440 = vshrl.u32 %v3439, 7
        %v3441 = vsub.s32 6, %v3440
        %v3442 = vrot.slane %v2917, %v3441
        %v3443 = vlaneseq
        %v3444 = vshrl.u32 %v3443, 7
        %v3445 = vsub.s32 7, %v3444
        %v3446 = vrot.slane %v2917, %v3445
        %v3447 = vlaneseq
        %v3448 = vshrl.u32 %v3447, 7
        %v3449 = vsub.s32 0, %v3448
        %v3450 = vrot.slane %v2918, %v3449
        %v3451 = vlaneseq
        %v3452 = vshrl.u32 %v3451, 7
        %v3453 = vsub.s32 1, %v3452
        %v3454 = vrot.slane %v2918, %v3453
        %v3455 = vlaneseq
        %v3456 = vshrl.u32 %v3455, 7
        %v3457 = vsub.s32 2, %v3456
        %v3458 = vrot.slane %v2918, %v3457
        %v3459 = vlaneseq
        %v3460 = vshrl.u32 %v3459, 7
        %v3461 = vsub.s32 3, %v3460
        %v3462 = vrot.slane %v2918, %v3461
        %v3463 = vlaneseq
        %v3464 = vshrl.u32 %v3463, 7
        %v3465 = vsub.s32 4, %v3464
        %v3466 = vrot.slane %v2918, %v3465
        %v3467 = vlaneseq
        %v3468 = vshrl.u32 %v3467, 7
        %v3469 = vsub.s32 5, %v3468
        %v3470 = vrot.slane %v2918, %v3469
        %v3471 = vlaneseq
        %v3472 = vshrl.u32 %v3471, 7
        %v3473 = vsub.s32 6, %v3472
        %v3474 = vrot.slane %v2918, %v3473
        %v3475 = vlaneseq
        %v3476 = vshrl.u32 %v3475, 7
        %v3477 = vsub.s32 7, %v3476
        %v3478 = vrot.slane %v2918, %v3477
        %v3479 = vlaneseq
        %v3480 = vshrl.u32 %v3479, 7
        %v3481 = vsub.s32 0, %v3480
        %v3482 = vrot.slane %v2919, %v3481
        %v3483 = vlaneseq
        %v3484 = vshrl.u32 %v3483, 7
        %v3485 = vsub.s32 1, %v3484
        %v3486 = vrot.slane %v2919, %v3485
        %v3487 = vlaneseq
        %v3488 = vshrl.u32 %v3487, 7
        %v3489 = vsub.s32 2, %v3488
        %v3490 = vrot.slane %v2919, %v3489
        %v3491 = vlaneseq
        %v3492 = vshrl.u32 %v3491, 7
        %v3493 = vsub.s32 3, %v3492
        %v3494 = vrot.slane %v2919, %v3493
        %v3495 = vlaneseq
        %v3496 = vshrl.u32 %v3495, 7
        %v3497 = vsub.s32 4, %v3496
        %v3498 = vrot.slane %v2919, %v3497
        %v3499 = vlaneseq
        %v3500 = vshrl.u32 %v3499, 7
        %v3501 = vsub.s32 5, %v3500
        %v3502 = vrot.slane %v2919, %v3501
        %v3503 = vlaneseq
        %v3504 = vshrl.u32 %v3503, 7
        %v3505 = vsub.s32 6, %v3504
        %v3506 = vrot.slane %v2919, %v3505
        %v3507 = vlaneseq
        %v3508 = vshrl.u32 %v3507, 7
        %v3509 = vsub.s32 7, %v3508
        %v3510 = vrot.slane %v2919, %v3509
        %v3511 = vlaneseq
        %v3512 = vshrl.u32 %v3511, 7
        %v3513 = vsub.s32 0, %v3512
        %v3514 = vrot.slane %v2920, %v3513
        %v3515 = vlaneseq
        %v3516 = vshrl.u32 %v3515, 7
        %v3517 = vsub.s32 1, %v3516
        %v3518 = vrot.slane %v2920, %v3517
        %v3519 = vlaneseq
        %v3520 = vshrl.u32 %v3519, 7
        %v3521 = vsub.s32 2, %v3520
        %v3522 = vrot.slane %v2920, %v3521
        %v3523 = vlaneseq
        %v3524 = vshrl.u32 %v3523, 7
        %v3525 = vsub.s32 3, %v3524
        %v3526 = vrot.slane %v2920, %v3525
        %v3527 = vlaneseq
        %v3528 = vshrl.u32 %v3527, 7
        %v3529 = vsub.s32 4, %v3528
        %v3530 = vrot.slane %v2920, %v3529
        %v3531 = vlaneseq
        %v3532 = vshrl.u32 %v3531, 7
        %v3533 = vsub.s32 5, %v3532
        %v3534 = vrot.slane %v2920, %v3533
        %v3535 = vlaneseq
        %v3536 = vshrl.u32 %v3535, 7
        %v3537 = vsub.s32 6, %v3536
        %v3538 = vrot.slane %v2920, %v3537
        %v3539 = vlaneseq
        %v3540 = vshrl.u32 %v3539, 7
        %v3541 = vsub.s32 7, %v3540
        %v3542 = vrot.slane %v2920, %v3541
        %v3543 = vlaneseq
        %v3544 = vshrl.u32 %v3543, 7
        %v3545 = vsub.s32 0, %v3544
        %v3546 = vrot.slane %v2921, %v3545
        %v3547 = vlaneseq
        %v3548 = vshrl.u32 %v3547, 7
        %v3549 = vsub.s32 1, %v3548
        %v3550 = vrot.slane %v2921, %v3549
        %v3551 = vlaneseq
        %v3552 = vshrl.u32 %v3551, 7
        %v3553 = vsub.s32 2, %v3552
        %v3554 = vrot.slane %v2921, %v3553
        %v3555 = vlaneseq
        %v3556 = vshrl.u32 %v3555, 7
        %v3557 = vsub.s32 3, %v3556
        %v3558 = vrot.slane %v2921, %v3557
        %v3559 = vlaneseq
        %v3560 = vshrl.u32 %v3559, 7
        %v3561 = vsub.s32 4, %v3560
        %v3562 = vrot.slane %v2921, %v3561
        %v3563 = vlaneseq
        %v3564 = vshrl.u32 %v3563, 7
        %v3565 = vsub.s32 5, %v3564
        %v3566 = vrot.slane %v2921, %v3565
        %v3567 = vlaneseq
        %v3568 = vshrl.u32 %v3567, 7
        %v3569 = vsub.s32 6, %v3568
        %v3570 = vrot.slane %v2921, %v3569
        %v3571 = vlaneseq
        %v3572 = vshrl.u32 %v3571, 7
        %v3573 = vsub.s32 7, %v3572
        %v3574 = vrot.slane %v2921, %v3573
        %v3575 = vlaneseq
        %v3576 = vshrl.u32 %v3575, 7
        %v3577 = vsub.s32 0, %v3576
        %v3578 = vrot.slane %v2922, %v3577
        %v3579 = vlaneseq
        %v3580 = vshrl.u32 %v3579, 7
        %v3581 = vsub.s32 1, %v3580
        %v3582 = vrot.slane %v2922, %v3581
        %v3583 = vlaneseq
        %v3584 = vshrl.u32 %v3583, 7
        %v3585 = vsub.s32 2, %v3584
        %v3586 = vrot.slane %v2922, %v3585
        %v3587 = vlaneseq
        %v3588 = vshrl.u32 %v3587, 7
        %v3589 = vsub.s32 3, %v3588
        %v3590 = vrot.slane %v2922, %v3589
        %v3591 = vlaneseq
        %v3592 = vshrl.u32 %v3591, 7
        %v3593 = vsub.s32 4, %v3592
        %v3594 = vrot.slane %v2922, %v3593
        %v3595 = vlaneseq
        %v3596 = vshrl.u32 %v3595, 7
        %v3597 = vsub.s32 5, %v3596
        %v3598 = vrot.slane %v2922, %v3597
        %v3599 = vlaneseq
        %v3600 = vshrl.u32 %v3599, 7
        %v3601 = vsub.s32 6, %v3600
        %v3602 = vrot.slane %v2922, %v3601
        %v3603 = vlaneseq
        %v3604 = vshrl.u32 %v3603, 7
        %v3605 = vsub.s32 7, %v3604
        %v3606 = vrot.slane %v2922, %v3605
        %v3607 = vlaneseq
        %v3608 = vshrl.u32 %v3607, 7
        %v3609 = vsub.s32 0, %v3608
        %v3610 = vrot.slane %v2923, %v3609
        %v3611 = vlaneseq
        %v3612 = vshrl.u32 %v3611, 7
        %v3613 = vsub.s32 1, %v3612
        %v3614 = vrot.slane %v2923, %v3613
        %v3615 = vlaneseq
        %v3616 = vshrl.u32 %v3615, 7
        %v3617 = vsub.s32 2, %v3616
        %v3618 = vrot.slane %v2923, %v3617
        %v3619 = vlaneseq
        %v3620 = vshrl.u32 %v3619, 7
        %v3621 = vsub.s32 3, %v3620
        %v3622 = vrot.slane %v2923, %v3621
        %v3623 = vlaneseq
        %v3624 = vshrl.u32 %v3623, 7
        %v3625 = vsub.s32 4, %v3624
        %v3626 = vrot.slane %v2923, %v3625
        %v3627 = vlaneseq
        %v3628 = vshrl.u32 %v3627, 7
        %v3629 = vsub.s32 5, %v3628
        %v3630 = vrot.slane %v2923, %v3629
        %v3631 = vlaneseq
        %v3632 = vshrl.u32 %v3631, 7
        %v3633 = vsub.s32 6, %v3632
        %v3634 = vrot.slane %v2923, %v3633
        %v3635 = vlaneseq
        %v3636 = vshrl.u32 %v3635, 7
        %v3637 = vsub.s32 7, %v3636
        %v3638 = vrot.slane %v2923, %v3637
        %v3639 = vlaneseq
        %v3640 = vshrl.u32 %v3639, 7
        %v3641 = vsub.s32 0, %v3640
        %v3642 = vrot.slane %v2924, %v3641
        %v3643 = vlaneseq
        %v3644 = vshrl.u32 %v3643, 7
        %v3645 = vsub.s32 1, %v3644
        %v3646 = vrot.slane %v2924, %v3645
        %v3647 = vlaneseq
        %v3648 = vshrl.u32 %v3647, 7
        %v3649 = vsub.s32 2, %v3648
        %v3650 = vrot.slane %v2924, %v3649
        %v3651 = vlaneseq
        %v3652 = vshrl.u32 %v3651, 7
        %v3653 = vsub.s32 3, %v3652
        %v3654 = vrot.slane %v2924, %v3653
        %v3655 = vlaneseq
        %v3656 = vshrl.u32 %v3655, 7
        %v3657 = vsub.s32 4, %v3656
        %v3658 = vrot.slane %v2924, %v3657
        %v3659 = vlaneseq
        %v3660 = vshrl.u32 %v3659, 7
        %v3661 = vsub.s32 5, %v3660
        %v3662 = vrot.slane %v2924, %v3661
        %v3663 = vlaneseq
        %v3664 = vshrl.u32 %v3663, 7
        %v3665 = vsub.s32 6, %v3664
        %v3666 = vrot.slane %v2924, %v3665
        %v3667 = vlaneseq
        %v3668 = vshrl.u32 %v3667, 7
        %v3669 = vsub.s32 7, %v3668
        %v3670 = vrot.slane %v2924, %v3669
        %v3671 = vlaneseq
        %v3672 = vshrl.u32 %v3671, 7
        %v3673 = vsub.s32 0, %v3672
        %v3674 = vrot.slane %v2925, %v3673
        %v3675 = vlaneseq
        %v3676 = vshrl.u32 %v3675, 7
        %v3677 = vsub.s32 1, %v3676
        %v3678 = vrot.slane %v2925, %v3677
        %v3679 = vlaneseq
        %v3680 = vshrl.u32 %v3679, 7
        %v3681 = vsub.s32 2, %v3680
        %v3682 = vrot.slane %v2925, %v3681
        %v3683 = vlaneseq
        %v3684 = vshrl.u32 %v3683, 7
        %v3685 = vsub.s32 3, %v3684
        %v3686 = vrot.slane %v2925, %v3685
        %v3687 = vlaneseq
        %v3688 = vshrl.u32 %v3687, 7
        %v3689 = vsub.s32 4, %v3688
        %v3690 = vrot.slane %v2925, %v3689
        %v3691 = vlaneseq
        %v3692 = vshrl.u32 %v3691, 7
        %v3693 = vsub.s32 5, %v3692
        %v3694 = vrot.slane %v2925, %v3693
        %v3695 = vlaneseq
        %v3696 = vshrl.u32 %v3695, 7
        %v3697 = vsub.s32 6, %v3696
        %v3698 = vrot.slane %v2925, %v3697
        %v3699 = vlaneseq
        %v3700 = vshrl.u32 %v3699, 7
        %v3701 = vsub.s32 7, %v3700
        %v3702 = vrot.slane %v2925, %v3701
        %v3703 = vlaneseq
        %v3704 = vshrl.u32 %v3703, 7
        %v3705 = vsub.s32 0, %v3704
        %v3706 = vrot.slane %v2926, %v3705
        %v3707 = vlaneseq
        %v3708 = vshrl.u32 %v3707, 7
        %v3709 = vsub.s32 1, %v3708
        %v3710 = vrot.slane %v2926, %v3709
        %v3711 = vlaneseq
        %v3712 = vshrl.u32 %v3711, 7
        %v3713 = vsub.s32 2, %v3712
        %v3714 = vrot.slane %v2926, %v3713
        %v3715 = vlaneseq
        %v3716 = vshrl.u32 %v3715, 7
        %v3717 = vsub.s32 3, %v3716
        %v3718 = vrot.slane %v2926, %v3717
        %v3719 = vlaneseq
        %v3720 = vshrl.u32 %v3719, 7
        %v3721 = vsub.s32 4, %v3720
        %v3722 = vrot.slane %v2926, %v3721
        %v3723 = vlaneseq
        %v3724 = vshrl.u32 %v3723, 7
        %v3725 = vsub.s32 5, %v3724
        %v3726 = vrot.slane %v2926, %v3725
        %v3727 = vlaneseq
        %v3728 = vshrl.u32 %v3727, 7
        %v3729 = vsub.s32 6, %v3728
        %v3730 = vrot.slane %v2926, %v3729
        %v3731 = vlaneseq
        %v3732 = vshrl.u32 %v3731, 7
        %v3733 = vsub.s32 7, %v3732
        %v3734 = vrot.slane %v2926, %v3733
        %v3735 = vlaneseq
        %v3736 = vshrl.u32 %v3735, 7
        %v3737 = vsub.s32 0, %v3736
        %v3738 = vrot.slane %v2927, %v3737
        %v3739 = vlaneseq
        %v3740 = vshrl.u32 %v3739, 7
        %v3741 = vsub.s32 1, %v3740
        %v3742 = vrot.slane %v2927, %v3741
        %v3743 = vlaneseq
        %v3744 = vshrl.u32 %v3743, 7
        %v3745 = vsub.s32 2, %v3744
        %v3746 = vrot.slane %v2927, %v3745
        %v3747 = vlaneseq
        %v3748 = vshrl.u32 %v3747, 7
        %v3749 = vsub.s32 3, %v3748
        %v3750 = vrot.slane %v2927, %v3749
        %v3751 = vlaneseq
        %v3752 = vshrl.u32 %v3751, 7
        %v3753 = vsub.s32 4, %v3752
        %v3754 = vrot.slane %v2927, %v3753
        %v3755 = vlaneseq
        %v3756 = vshrl.u32 %v3755, 7
        %v3757 = vsub.s32 5, %v3756
        %v3758 = vrot.slane %v2927, %v3757
        %v3759 = vlaneseq
        %v3760 = vshrl.u32 %v3759, 7
        %v3761 = vsub.s32 6, %v3760
        %v3762 = vrot.slane %v2927, %v3761
        %v3763 = vlaneseq
        %v3764 = vshrl.u32 %v3763, 7
        %v3765 = vsub.s32 7, %v3764
        %v3766 = vrot.slane %v2927, %v3765
        %v3767 = vlaneseq
        %v3768 = vshrl.u32 %v3767, 7
        %v3769 = vsub.s32 0, %v3768
        %v3770 = vrot.slane %v2928, %v3769
        %v3771 = vlaneseq
        %v3772 = vshrl.u32 %v3771, 7
        %v3773 = vsub.s32 1, %v3772
        %v3774 = vrot.slane %v2928, %v3773
        %v3775 = vlaneseq
        %v3776 = vshrl.u32 %v3775, 7
        %v3777 = vsub.s32 2, %v3776
        %v3778 = vrot.slane %v2928, %v3777
        %v3779 = vlaneseq
        %v3780 = vshrl.u32 %v3779, 7
        %v3781 = vsub.s32 3, %v3780
        %v3782 = vrot.slane %v2928, %v3781
        %v3783 = vlaneseq
        %v3784 = vshrl.u32 %v3783, 7
        %v3785 = vsub.s32 4, %v3784
        %v3786 = vrot.slane %v2928, %v3785
        %v3787 = vlaneseq
        %v3788 = vshrl.u32 %v3787, 7
        %v3789 = vsub.s32 5, %v3788
        %v3790 = vrot.slane %v2928, %v3789
        %v3791 = vlaneseq
        %v3792 = vshrl.u32 %v3791, 7
        %v3793 = vsub.s32 6, %v3792
        %v3794 = vrot.slane %v2928, %v3793
        %v3795 = vlaneseq
        %v3796 = vshrl.u32 %v3795, 7
        %v3797 = vsub.s32 7, %v3796
        %v3798 = vrot.slane %v2928, %v3797
        %v3799 = vlaneseq
        %v3800 = vshrl.u32 %v3799, 7
        %v3801 = vsub.s32 0, %v3800
        %v3802 = vrot.slane %v2929, %v3801
        %v3803 = vlaneseq
        %v3804 = vshrl.u32 %v3803, 7
        %v3805 = vsub.s32 1, %v3804
        %v3806 = vrot.slane %v2929, %v3805
        %v3807 = vlaneseq
        %v3808 = vshrl.u32 %v3807, 7
        %v3809 = vsub.s32 2, %v3808
        %v3810 = vrot.slane %v2929, %v3809
        %v3811 = vlaneseq
        %v3812 = vshrl.u32 %v3811, 7
        %v3813 = vsub.s32 3, %v3812
        %v3814 = vrot.slane %v2929, %v3813
        %v3815 = vlaneseq
        %v3816 = vshrl.u32 %v3815, 7
        %v3817 = vsub.s32 4, %v3816
        %v3818 = vrot.slane %v2929, %v3817
        %v3819 = vlaneseq
        %v3820 = vshrl.u32 %v3819, 7
        %v3821 = vsub.s32 5, %v3820
        %v3822 = vrot.slane %v2929, %v3821
        %v3823 = vlaneseq
        %v3824 = vshrl.u32 %v3823, 7
        %v3825 = vsub.s32 6, %v3824
        %v3826 = vrot.slane %v2929, %v3825
        %v3827 = vlaneseq
        %v3828 = vshrl.u32 %v3827, 7
        %v3829 = vsub.s32 7, %v3828
        %v3830 = vrot.slane %v2929, %v3829
        %v3831 = vlaneseq
        %v3832 = vshrl.u32 %v3831, 7
        %v3833 = vsub.s32 0, %v3832
        %v3834 = vrot.slane %v2930, %v3833
        %v3835 = vlaneseq
        %v3836 = vshrl.u32 %v3835, 7
        %v3837 = vsub.s32 1, %v3836
        %v3838 = vrot.slane %v2930, %v3837
        %v3839 = vlaneseq
        %v3840 = vshrl.u32 %v3839, 7
        %v3841 = vsub.s32 2, %v3840
        %v3842 = vrot.slane %v2930, %v3841
        %v3843 = vlaneseq
        %v3844 = vshrl.u32 %v3843, 7
        %v3845 = vsub.s32 3, %v3844
        %v3846 = vrot.slane %v2930, %v3845
        %v3847 = vlaneseq
        %v3848 = vshrl.u32 %v3847, 7
        %v3849 = vsub.s32 4, %v3848
        %v3850 = vrot.slane %v2930, %v3849
        %v3851 = vlaneseq
        %v3852 = vshrl.u32 %v3851, 7
        %v3853 = vsub.s32 5, %v3852
        %v3854 = vrot.slane %v2930, %v3853
        %v3855 = vlaneseq
        %v3856 = vshrl.u32 %v3855, 7
        %v3857 = vsub.s32 6, %v3856
        %v3858 = vrot.slane %v2930, %v3857
        %v3859 = vlaneseq
        %v3860 = vshrl.u32 %v3859, 7
        %v3861 = vsub.s32 7, %v3860
        %v3862 = vrot.slane %v2930, %v3861
        %v3863 = vlaneseq
        %v3864 = vshrl.u32 %v3863, 7
        %v3865 = vsub.s32 0, %v3864
        %v3866 = vrot.slane %v2931, %v3865
        %v3867 = vlaneseq
        %v3868 = vshrl.u32 %v3867, 7
        %v3869 = vsub.s32 1, %v3868
        %v3870 = vrot.slane %v2931, %v3869
        %v3871 = vlaneseq
        %v3872 = vshrl.u32 %v3871, 7
        %v3873 = vsub.s32 2, %v3872
        %v3874 = vrot.slane %v2931, %v3873
        %v3875 = vlaneseq
        %v3876 = vshrl.u32 %v3875, 7
        %v3877 = vsub.s32 3, %v3876
        %v3878 = vrot.slane %v2931, %v3877
        %v3879 = vlaneseq
        %v3880 = vshrl.u32 %v3879, 7
        %v3881 = vsub.s32 4, %v3880
        %v3882 = vrot.slane %v2931, %v3881
        %v3883 = vlaneseq
        %v3884 = vshrl.u32 %v3883, 7
        %v3885 = vsub.s32 5, %v3884
        %v3886 = vrot.slane %v2931, %v3885
        %v3887 = vlaneseq
        %v3888 = vshrl.u32 %v3887, 7
        %v3889 = vsub.s32 6, %v3888
        %v3890 = vrot.slane %v2931, %v3889
        %v3891 = vlaneseq
        %v3892 = vshrl.u32 %v3891, 7
        %v3893 = vsub.s32 7, %v3892
        %v3894 = vrot.slane %v2931, %v3893
        %v3895 = vlaneseq
        %v3896 = vshrl.u32 %v3895, 7
        %v3897 = vsub.s32 0, %v3896
        %v3898 = vrot.slane %v2932, %v3897
        %v3899 = vlaneseq
        %v3900 = vshrl.u32 %v3899, 7
        %v3901 = vsub.s32 1, %v3900
        %v3902 = vrot.slane %v2932, %v3901
        %v3903 = vlaneseq
        %v3904 = vshrl.u32 %v3903, 7
        %v3905 = vsub.s32 2, %v3904
        %v3906 = vrot.slane %v2932, %v3905
        %v3907 = vlaneseq
        %v3908 = vshrl.u32 %v3907, 7
        %v3909 = vsub.s32 3, %v3908
        %v3910 = vrot.slane %v2932, %v3909
        %v3911 = vlaneseq
        %v3912 = vshrl.u32 %v3911, 7
        %v3913 = vsub.s32 4, %v3912
        %v3914 = vrot.slane %v2932, %v3913
        %v3915 = vlaneseq
        %v3916 = vshrl.u32 %v3915, 7
        %v3917 = vsub.s32 5, %v3916
        %v3918 = vrot.slane %v2932, %v3917
        %v3919 = vlaneseq
        %v3920 = vshrl.u32 %v3919, 7
        %v3921 = vsub.s32 6, %v3920
        %v3922 = vrot.slane %v2932, %v3921
        %v3923 = vlaneseq
        %v3924 = vshrl.u32 %v3923, 7
        %v3925 = vsub.s32 7, %v3924
        %v3926 = vrot.slane %v2932, %v3925
        %v3927 = vlaneseq
        %v3928 = vshrl.u32 %v3927, 7
        %v3929 = vsub.s32 0, %v3928
        %v3930 = vrot.slane %v2933, %v3929
        %v3931 = vlaneseq
        %v3932 = vshrl.u32 %v3931, 7
        %v3933 = vsub.s32 1, %v3932
        %v3934 = vrot.slane %v2933, %v3933
        %v3935 = vlaneseq
        %v3936 = vshrl.u32 %v3935, 7
        %v3937 = vsub.s32 2, %v3936
        %v3938 = vrot.slane %v2933, %v3937
        %v3939 = vlaneseq
        %v3940 = vshrl.u32 %v3939, 7
        %v3941 = vsub.s32 3, %v3940
        %v3942 = vrot.slane %v2933, %v3941
        %v3943 = vlaneseq
        %v3944 = vshrl.u32 %v3943, 7
        %v3945 = vsub.s32 4, %v3944
        %v3946 = vrot.slane %v2933, %v3945
        %v3947 = vlaneseq
        %v3948 = vshrl.u32 %v3947, 7
        %v3949 = vsub.s32 5, %v3948
        %v3950 = vrot.slane %v2933, %v3949
        %v3951 = vlaneseq
        %v3952 = vshrl.u32 %v3951, 7
        %v3953 = vsub.s32 6, %v3952
        %v3954 = vrot.slane %v2933, %v3953
        %v3955 = vlaneseq
        %v3956 = vshrl.u32 %v3955, 7
        %v3957 = vsub.s32 7, %v3956
        %v3958 = vrot.slane %v2933, %v3957
        %v3959 = vlaneseq
        %v3960 = vshrl.u32 %v3959, 7
        %v3961 = vsub.s32 0, %v3960
        %v3962 = vrot.slane %v2934, %v3961
        %v3963 = vlaneseq
        %v3964 = vshrl.u32 %v3963, 7
        %v3965 = vsub.s32 1, %v3964
        %v3966 = vrot.slane %v2934, %v3965
        %v3967 = vlaneseq
        %v3968 = vshrl.u32 %v3967, 7
        %v3969 = vsub.s32 2, %v3968
        %v3970 = vrot.slane %v2934, %v3969
        %v3971 = vlaneseq
        %v3972 = vshrl.u32 %v3971, 7
        %v3973 = vsub.s32 3, %v3972
        %v3974 = vrot.slane %v2934, %v3973
        %v3975 = vlaneseq
        %v3976 = vshrl.u32 %v3975, 7
        %v3977 = vsub.s32 4, %v3976
        %v3978 = vrot.slane %v2934, %v3977
        %v3979 = vlaneseq
        %v3980 = vshrl.u32 %v3979, 7
        %v3981 = vsub.s32 5, %v3980
        %v3982 = vrot.slane %v2934, %v3981
        %v3983 = vlaneseq
        %v3984 = vshrl.u32 %v3983, 7
        %v3985 = vsub.s32 6, %v3984
        %v3986 = vrot.slane %v2934, %v3985
        %v3987 = vlaneseq
        %v3988 = vshrl.u32 %v3987, 7
        %v3989 = vsub.s32 7, %v3988
        %v3990 = vrot.slane %v2934, %v3989
        %v3991 = vcombine.low %v2970, %v2974
        %v3992 = vcombine.low %v2978, %v2982
        %v3993 = vcombine.low %v2986, %v2990
        %v3994 = vcombine.low %v2994, %v2998
        %v3996 = vunpack.c.l.s4 1966171168
        %v3997 = vunpack.c.0.s8 %v3996
        %v3998 = vlaneseq
        %v3999 = vshrl.u32 %v3998, 7
        %v4000 = vsub.s32 %v3997, %v3999
        %v4001 = vrot.slane %v3991, %v4000
        %v4003 = vunpack.c.l.s4 1966171168
        %v4004 = vunpack.c.0.s8 %v4003
        %v4005 = vlaneseq
        %v4006 = vshrl.u32 %v4005, 7
        %v4007 = vsub.s32 %v4004, %v4006
        %v4008 = vrot.slane %v3992, %v4007
        %v4010 = vunpack.c.l.s4 1966171168
        %v4011 = vunpack.c.0.s8 %v4010
        %v4012 = vlaneseq
        %v4013 = vshrl.u32 %v4012, 7
        %v4014 = vsub.s32 %v4011, %v4013
        %v4015 = vrot.slane %v3993, %v4014
        %v4017 = vunpack.c.l.s4 1966171168
        %v4018 = vunpack.c.0.s8 %v4017
        %v4019 = vlaneseq
        %v4020 = vshrl.u32 %v4019, 7
        %v4021 = vsub.s32 %v4018, %v4020
        %v4022 = vrot.slane %v3994, %v4021
        %v4023 = vcombine.low %v4001, %v4008
        %v4024 = vcombine.low %v4015, %v4022
        %v4026 = vunpack.c.l.s4 1966171168
        %v4027 = vunpack.c.0.s8 %v4026
        %v4028 = vlaneseq
        %v4029 = vshrl.u32 %v4028, 7
        %v4030 = vsub.s32 %v4027, %v4029
        %v4031 = vrot.slane %v4023, %v4030
        %v4033 = vunpack.c.l.s4 1966171168
        %v4034 = vunpack.c.0.s8 %v4033
        %v4035 = vlaneseq
        %v4036 = vshrl.u32 %v4035, 7
        %v4037 = vsub.s32 %v4034, %v4036
        %v4038 = vrot.slane %v4024, %v4037
        %v4039 = vcombine.low %v4031, %v4038
        %v4040 = vcombine.low %v3002, %v3006
        %v4041 = vcombine.low %v3010, %v3014
        %v4042 = vcombine.low %v3018, %v3022
        %v4043 = vcombine.low %v3026, %v3030
        %v4045 = vunpack.c.l.s4 1966171168
        %v4046 = vunpack.c.0.s8 %v4045
        %v4047 = vlaneseq
        %v4048 = vshrl.u32 %v4047, 7
        %v4049 = vsub.s32 %v4046, %v4048
        %v4050 = vrot.slane %v4040, %v4049
        %v4052 = vunpack.c.l.s4 1966171168
        %v4053 = vunpack.c.0.s8 %v4052
        %v4054 = vlaneseq
        %v4055 = vshrl.u32 %v4054, 7
        %v4056 = vsub.s32 %v4053, %v4055
        %v4057 = vrot.slane %v4041, %v4056
        %v4059 = vunpack.c.l.s4 1966171168
        %v4060 = vunpack.c.0.s8 %v4059
        %v4061 = vlaneseq
        %v4062 = vshrl.u32 %v4061, 7
        %v4063 = vsub.s32 %v4060, %v4062
        %v4064 = vrot.slane %v4042, %v4063
        %v4066 = vunpack.c.l.s4 1966171168
        %v4067 = vunpack.c.0.s8 %v4066
        %v4068 = vlaneseq
        %v4069 = vshrl.u32 %v4068, 7
        %v4070 = vsub.s32 %v4067, %v4069
        %v4071 = vrot.slane %v4043, %v4070
        %v4072 = vcombine.low %v4050, %v4057
        %v4073 = vcombine.low %v4064, %v4071
        %v4075 = vunpack.c.l.s4 1966171168
        %v4076 = vunpack.c.0.s8 %v4075
        %v4077 = vlaneseq
        %v4078 = vshrl.u32 %v4077, 7
        %v4079 = vsub.s32 %v4076, %v4078
        %v4080 = vrot.slane %v4072, %v4079
        %v4082 = vunpack.c.l.s4 1966171168
        %v4083 = vunpack.c.0.s8 %v4082
        %v4084 = vlaneseq
        %v4085 = vshrl.u32 %v4084, 7
        %v4086 = vsub.s32 %v4083, %v4085
        %v4087 = vrot.slane %v4073, %v4086
        %v4088 = vcombine.low %v4080, %v4087
        %v4089 = vcombine.low %v3034, %v3038
        %v4090 = vcombine.low %v3042, %v3046
        %v4091 = vcombine.low %v3050, %v3054
        %v4092 = vcombine.low %v3058, %v3062
        %v4094 = vunpack.c.l.s4 1966171168
        %v4095 = vunpack.c.0.s8 %v4094
        %v4096 = vlaneseq
        %v4097 = vshrl.u32 %v4096, 7
        %v4098 = vsub.s32 %v4095, %v4097
        %v4099 = vrot.slane %v4089, %v4098
        %v4101 = vunpack.c.l.s4 1966171168
        %v4102 = vunpack.c.0.s8 %v4101
        %v4103 = vlaneseq
        %v4104 = vshrl.u32 %v4103, 7
        %v4105 = vsub.s32 %v4102, %v4104
        %v4106 = vrot.slane %v4090, %v4105
        %v4108 = vunpack.c.l.s4 1966171168
        %v4109 = vunpack.c.0.s8 %v4108
        %v4110 = vlaneseq
        %v4111 = vshrl.u32 %v4110, 7
        %v4112 = vsub.s32 %v4109, %v4111
        %v4113 = vrot.slane %v4091, %v4112
        %v4115 = vunpack.c.l.s4 1966171168
        %v4116 = vunpack.c.0.s8 %v4115
        %v4117 = vlaneseq
        %v4118 = vshrl.u32 %v4117, 7
        %v4119 = vsub.s32 %v4116, %v4118
        %v4120 = vrot.slane %v4092, %v4119
        %v4121 = vcombine.low %v4099, %v4106
        %v4122 = vcombine.low %v4113, %v4120
        %v4124 = vunpack.c.l.s4 1966171168
        %v4125 = vunpack.c.0.s8 %v4124
        %v4126 = vlaneseq
        %v4127 = vshrl.u32 %v4126, 7
        %v4128 = vsub.s32 %v4125, %v4127
        %v4129 = vrot.slane %v4121, %v4128
        %v4131 = vunpack.c.l.s4 1966171168
        %v4132 = vunpack.c.0.s8 %v4131
        %v4133 = vlaneseq
        %v4134 = vshrl.u32 %v4133, 7
        %v4135 = vsub.s32 %v4132, %v4134
        %v4136 = vrot.slane %v4122, %v4135
        %v4137 = vcombine.low %v4129, %v4136
        %v4138 = vcombine.low %v3066, %v3070
        %v4139 = vcombine.low %v3074, %v3078
        %v4140 = vcombine.low %v3082, %v3086
        %v4141 = vcombine.low %v3090, %v3094
        %v4143 = vunpack.c.l.s4 1966171168
        %v4144 = vunpack.c.0.s8 %v4143
        %v4145 = vlaneseq
        %v4146 = vshrl.u32 %v4145, 7
        %v4147 = vsub.s32 %v4144, %v4146
        %v4148 = vrot.slane %v4138, %v4147
        %v4150 = vunpack.c.l.s4 1966171168
        %v4151 = vunpack.c.0.s8 %v4150
        %v4152 = vlaneseq
        %v4153 = vshrl.u32 %v4152, 7
        %v4154 = vsub.s32 %v4151, %v4153
        %v4155 = vrot.slane %v4139, %v4154
        %v4157 = vunpack.c.l.s4 1966171168
        %v4158 = vunpack.c.0.s8 %v4157
        %v4159 = vlaneseq
        %v4160 = vshrl.u32 %v4159, 7
        %v4161 = vsub.s32 %v4158, %v4160
        %v4162 = vrot.slane %v4140, %v4161
        %v4164 = vunpack.c.l.s4 1966171168
        %v4165 = vunpack.c.0.s8 %v4164
        %v4166 = vlaneseq
        %v4167 = vshrl.u32 %v4166, 7
        %v4168 = vsub.s32 %v4165, %v4167
        %v4169 = vrot.slane %v4141, %v4168
        %v4170 = vcombine.low %v4148, %v4155
        %v4171 = vcombine.low %v4162, %v4169
        %v4173 = vunpack.c.l.s4 1966171168
        %v4174 = vunpack.c.0.s8 %v4173
        %v4175 = vlaneseq
        %v4176 = vshrl.u32 %v4175, 7
        %v4177 = vsub.s32 %v4174, %v4176
        %v4178 = vrot.slane %v4170, %v4177
        %v4180 = vunpack.c.l.s4 1966171168
        %v4181 = vunpack.c.0.s8 %v4180
        %v4182 = vlaneseq
        %v4183 = vshrl.u32 %v4182, 7
        %v4184 = vsub.s32 %v4181, %v4183
        %v4185 = vrot.slane %v4171, %v4184
        %v4186 = vcombine.low %v4178, %v4185
        %v4187 = vcombine.low %v3098, %v3102
        %v4188 = vcombine.low %v3106, %v3110
        %v4189 = vcombine.low %v3114, %v3118
        %v4190 = vcombine.low %v3122, %v3126
        %v4192 = vunpack.c.l.s4 1966171168
        %v4193 = vunpack.c.0.s8 %v4192
        %v4194 = vlaneseq
        %v4195 = vshrl.u32 %v4194, 7
        %v4196 = vsub.s32 %v4193, %v4195
        %v4197 = vrot.slane %v4187, %v4196
        %v4199 = vunpack.c.l.s4 1966171168
        %v4200 = vunpack.c.0.s8 %v4199
        %v4201 = vlaneseq
        %v4202 = vshrl.u32 %v4201, 7
        %v4203 = vsub.s32 %v4200, %v4202
        %v4204 = vrot.slane %v4188, %v4203
        %v4206 = vunpack.c.l.s4 1966171168
        %v4207 = vunpack.c.0.s8 %v4206
        %v4208 = vlaneseq
        %v4209 = vshrl.u32 %v4208, 7
        %v4210 = vsub.s32 %v4207, %v4209
        %v4211 = vrot.slane %v4189, %v4210
        %v4213 = vunpack.c.l.s4 1966171168
        %v4214 = vunpack.c.0.s8 %v4213
        %v4215 = vlaneseq
        %v4216 = vshrl.u32 %v4215, 7
        %v4217 = vsub.s32 %v4214, %v4216
        %v4218 = vrot.slane %v4190, %v4217
        %v4219 = vcombine.low %v4197, %v4204
        %v4220 = vcombine.low %v4211, %v4218
        %v4222 = vunpack.c.l.s4 1966171168
        %v4223 = vunpack.c.0.s8 %v4222
        %v4224 = vlaneseq
        %v4225 = vshrl.u32 %v4224, 7
        %v4226 = vsub.s32 %v4223, %v4225
        %v4227 = vrot.slane %v4219, %v4226
        %v4229 = vunpack.c.l.s4 1966171168
        %v4230 = vunpack.c.0.s8 %v4229
        %v4231 = vlaneseq
        %v4232 = vshrl.u32 %v4231, 7
        %v4233 = vsub.s32 %v4230, %v4232
        %v4234 = vrot.slane %v4220, %v4233
        %v4235 = vcombine.low %v4227, %v4234
        %v4236 = vcombine.low %v3130, %v3134
        %v4237 = vcombine.low %v3138, %v3142
        %v4238 = vcombine.low %v3146, %v3150
        %v4239 = vcombine.low %v3154, %v3158
        %v4241 = vunpack.c.l.s4 1966171168
        %v4242 = vunpack.c.0.s8 %v4241
        %v4243 = vlaneseq
        %v4244 = vshrl.u32 %v4243, 7
        %v4245 = vsub.s32 %v4242, %v4244
        %v4246 = vrot.slane %v4236, %v4245
        %v4248 = vunpack.c.l.s4 1966171168
        %v4249 = vunpack.c.0.s8 %v4248
        %v4250 = vlaneseq
        %v4251 = vshrl.u32 %v4250, 7
        %v4252 = vsub.s32 %v4249, %v4251
        %v4253 = vrot.slane %v4237, %v4252
        %v4255 = vunpack.c.l.s4 1966171168
        %v4256 = vunpack.c.0.s8 %v4255
        %v4257 = vlaneseq
        %v4258 = vshrl.u32 %v4257, 7
        %v4259 = vsub.s32 %v4256, %v4258
        %v4260 = vrot.slane %v4238, %v4259
        %v4262 = vunpack.c.l.s4 1966171168
        %v4263 = vunpack.c.0.s8 %v4262
        %v4264 = vlaneseq
        %v4265 = vshrl.u32 %v4264, 7
        %v4266 = vsub.s32 %v4263, %v4265
        %v4267 = vrot.slane %v4239, %v4266
        %v4268 = vcombine.low %v4246, %v4253
        %v4269 = vcombine.low %v4260, %v4267
        %v4271 = vunpack.c.l.s4 1966171168
        %v4272 = vunpack.c.0.s8 %v4271
        %v4273 = vlaneseq
        %v4274 = vshrl.u32 %v4273, 7
        %v4275 = vsub.s32 %v4272, %v4274
        %v4276 = vrot.slane %v4268, %v4275
        %v4278 = vunpack.c.l.s4 1966171168
        %v4279 = vunpack.c.0.s8 %v4278
        %v4280 = vlaneseq
        %v4281 = vshrl.u32 %v4280, 7
        %v4282 = vsub.s32 %v4279, %v4281
        %v4283 = vrot.slane %v4269, %v4282
        %v4284 = vcombine.low %v4276, %v4283
        %v4285 = vcombine.low %v3162, %v3166
        %v4286 = vcombine.low %v3170, %v3174
        %v4287 = vcombine.low %v3178, %v3182
        %v4288 = vcombine.low %v3186, %v3190
        %v4290 = vunpack.c.l.s4 1966171168
        %v4291 = vunpack.c.0.s8 %v4290
        %v4292 = vlaneseq
        %v4293 = vshrl.u32 %v4292, 7
        %v4294 = vsub.s32 %v4291, %v4293
        %v4295 = vrot.slane %v4285, %v4294
        %v4297 = vunpack.c.l.s4 1966171168
        %v4298 = vunpack.c.0.s8 %v4297
        %v4299 = vlaneseq
        %v4300 = vshrl.u32 %v4299, 7
        %v4301 = vsub.s32 %v4298, %v4300
        %v4302 = vrot.slane %v4286, %v4301
        %v4304 = vunpack.c.l.s4 1966171168
        %v4305 = vunpack.c.0.s8 %v4304
        %v4306 = vlaneseq
        %v4307 = vshrl.u32 %v4306, 7
        %v4308 = vsub.s32 %v4305, %v4307
        %v4309 = vrot.slane %v4287, %v4308
        %v4311 = vunpack.c.l.s4 1966171168
        %v4312 = vunpack.c.0.s8 %v4311
        %v4313 = vlaneseq
        %v4314 = vshrl.u32 %v4313, 7
        %v4315 = vsub.s32 %v4312, %v4314
        %v4316 = vrot.slane %v4288, %v4315
        %v4317 = vcombine.low %v4295, %v4302
        %v4318 = vcombine.low %v4309, %v4316
        %v4320 = vunpack.c.l.s4 1966171168
        %v4321 = vunpack.c.0.s8 %v4320
        %v4322 = vlaneseq
        %v4323 = vshrl.u32 %v4322, 7
        %v4324 = vsub.s32 %v4321, %v4323
        %v4325 = vrot.slane %v4317, %v4324
        %v4327 = vunpack.c.l.s4 1966171168
        %v4328 = vunpack.c.0.s8 %v4327
        %v4329 = vlaneseq
        %v4330 = vshrl.u32 %v4329, 7
        %v4331 = vsub.s32 %v4328, %v4330
        %v4332 = vrot.slane %v4318, %v4331
        %v4333 = vcombine.low %v4325, %v4332
        %v4334 = vcombine.low %v3194, %v3198
        %v4335 = vcombine.low %v3202, %v3206
        %v4336 = vcombine.low %v3210, %v3214
        %v4337 = vcombine.low %v3218, %v3222
        %v4339 = vunpack.c.l.s4 1966171168
        %v4340 = vunpack.c.0.s8 %v4339
        %v4341 = vlaneseq
        %v4342 = vshrl.u32 %v4341, 7
        %v4343 = vsub.s32 %v4340, %v4342
        %v4344 = vrot.slane %v4334, %v4343
        %v4346 = vunpack.c.l.s4 1966171168
        %v4347 = vunpack.c.0.s8 %v4346
        %v4348 = vlaneseq
        %v4349 = vshrl.u32 %v4348, 7
        %v4350 = vsub.s32 %v4347, %v4349
        %v4351 = vrot.slane %v4335, %v4350
        %v4353 = vunpack.c.l.s4 1966171168
        %v4354 = vunpack.c.0.s8 %v4353
        %v4355 = vlaneseq
        %v4356 = vshrl.u32 %v4355, 7
        %v4357 = vsub.s32 %v4354, %v4356
        %v4358 = vrot.slane %v4336, %v4357
        %v4360 = vunpack.c.l.s4 1966171168
        %v4361 = vunpack.c.0.s8 %v4360
        %v4362 = vlaneseq
        %v4363 = vshrl.u32 %v4362, 7
        %v4364 = vsub.s32 %v4361, %v4363
        %v4365 = vrot.slane %v4337, %v4364
        %v4366 = vcombine.low %v4344, %v4351
        %v4367 = vcombine.low %v4358, %v4365
        %v4369 = vunpack.c.l.s4 1966171168
        %v4370 = vunpack.c.0.s8 %v4369
        %v4371 = vlaneseq
        %v4372 = vshrl.u32 %v4371, 7
        %v4373 = vsub.s32 %v4370, %v4372
        %v4374 = vrot.slane %v4366, %v4373
        %v4376 = vunpack.c.l.s4 1966171168
        %v4377 = vunpack.c.0.s8 %v4376
        %v4378 = vlaneseq
        %v4379 = vshrl.u32 %v4378, 7
        %v4380 = vsub.s32 %v4377, %v4379
        %v4381 = vrot.slane %v4367, %v4380
        %v4382 = vcombine.low %v4374, %v4381
        %v4383 = vcombine.low %v3226, %v3230
        %v4384 = vcombine.low %v3234, %v3238
        %v4385 = vcombine.low %v3242, %v3246
        %v4386 = vcombine.low %v3250, %v3254
        %v4388 = vunpack.c.l.s4 1966171168
        %v4389 = vunpack.c.0.s8 %v4388
        %v4390 = vlaneseq
        %v4391 = vshrl.u32 %v4390, 7
        %v4392 = vsub.s32 %v4389, %v4391
        %v4393 = vrot.slane %v4383, %v4392
        %v4395 = vunpack.c.l.s4 1966171168
        %v4396 = vunpack.c.0.s8 %v4395
        %v4397 = vlaneseq
        %v4398 = vshrl.u32 %v4397, 7
        %v4399 = vsub.s32 %v4396, %v4398
        %v4400 = vrot.slane %v4384, %v4399
        %v4402 = vunpack.c.l.s4 1966171168
        %v4403 = vunpack.c.0.s8 %v4402
        %v4404 = vlaneseq
        %v4405 = vshrl.u32 %v4404, 7
        %v4406 = vsub.s32 %v4403, %v4405
        %v4407 = vrot.slane %v4385, %v4406
        %v4409 = vunpack.c.l.s4 1966171168
        %v4410 = vunpack.c.0.s8 %v4409
        %v4411 = vlaneseq
        %v4412 = vshrl.u32 %v4411, 7
        %v4413 = vsub.s32 %v4410, %v4412
        %v4414 = vrot.slane %v4386, %v4413
        %v4415 = vcombine.low %v4393, %v4400
        %v4416 = vcombine.low %v4407, %v4414
        %v4418 = vunpack.c.l.s4 1966171168
        %v4419 = vunpack.c.0.s8 %v4418
        %v4420 = vlaneseq
        %v4421 = vshrl.u32 %v4420, 7
        %v4422 = vsub.s32 %v4419, %v4421
        %v4423 = vrot.slane %v4415, %v4422
        %v4425 = vunpack.c.l.s4 1966171168
        %v4426 = vunpack.c.0.s8 %v4425
        %v4427 = vlaneseq
        %v4428 = vshrl.u32 %v4427, 7
        %v4429 = vsub.s32 %v4426, %v4428
        %v4430 = vrot.slane %v4416, %v4429
        %v4431 = vcombine.low %v4423, %v4430
        %v4432 = vcombine.low %v3258, %v3262
        %v4433 = vcombine.low %v3266, %v3270
        %v4434 = vcombine.low %v3274, %v3278
        %v4435 = vcombine.low %v3282, %v3286
        %v4437 = vunpack.c.l.s4 1966171168
        %v4438 = vunpack.c.0.s8 %v4437
        %v4439 = vlaneseq
        %v4440 = vshrl.u32 %v4439, 7
        %v4441 = vsub.s32 %v4438, %v4440
        %v4442 = vrot.slane %v4432, %v4441
        %v4444 = vunpack.c.l.s4 1966171168
        %v4445 = vunpack.c.0.s8 %v4444
        %v4446 = vlaneseq
        %v4447 = vshrl.u32 %v4446, 7
        %v4448 = vsub.s32 %v4445, %v4447
        %v4449 = vrot.slane %v4433, %v4448
        %v4451 = vunpack.c.l.s4 1966171168
        %v4452 = vunpack.c.0.s8 %v4451
        %v4453 = vlaneseq
        %v4454 = vshrl.u32 %v4453, 7
        %v4455 = vsub.s32 %v4452, %v4454
        %v4456 = vrot.slane %v4434, %v4455
        %v4458 = vunpack.c.l.s4 1966171168
        %v4459 = vunpack.c.0.s8 %v4458
        %v4460 = vlaneseq
        %v4461 = vshrl.u32 %v4460, 7
        %v4462 = vsub.s32 %v4459, %v4461
        %v4463 = vrot.slane %v4435, %v4462
        %v4464 = vcombine.low %v4442, %v4449
        %v4465 = vcombine.low %v4456, %v4463
        %v4467 = vunpack.c.l.s4 1966171168
        %v4468 = vunpack.c.0.s8 %v4467
        %v4469 = vlaneseq
        %v4470 = vshrl.u32 %v4469, 7
        %v4471 = vsub.s32 %v4468, %v4470
        %v4472 = vrot.slane %v4464, %v4471
        %v4474 = vunpack.c.l.s4 1966171168
        %v4475 = vunpack.c.0.s8 %v4474
        %v4476 = vlaneseq
        %v4477 = vshrl.u32 %v4476, 7
        %v4478 = vsub.s32 %v4475, %v4477
        %v4479 = vrot.slane %v4465, %v4478
        %v4480 = vcombine.low %v4472, %v4479
        %v4481 = vcombine.low %v3290, %v3294
        %v4482 = vcombine.low %v3298, %v3302
        %v4483 = vcombine.low %v3306, %v3310
        %v4484 = vcombine.low %v3314, %v3318
        %v4486 = vunpack.c.l.s4 1966171168
        %v4487 = vunpack.c.0.s8 %v4486
        %v4488 = vlaneseq
        %v4489 = vshrl.u32 %v4488, 7
        %v4490 = vsub.s32 %v4487, %v4489
        %v4491 = vrot.slane %v4481, %v4490
        %v4493 = vunpack.c.l.s4 1966171168
        %v4494 = vunpack.c.0.s8 %v4493
        %v4495 = vlaneseq
        %v4496 = vshrl.u32 %v4495, 7
        %v4497 = vsub.s32 %v4494, %v4496
        %v4498 = vrot.slane %v4482, %v4497
        %v4500 = vunpack.c.l.s4 1966171168
        %v4501 = vunpack.c.0.s8 %v4500
        %v4502 = vlaneseq
        %v4503 = vshrl.u32 %v4502, 7
        %v4504 = vsub.s32 %v4501, %v4503
        %v4505 = vrot.slane %v4483, %v4504
        %v4507 = vunpack.c.l.s4 1966171168
        %v4508 = vunpack.c.0.s8 %v4507
        %v4509 = vlaneseq
        %v4510 = vshrl.u32 %v4509, 7
        %v4511 = vsub.s32 %v4508, %v4510
        %v4512 = vrot.slane %v4484, %v4511
        %v4513 = vcombine.low %v4491, %v4498
        %v4514 = vcombine.low %v4505, %v4512
        %v4516 = vunpack.c.l.s4 1966171168
        %v4517 = vunpack.c.0.s8 %v4516
        %v4518 = vlaneseq
        %v4519 = vshrl.u32 %v4518, 7
        %v4520 = vsub.s32 %v4517, %v4519
        %v4521 = vrot.slane %v4513, %v4520
        %v4523 = vunpack.c.l.s4 1966171168
        %v4524 = vunpack.c.0.s8 %v4523
        %v4525 = vlaneseq
        %v4526 = vshrl.u32 %v4525, 7
        %v4527 = vsub.s32 %v4524, %v4526
        %v4528 = vrot.slane %v4514, %v4527
        %v4529 = vcombine.low %v4521, %v4528
        %v4530 = vcombine.low %v3322, %v3326
        %v4531 = vcombine.low %v3330, %v3334
        %v4532 = vcombine.low %v3338, %v3342
        %v4533 = vcombine.low %v3346, %v3350
        %v4535 = vunpack.c.l.s4 1966171168
        %v4536 = vunpack.c.0.s8 %v4535
        %v4537 = vlaneseq
        %v4538 = vshrl.u32 %v4537, 7
        %v4539 = vsub.s32 %v4536, %v4538
        %v4540 = vrot.slane %v4530, %v4539
        %v4542 = vunpack.c.l.s4 1966171168
        %v4543 = vunpack.c.0.s8 %v4542
        %v4544 = vlaneseq
        %v4545 = vshrl.u32 %v4544, 7
        %v4546 = vsub.s32 %v4543, %v4545
        %v4547 = vrot.slane %v4531, %v4546
        %v4549 = vunpack.c.l.s4 1966171168
        %v4550 = vunpack.c.0.s8 %v4549
        %v4551 = vlaneseq
        %v4552 = vshrl.u32 %v4551, 7
        %v4553 = vsub.s32 %v4550, %v4552
        %v4554 = vrot.slane %v4532, %v4553
        %v4556 = vunpack.c.l.s4 1966171168
        %v4557 = vunpack.c.0.s8 %v4556
        %v4558 = vlaneseq
        %v4559 = vshrl.u32 %v4558, 7
        %v4560 = vsub.s32 %v4557, %v4559
        %v4561 = vrot.slane %v4533, %v4560
        %v4562 = vcombine.low %v4540, %v4547
        %v4563 = vcombine.low %v4554, %v4561
        %v4565 = vunpack.c.l.s4 1966171168
        %v4566 = vunpack.c.0.s8 %v4565
        %v4567 = vlaneseq
        %v4568 = vshrl.u32 %v4567, 7
        %v4569 = vsub.s32 %v4566, %v4568
        %v4570 = vrot.slane %v4562, %v4569
        %v4572 = vunpack.c.l.s4 1966171168
        %v4573 = vunpack.c.0.s8 %v4572
        %v4574 = vlaneseq
        %v4575 = vshrl.u32 %v4574, 7
        %v4576 = vsub.s32 %v4573, %v4575
        %v4577 = vrot.slane %v4563, %v4576
        %v4578 = vcombine.low %v4570, %v4577
        %v4579 = vcombine.low %v3354, %v3358
        %v4580 = vcombine.low %v3362, %v3366
        %v4581 = vcombine.low %v3370, %v3374
        %v4582 = vcombine.low %v3378, %v3382
        %v4584 = vunpack.c.l.s4 1966171168
        %v4585 = vunpack.c.0.s8 %v4584
        %v4586 = vlaneseq
        %v4587 = vshrl.u32 %v4586, 7
        %v4588 = vsub.s32 %v4585, %v4587
        %v4589 = vrot.slane %v4579, %v4588
        %v4591 = vunpack.c.l.s4 1966171168
        %v4592 = vunpack.c.0.s8 %v4591
        %v4593 = vlaneseq
        %v4594 = vshrl.u32 %v4593, 7
        %v4595 = vsub.s32 %v4592, %v4594
        %v4596 = vrot.slane %v4580, %v4595
        %v4598 = vunpack.c.l.s4 1966171168
        %v4599 = vunpack.c.0.s8 %v4598
        %v4600 = vlaneseq
        %v4601 = vshrl.u32 %v4600, 7
        %v4602 = vsub.s32 %v4599, %v4601
        %v4603 = vrot.slane %v4581, %v4602
        %v4605 = vunpack.c.l.s4 1966171168
        %v4606 = vunpack.c.0.s8 %v4605
        %v4607 = vlaneseq
        %v4608 = vshrl.u32 %v4607, 7
        %v4609 = vsub.s32 %v4606, %v4608
        %v4610 = vrot.slane %v4582, %v4609
        %v4611 = vcombine.low %v4589, %v4596
        %v4612 = vcombine.low %v4603, %v4610
        %v4614 = vunpack.c.l.s4 1966171168
        %v4615 = vunpack.c.0.s8 %v4614
        %v4616 = vlaneseq
        %v4617 = vshrl.u32 %v4616, 7
        %v4618 = vsub.s32 %v4615, %v4617
        %v4619 = vrot.slane %v4611, %v4618
        %v4621 = vunpack.c.l.s4 1966171168
        %v4622 = vunpack.c.0.s8 %v4621
        %v4623 = vlaneseq
        %v4624 = vshrl.u32 %v4623, 7
        %v4625 = vsub.s32 %v4622, %v4624
        %v4626 = vrot.slane %v4612, %v4625
        %v4627 = vcombine.low %v4619, %v4626
        %v4628 = vcombine.low %v3386, %v3390
        %v4629 = vcombine.low %v3394, %v3398
        %v4630 = vcombine.low %v3402, %v3406
        %v4631 = vcombine.low %v3410, %v3414
        %v4633 = vunpack.c.l.s4 1966171168
        %v4634 = vunpack.c.0.s8 %v4633
        %v4635 = vlaneseq
        %v4636 = vshrl.u32 %v4635, 7
        %v4637 = vsub.s32 %v4634, %v4636
        %v4638 = vrot.slane %v4628, %v4637
        %v4640 = vunpack.c.l.s4 1966171168
        %v4641 = vunpack.c.0.s8 %v4640
        %v4642 = vlaneseq
        %v4643 = vshrl.u32 %v4642, 7
        %v4644 = vsub.s32 %v4641, %v4643
        %v4645 = vrot.slane %v4629, %v4644
        %v4647 = vunpack.c.l.s4 1966171168
        %v4648 = vunpack.c.0.s8 %v4647
        %v4649 = vlaneseq
        %v4650 = vshrl.u32 %v4649, 7
        %v4651 = vsub.s32 %v4648, %v4650
        %v4652 = vrot.slane %v4630, %v4651
        %v4654 = vunpack.c.l.s4 1966171168
        %v4655 = vunpack.c.0.s8 %v4654
        %v4656 = vlaneseq
        %v4657 = vshrl.u32 %v4656, 7
        %v4658 = vsub.s32 %v4655, %v4657
        %v4659 = vrot.slane %v4631, %v4658
        %v4660 = vcombine.low %v4638, %v4645
        %v4661 = vcombine.low %v4652, %v4659
        %v4663 = vunpack.c.l.s4 1966171168
        %v4664 = vunpack.c.0.s8 %v4663
        %v4665 = vlaneseq
        %v4666 = vshrl.u32 %v4665, 7
        %v4667 = vsub.s32 %v4664, %v4666
        %v4668 = vrot.slane %v4660, %v4667
        %v4670 = vunpack.c.l.s4 1966171168
        %v4671 = vunpack.c.0.s8 %v4670
        %v4672 = vlaneseq
        %v4673 = vshrl.u32 %v4672, 7
        %v4674 = vsub.s32 %v4671, %v4673
        %v4675 = vrot.slane %v4661, %v4674
        %v4676 = vcombine.low %v4668, %v4675
        %v4677 = vcombine.low %v3418, %v3422
        %v4678 = vcombine.low %v3426, %v3430
        %v4679 = vcombine.low %v3434, %v3438
        %v4680 = vcombine.low %v3442, %v3446
        %v4682 = vunpack.c.l.s4 1966171168
        %v4683 = vunpack.c.0.s8 %v4682
        %v4684 = vlaneseq
        %v4685 = vshrl.u32 %v4684, 7
        %v4686 = vsub.s32 %v4683, %v4685
        %v4687 = vrot.slane %v4677, %v4686
        %v4689 = vunpack.c.l.s4 1966171168
        %v4690 = vunpack.c.0.s8 %v4689
        %v4691 = vlaneseq
        %v4692 = vshrl.u32 %v4691, 7
        %v4693 = vsub.s32 %v4690, %v4692
        %v4694 = vrot.slane %v4678, %v4693
        %v4696 = vunpack.c.l.s4 1966171168
        %v4697 = vunpack.c.0.s8 %v4696
        %v4698 = vlaneseq
        %v4699 = vshrl.u32 %v4698, 7
        %v4700 = vsub.s32 %v4697, %v4699
        %v4701 = vrot.slane %v4679, %v4700
        %v4703 = vunpack.c.l.s4 1966171168
        %v4704 = vunpack.c.0.s8 %v4703
        %v4705 = vlaneseq
        %v4706 = vshrl.u32 %v4705, 7
        %v4707 = vsub.s32 %v4704, %v4706
        %v4708 = vrot.slane %v4680, %v4707
        %v4709 = vcombine.low %v4687, %v4694
        %v4710 = vcombine.low %v4701, %v4708
        %v4712 = vunpack.c.l.s4 1966171168
        %v4713 = vunpack.c.0.s8 %v4712
        %v4714 = vlaneseq
        %v4715 = vshrl.u32 %v4714, 7
        %v4716 = vsub.s32 %v4713, %v4715
        %v4717 = vrot.slane %v4709, %v4716
        %v4719 = vunpack.c.l.s4 1966171168
        %v4720 = vunpack.c.0.s8 %v4719
        %v4721 = vlaneseq
        %v4722 = vshrl.u32 %v4721, 7
        %v4723 = vsub.s32 %v4720, %v4722
        %v4724 = vrot.slane %v4710, %v4723
        %v4725 = vcombine.low %v4717, %v4724
        %v4726 = vcombine.low %v3450, %v3454
        %v4727 = vcombine.low %v3458, %v3462
        %v4728 = vcombine.low %v3466, %v3470
        %v4729 = vcombine.low %v3474, %v3478
        %v4731 = vunpack.c.l.s4 1966171168
        %v4732 = vunpack.c.0.s8 %v4731
        %v4733 = vlaneseq
        %v4734 = vshrl.u32 %v4733, 7
        %v4735 = vsub.s32 %v4732, %v4734
        %v4736 = vrot.slane %v4726, %v4735
        %v4738 = vunpack.c.l.s4 1966171168
        %v4739 = vunpack.c.0.s8 %v4738
        %v4740 = vlaneseq
        %v4741 = vshrl.u32 %v4740, 7
        %v4742 = vsub.s32 %v4739, %v4741
        %v4743 = vrot.slane %v4727, %v4742
        %v4745 = vunpack.c.l.s4 1966171168
        %v4746 = vunpack.c.0.s8 %v4745
        %v4747 = vlaneseq
        %v4748 = vshrl.u32 %v4747, 7
        %v4749 = vsub.s32 %v4746, %v4748
        %v4750 = vrot.slane %v4728, %v4749
        %v4752 = vunpack.c.l.s4 1966171168
        %v4753 = vunpack.c.0.s8 %v4752
        %v4754 = vlaneseq
        %v4755 = vshrl.u32 %v4754, 7
        %v4756 = vsub.s32 %v4753, %v4755
        %v4757 = vrot.slane %v4729, %v4756
        %v4758 = vcombine.low %v4736, %v4743
        %v4759 = vcombine.low %v4750, %v4757
        %v4761 = vunpack.c.l.s4 1966171168
        %v4762 = vunpack.c.0.s8 %v4761
        %v4763 = vlaneseq
        %v4764 = vshrl.u32 %v4763, 7
        %v4765 = vsub.s32 %v4762, %v4764
        %v4766 = vrot.slane %v4758, %v4765
        %v4768 = vunpack.c.l.s4 1966171168
        %v4769 = vunpack.c.0.s8 %v4768
        %v4770 = vlaneseq
        %v4771 = vshrl.u32 %v4770, 7
        %v4772 = vsub.s32 %v4769, %v4771
        %v4773 = vrot.slane %v4759, %v4772
        %v4774 = vcombine.low %v4766, %v4773
        %v4775 = vcombine.low %v3482, %v3486
        %v4776 = vcombine.low %v3490, %v3494
        %v4777 = vcombine.low %v3498, %v3502
        %v4778 = vcombine.low %v3506, %v3510
        %v4780 = vunpack.c.l.s4 1966171168
        %v4781 = vunpack.c.0.s8 %v4780
        %v4782 = vlaneseq
        %v4783 = vshrl.u32 %v4782, 7
        %v4784 = vsub.s32 %v4781, %v4783
        %v4785 = vrot.slane %v4775, %v4784
        %v4787 = vunpack.c.l.s4 1966171168
        %v4788 = vunpack.c.0.s8 %v4787
        %v4789 = vlaneseq
        %v4790 = vshrl.u32 %v4789, 7
        %v4791 = vsub.s32 %v4788, %v4790
        %v4792 = vrot.slane %v4776, %v4791
        %v4794 = vunpack.c.l.s4 1966171168
        %v4795 = vunpack.c.0.s8 %v4794
        %v4796 = vlaneseq
        %v4797 = vshrl.u32 %v4796, 7
        %v4798 = vsub.s32 %v4795, %v4797
        %v4799 = vrot.slane %v4777, %v4798
        %v4801 = vunpack.c.l.s4 1966171168
        %v4802 = vunpack.c.0.s8 %v4801
        %v4803 = vlaneseq
        %v4804 = vshrl.u32 %v4803, 7
        %v4805 = vsub.s32 %v4802, %v4804
        %v4806 = vrot.slane %v4778, %v4805
        %v4807 = vcombine.low %v4785, %v4792
        %v4808 = vcombine.low %v4799, %v4806
        %v4810 = vunpack.c.l.s4 1966171168
        %v4811 = vunpack.c.0.s8 %v4810
        %v4812 = vlaneseq
        %v4813 = vshrl.u32 %v4812, 7
        %v4814 = vsub.s32 %v4811, %v4813
        %v4815 = vrot.slane %v4807, %v4814
        %v4817 = vunpack.c.l.s4 1966171168
        %v4818 = vunpack.c.0.s8 %v4817
        %v4819 = vlaneseq
        %v4820 = vshrl.u32 %v4819, 7
        %v4821 = vsub.s32 %v4818, %v4820
        %v4822 = vrot.slane %v4808, %v4821
        %v4823 = vcombine.low %v4815, %v4822
        %v4824 = vcombine.low %v3514, %v3518
        %v4825 = vcombine.low %v3522, %v3526
        %v4826 = vcombine.low %v3530, %v3534
        %v4827 = vcombine.low %v3538, %v3542
        %v4829 = vunpack.c.l.s4 1966171168
        %v4830 = vunpack.c.0.s8 %v4829
        %v4831 = vlaneseq
        %v4832 = vshrl.u32 %v4831, 7
        %v4833 = vsub.s32 %v4830, %v4832
        %v4834 = vrot.slane %v4824, %v4833
        %v4836 = vunpack.c.l.s4 1966171168
        %v4837 = vunpack.c.0.s8 %v4836
        %v4838 = vlaneseq
        %v4839 = vshrl.u32 %v4838, 7
        %v4840 = vsub.s32 %v4837, %v4839
        %v4841 = vrot.slane %v4825, %v4840
        %v4843 = vunpack.c.l.s4 1966171168
        %v4844 = vunpack.c.0.s8 %v4843
        %v4845 = vlaneseq
        %v4846 = vshrl.u32 %v4845, 7
        %v4847 = vsub.s32 %v4844, %v4846
        %v4848 = vrot.slane %v4826, %v4847
        %v4850 = vunpack.c.l.s4 1966171168
        %v4851 = vunpack.c.0.s8 %v4850
        %v4852 = vlaneseq
        %v4853 = vshrl.u32 %v4852, 7
        %v4854 = vsub.s32 %v4851, %v4853
        %v4855 = vrot.slane %v4827, %v4854
        %v4856 = vcombine.low %v4834, %v4841
        %v4857 = vcombine.low %v4848, %v4855
        %v4859 = vunpack.c.l.s4 1966171168
        %v4860 = vunpack.c.0.s8 %v4859
        %v4861 = vlaneseq
        %v4862 = vshrl.u32 %v4861, 7
        %v4863 = vsub.s32 %v4860, %v4862
        %v4864 = vrot.slane %v4856, %v4863
        %v4866 = vunpack.c.l.s4 1966171168
        %v4867 = vunpack.c.0.s8 %v4866
        %v4868 = vlaneseq
        %v4869 = vshrl.u32 %v4868, 7
        %v4870 = vsub.s32 %v4867, %v4869
        %v4871 = vrot.slane %v4857, %v4870
        %v4872 = vcombine.low %v4864, %v4871
        %v4873 = vcombine.low %v3546, %v3550
        %v4874 = vcombine.low %v3554, %v3558
        %v4875 = vcombine.low %v3562, %v3566
        %v4876 = vcombine.low %v3570, %v3574
        %v4878 = vunpack.c.l.s4 1966171168
        %v4879 = vunpack.c.0.s8 %v4878
        %v4880 = vlaneseq
        %v4881 = vshrl.u32 %v4880, 7
        %v4882 = vsub.s32 %v4879, %v4881
        %v4883 = vrot.slane %v4873, %v4882
        %v4885 = vunpack.c.l.s4 1966171168
        %v4886 = vunpack.c.0.s8 %v4885
        %v4887 = vlaneseq
        %v4888 = vshrl.u32 %v4887, 7
        %v4889 = vsub.s32 %v4886, %v4888
        %v4890 = vrot.slane %v4874, %v4889
        %v4892 = vunpack.c.l.s4 1966171168
        %v4893 = vunpack.c.0.s8 %v4892
        %v4894 = vlaneseq
        %v4895 = vshrl.u32 %v4894, 7
        %v4896 = vsub.s32 %v4893, %v4895
        %v4897 = vrot.slane %v4875, %v4896
        %v4899 = vunpack.c.l.s4 1966171168
        %v4900 = vunpack.c.0.s8 %v4899
        %v4901 = vlaneseq
        %v4902 = vshrl.u32 %v4901, 7
        %v4903 = vsub.s32 %v4900, %v4902
        %v4904 = vrot.slane %v4876, %v4903
        %v4905 = vcombine.low %v4883, %v4890
        %v4906 = vcombine.low %v4897, %v4904
        %v4908 = vunpack.c.l.s4 1966171168
        %v4909 = vunpack.c.0.s8 %v4908
        %v4910 = vlaneseq
        %v4911 = vshrl.u32 %v4910, 7
        %v4912 = vsub.s32 %v4909, %v4911
        %v4913 = vrot.slane %v4905, %v4912
        %v4915 = vunpack.c.l.s4 1966171168
        %v4916 = vunpack.c.0.s8 %v4915
        %v4917 = vlaneseq
        %v4918 = vshrl.u32 %v4917, 7
        %v4919 = vsub.s32 %v4916, %v4918
        %v4920 = vrot.slane %v4906, %v4919
        %v4921 = vcombine.low %v4913, %v4920
        %v4922 = vcombine.low %v3578, %v3582
        %v4923 = vcombine.low %v3586, %v3590
        %v4924 = vcombine.low %v3594, %v3598
        %v4925 = vcombine.low %v3602, %v3606
        %v4927 = vunpack.c.l.s4 1966171168
        %v4928 = vunpack.c.0.s8 %v4927
        %v4929 = vlaneseq
        %v4930 = vshrl.u32 %v4929, 7
        %v4931 = vsub.s32 %v4928, %v4930
        %v4932 = vrot.slane %v4922, %v4931
        %v4934 = vunpack.c.l.s4 1966171168
        %v4935 = vunpack.c.0.s8 %v4934
        %v4936 = vlaneseq
        %v4937 = vshrl.u32 %v4936, 7
        %v4938 = vsub.s32 %v4935, %v4937
        %v4939 = vrot.slane %v4923, %v4938
        %v4941 = vunpack.c.l.s4 1966171168
        %v4942 = vunpack.c.0.s8 %v4941
        %v4943 = vlaneseq
        %v4944 = vshrl.u32 %v4943, 7
        %v4945 = vsub.s32 %v4942, %v4944
        %v4946 = vrot.slane %v4924, %v4945
        %v4948 = vunpack.c.l.s4 1966171168
        %v4949 = vunpack.c.0.s8 %v4948
        %v4950 = vlaneseq
        %v4951 = vshrl.u32 %v4950, 7
        %v4952 = vsub.s32 %v4949, %v4951
        %v4953 = vrot.slane %v4925, %v4952
        %v4954 = vcombine.low %v4932, %v4939
        %v4955 = vcombine.low %v4946, %v4953
        %v4957 = vunpack.c.l.s4 1966171168
        %v4958 = vunpack.c.0.s8 %v4957
        %v4959 = vlaneseq
        %v4960 = vshrl.u32 %v4959, 7
        %v4961 = vsub.s32 %v4958, %v4960
        %v4962 = vrot.slane %v4954, %v4961
        %v4964 = vunpack.c.l.s4 1966171168
        %v4965 = vunpack.c.0.s8 %v4964
        %v4966 = vlaneseq
        %v4967 = vshrl.u32 %v4966, 7
        %v4968 = vsub.s32 %v4965, %v4967
        %v4969 = vrot.slane %v4955, %v4968
        %v4970 = vcombine.low %v4962, %v4969
        %v4971 = vcombine.low %v3610, %v3614
        %v4972 = vcombine.low %v3618, %v3622
        %v4973 = vcombine.low %v3626, %v3630
        %v4974 = vcombine.low %v3634, %v3638
        %v4976 = vunpack.c.l.s4 1966171168
        %v4977 = vunpack.c.0.s8 %v4976
        %v4978 = vlaneseq
        %v4979 = vshrl.u32 %v4978, 7
        %v4980 = vsub.s32 %v4977, %v4979
        %v4981 = vrot.slane %v4971, %v4980
        %v4983 = vunpack.c.l.s4 1966171168
        %v4984 = vunpack.c.0.s8 %v4983
        %v4985 = vlaneseq
        %v4986 = vshrl.u32 %v4985, 7
        %v4987 = vsub.s32 %v4984, %v4986
        %v4988 = vrot.slane %v4972, %v4987
        %v4990 = vunpack.c.l.s4 1966171168
        %v4991 = vunpack.c.0.s8 %v4990
        %v4992 = vlaneseq
        %v4993 = vshrl.u32 %v4992, 7
        %v4994 = vsub.s32 %v4991, %v4993
        %v4995 = vrot.slane %v4973, %v4994
        %v4997 = vunpack.c.l.s4 1966171168
        %v4998 = vunpack.c.0.s8 %v4997
        %v4999 = vlaneseq
        %v5000 = vshrl.u32 %v4999, 7
        %v5001 = vsub.s32 %v4998, %v5000
        %v5002 = vrot.slane %v4974, %v5001
        %v5003 = vcombine.low %v4981, %v4988
        %v5004 = vcombine.low %v4995, %v5002
        %v5006 = vunpack.c.l.s4 1966171168
        %v5007 = vunpack.c.0.s8 %v5006
        %v5008 = vlaneseq
        %v5009 = vshrl.u32 %v5008, 7
        %v5010 = vsub.s32 %v5007, %v5009
        %v5011 = vrot.slane %v5003, %v5010
        %v5013 = vunpack.c.l.s4 1966171168
        %v5014 = vunpack.c.0.s8 %v5013
        %v5015 = vlaneseq
        %v5016 = vshrl.u32 %v5015, 7
        %v5017 = vsub.s32 %v5014, %v5016
        %v5018 = vrot.slane %v5004, %v5017
        %v5019 = vcombine.low %v5011, %v5018
        %v5020 = vcombine.low %v3642, %v3646
        %v5021 = vcombine.low %v3650, %v3654
        %v5022 = vcombine.low %v3658, %v3662
        %v5023 = vcombine.low %v3666, %v3670
        %v5025 = vunpack.c.l.s4 1966171168
        %v5026 = vunpack.c.0.s8 %v5025
        %v5027 = vlaneseq
        %v5028 = vshrl.u32 %v5027, 7
        %v5029 = vsub.s32 %v5026, %v5028
        %v5030 = vrot.slane %v5020, %v5029
        %v5032 = vunpack.c.l.s4 1966171168
        %v5033 = vunpack.c.0.s8 %v5032
        %v5034 = vlaneseq
        %v5035 = vshrl.u32 %v5034, 7
        %v5036 = vsub.s32 %v5033, %v5035
        %v5037 = vrot.slane %v5021, %v5036
        %v5039 = vunpack.c.l.s4 1966171168
        %v5040 = vunpack.c.0.s8 %v5039
        %v5041 = vlaneseq
        %v5042 = vshrl.u32 %v5041, 7
        %v5043 = vsub.s32 %v5040, %v5042
        %v5044 = vrot.slane %v5022, %v5043
        %v5046 = vunpack.c.l.s4 1966171168
        %v5047 = vunpack.c.0.s8 %v5046
        %v5048 = vlaneseq
        %v5049 = vshrl.u32 %v5048, 7
        %v5050 = vsub.s32 %v5047, %v5049
        %v5051 = vrot.slane %v5023, %v5050
        %v5052 = vcombine.low %v5030, %v5037
        %v5053 = vcombine.low %v5044, %v5051
        %v5055 = vunpack.c.l.s4 1966171168
        %v5056 = vunpack.c.0.s8 %v5055
        %v5057 = vlaneseq
        %v5058 = vshrl.u32 %v5057, 7
        %v5059 = vsub.s32 %v5056, %v5058
        %v5060 = vrot.slane %v5052, %v5059
        %v5062 = vunpack.c.l.s4 1966171168
        %v5063 = vunpack.c.0.s8 %v5062
        %v5064 = vlaneseq
        %v5065 = vshrl.u32 %v5064, 7
        %v5066 = vsub.s32 %v5063, %v5065
        %v5067 = vrot.slane %v5053, %v5066
        %v5068 = vcombine.low %v5060, %v5067
        %v5069 = vcombine.low %v3674, %v3678
        %v5070 = vcombine.low %v3682, %v3686
        %v5071 = vcombine.low %v3690, %v3694
        %v5072 = vcombine.low %v3698, %v3702
        %v5074 = vunpack.c.l.s4 1966171168
        %v5075 = vunpack.c.0.s8 %v5074
        %v5076 = vlaneseq
        %v5077 = vshrl.u32 %v5076, 7
        %v5078 = vsub.s32 %v5075, %v5077
        %v5079 = vrot.slane %v5069, %v5078
        %v5081 = vunpack.c.l.s4 1966171168
        %v5082 = vunpack.c.0.s8 %v5081
        %v5083 = vlaneseq
        %v5084 = vshrl.u32 %v5083, 7
        %v5085 = vsub.s32 %v5082, %v5084
        %v5086 = vrot.slane %v5070, %v5085
        %v5088 = vunpack.c.l.s4 1966171168
        %v5089 = vunpack.c.0.s8 %v5088
        %v5090 = vlaneseq
        %v5091 = vshrl.u32 %v5090, 7
        %v5092 = vsub.s32 %v5089, %v5091
        %v5093 = vrot.slane %v5071, %v5092
        %v5095 = vunpack.c.l.s4 1966171168
        %v5096 = vunpack.c.0.s8 %v5095
        %v5097 = vlaneseq
        %v5098 = vshrl.u32 %v5097, 7
        %v5099 = vsub.s32 %v5096, %v5098
        %v5100 = vrot.slane %v5072, %v5099
        %v5101 = vcombine.low %v5079, %v5086
        %v5102 = vcombine.low %v5093, %v5100
        %v5104 = vunpack.c.l.s4 1966171168
        %v5105 = vunpack.c.0.s8 %v5104
        %v5106 = vlaneseq
        %v5107 = vshrl.u32 %v5106, 7
        %v5108 = vsub.s32 %v5105, %v5107
        %v5109 = vrot.slane %v5101, %v5108
        %v5111 = vunpack.c.l.s4 1966171168
        %v5112 = vunpack.c.0.s8 %v5111
        %v5113 = vlaneseq
        %v5114 = vshrl.u32 %v5113, 7
        %v5115 = vsub.s32 %v5112, %v5114
        %v5116 = vrot.slane %v5102, %v5115
        %v5117 = vcombine.low %v5109, %v5116
        %v5118 = vcombine.low %v3706, %v3710
        %v5119 = vcombine.low %v3714, %v3718
        %v5120 = vcombine.low %v3722, %v3726
        %v5121 = vcombine.low %v3730, %v3734
        %v5123 = vunpack.c.l.s4 1966171168
        %v5124 = vunpack.c.0.s8 %v5123
        %v5125 = vlaneseq
        %v5126 = vshrl.u32 %v5125, 7
        %v5127 = vsub.s32 %v5124, %v5126
        %v5128 = vrot.slane %v5118, %v5127
        %v5130 = vunpack.c.l.s4 1966171168
        %v5131 = vunpack.c.0.s8 %v5130
        %v5132 = vlaneseq
        %v5133 = vshrl.u32 %v5132, 7
        %v5134 = vsub.s32 %v5131, %v5133
        %v5135 = vrot.slane %v5119, %v5134
        %v5137 = vunpack.c.l.s4 1966171168
        %v5138 = vunpack.c.0.s8 %v5137
        %v5139 = vlaneseq
        %v5140 = vshrl.u32 %v5139, 7
        %v5141 = vsub.s32 %v5138, %v5140
        %v5142 = vrot.slane %v5120, %v5141
        %v5144 = vunpack.c.l.s4 1966171168
        %v5145 = vunpack.c.0.s8 %v5144
        %v5146 = vlaneseq
        %v5147 = vshrl.u32 %v5146, 7
        %v5148 = vsub.s32 %v5145, %v5147
        %v5149 = vrot.slane %v5121, %v5148
        %v5150 = vcombine.low %v5128, %v5135
        %v5151 = vcombine.low %v5142, %v5149
        %v5153 = vunpack.c.l.s4 1966171168
        %v5154 = vunpack.c.0.s8 %v5153
        %v5155 = vlaneseq
        %v5156 = vshrl.u32 %v5155, 7
        %v5157 = vsub.s32 %v5154, %v5156
        %v5158 = vrot.slane %v5150, %v5157
        %v5160 = vunpack.c.l.s4 1966171168
        %v5161 = vunpack.c.0.s8 %v5160
        %v5162 = vlaneseq
        %v5163 = vshrl.u32 %v5162, 7
        %v5164 = vsub.s32 %v5161, %v5163
        %v5165 = vrot.slane %v5151, %v5164
        %v5166 = vcombine.low %v5158, %v5165
        %v5167 = vcombine.low %v3738, %v3742
        %v5168 = vcombine.low %v3746, %v3750
        %v5169 = vcombine.low %v3754, %v3758
        %v5170 = vcombine.low %v3762, %v3766
        %v5172 = vunpack.c.l.s4 1966171168
        %v5173 = vunpack.c.0.s8 %v5172
        %v5174 = vlaneseq
        %v5175 = vshrl.u32 %v5174, 7
        %v5176 = vsub.s32 %v5173, %v5175
        %v5177 = vrot.slane %v5167, %v5176
        %v5179 = vunpack.c.l.s4 1966171168
        %v5180 = vunpack.c.0.s8 %v5179
        %v5181 = vlaneseq
        %v5182 = vshrl.u32 %v5181, 7
        %v5183 = vsub.s32 %v5180, %v5182
        %v5184 = vrot.slane %v5168, %v5183
        %v5186 = vunpack.c.l.s4 1966171168
        %v5187 = vunpack.c.0.s8 %v5186
        %v5188 = vlaneseq
        %v5189 = vshrl.u32 %v5188, 7
        %v5190 = vsub.s32 %v5187, %v5189
        %v5191 = vrot.slane %v5169, %v5190
        %v5193 = vunpack.c.l.s4 1966171168
        %v5194 = vunpack.c.0.s8 %v5193
        %v5195 = vlaneseq
        %v5196 = vshrl.u32 %v5195, 7
        %v5197 = vsub.s32 %v5194, %v5196
        %v5198 = vrot.slane %v5170, %v5197
        %v5199 = vcombine.low %v5177, %v5184
        %v5200 = vcombine.low %v5191, %v5198
        %v5202 = vunpack.c.l.s4 1966171168
        %v5203 = vunpack.c.0.s8 %v5202
        %v5204 = vlaneseq
        %v5205 = vshrl.u32 %v5204, 7
        %v5206 = vsub.s32 %v5203, %v5205
        %v5207 = vrot.slane %v5199, %v5206
        %v5209 = vunpack.c.l.s4 1966171168
        %v5210 = vunpack.c.0.s8 %v5209
        %v5211 = vlaneseq
        %v5212 = vshrl.u32 %v5211, 7
        %v5213 = vsub.s32 %v5210, %v5212
        %v5214 = vrot.slane %v5200, %v5213
        %v5215 = vcombine.low %v5207, %v5214
        %v5216 = vcombine.low %v3770, %v3774
        %v5217 = vcombine.low %v3778, %v3782
        %v5218 = vcombine.low %v3786, %v3790
        %v5219 = vcombine.low %v3794, %v3798
        %v5221 = vunpack.c.l.s4 1966171168
        %v5222 = vunpack.c.0.s8 %v5221
        %v5223 = vlaneseq
        %v5224 = vshrl.u32 %v5223, 7
        %v5225 = vsub.s32 %v5222, %v5224
        %v5226 = vrot.slane %v5216, %v5225
        %v5228 = vunpack.c.l.s4 1966171168
        %v5229 = vunpack.c.0.s8 %v5228
        %v5230 = vlaneseq
        %v5231 = vshrl.u32 %v5230, 7
        %v5232 = vsub.s32 %v5229, %v5231
        %v5233 = vrot.slane %v5217, %v5232
        %v5235 = vunpack.c.l.s4 1966171168
        %v5236 = vunpack.c.0.s8 %v5235
        %v5237 = vlaneseq
        %v5238 = vshrl.u32 %v5237, 7
        %v5239 = vsub.s32 %v5236, %v5238
        %v5240 = vrot.slane %v5218, %v5239
        %v5242 = vunpack.c.l.s4 1966171168
        %v5243 = vunpack.c.0.s8 %v5242
        %v5244 = vlaneseq
        %v5245 = vshrl.u32 %v5244, 7
        %v5246 = vsub.s32 %v5243, %v5245
        %v5247 = vrot.slane %v5219, %v5246
        %v5248 = vcombine.low %v5226, %v5233
        %v5249 = vcombine.low %v5240, %v5247
        %v5251 = vunpack.c.l.s4 1966171168
        %v5252 = vunpack.c.0.s8 %v5251
        %v5253 = vlaneseq
        %v5254 = vshrl.u32 %v5253, 7
        %v5255 = vsub.s32 %v5252, %v5254
        %v5256 = vrot.slane %v5248, %v5255
        %v5258 = vunpack.c.l.s4 1966171168
        %v5259 = vunpack.c.0.s8 %v5258
        %v5260 = vlaneseq
        %v5261 = vshrl.u32 %v5260, 7
        %v5262 = vsub.s32 %v5259, %v5261
        %v5263 = vrot.slane %v5249, %v5262
        %v5264 = vcombine.low %v5256, %v5263
        %v5265 = vcombine.low %v3802, %v3806
        %v5266 = vcombine.low %v3810, %v3814
        %v5267 = vcombine.low %v3818, %v3822
        %v5268 = vcombine.low %v3826, %v3830
        %v5270 = vunpack.c.l.s4 1966171168
        %v5271 = vunpack.c.0.s8 %v5270
        %v5272 = vlaneseq
        %v5273 = vshrl.u32 %v5272, 7
        %v5274 = vsub.s32 %v5271, %v5273
        %v5275 = vrot.slane %v5265, %v5274
        %v5277 = vunpack.c.l.s4 1966171168
        %v5278 = vunpack.c.0.s8 %v5277
        %v5279 = vlaneseq
        %v5280 = vshrl.u32 %v5279, 7
        %v5281 = vsub.s32 %v5278, %v5280
        %v5282 = vrot.slane %v5266, %v5281
        %v5284 = vunpack.c.l.s4 1966171168
        %v5285 = vunpack.c.0.s8 %v5284
        %v5286 = vlaneseq
        %v5287 = vshrl.u32 %v5286, 7
        %v5288 = vsub.s32 %v5285, %v5287
        %v5289 = vrot.slane %v5267, %v5288
        %v5291 = vunpack.c.l.s4 1966171168
        %v5292 = vunpack.c.0.s8 %v5291
        %v5293 = vlaneseq
        %v5294 = vshrl.u32 %v5293, 7
        %v5295 = vsub.s32 %v5292, %v5294
        %v5296 = vrot.slane %v5268, %v5295
        %v5297 = vcombine.low %v5275, %v5282
        %v5298 = vcombine.low %v5289, %v5296
        %v5300 = vunpack.c.l.s4 1966171168
        %v5301 = vunpack.c.0.s8 %v5300
        %v5302 = vlaneseq
        %v5303 = vshrl.u32 %v5302, 7
        %v5304 = vsub.s32 %v5301, %v5303
        %v5305 = vrot.slane %v5297, %v5304
        %v5307 = vunpack.c.l.s4 1966171168
        %v5308 = vunpack.c.0.s8 %v5307
        %v5309 = vlaneseq
        %v5310 = vshrl.u32 %v5309, 7
        %v5311 = vsub.s32 %v5308, %v5310
        %v5312 = vrot.slane %v5298, %v5311
        %v5313 = vcombine.low %v5305, %v5312
        %v5314 = vcombine.low %v3834, %v3838
        %v5315 = vcombine.low %v3842, %v3846
        %v5316 = vcombine.low %v3850, %v3854
        %v5317 = vcombine.low %v3858, %v3862
        %v5319 = vunpack.c.l.s4 1966171168
        %v5320 = vunpack.c.0.s8 %v5319
        %v5321 = vlaneseq
        %v5322 = vshrl.u32 %v5321, 7
        %v5323 = vsub.s32 %v5320, %v5322
        %v5324 = vrot.slane %v5314, %v5323
        %v5326 = vunpack.c.l.s4 1966171168
        %v5327 = vunpack.c.0.s8 %v5326
        %v5328 = vlaneseq
        %v5329 = vshrl.u32 %v5328, 7
        %v5330 = vsub.s32 %v5327, %v5329
        %v5331 = vrot.slane %v5315, %v5330
        %v5333 = vunpack.c.l.s4 1966171168
        %v5334 = vunpack.c.0.s8 %v5333
        %v5335 = vlaneseq
        %v5336 = vshrl.u32 %v5335, 7
        %v5337 = vsub.s32 %v5334, %v5336
        %v5338 = vrot.slane %v5316, %v5337
        %v5340 = vunpack.c.l.s4 1966171168
        %v5341 = vunpack.c.0.s8 %v5340
        %v5342 = vlaneseq
        %v5343 = vshrl.u32 %v5342, 7
        %v5344 = vsub.s32 %v5341, %v5343
        %v5345 = vrot.slane %v5317, %v5344
        %v5346 = vcombine.low %v5324, %v5331
        %v5347 = vcombine.low %v5338, %v5345
        %v5349 = vunpack.c.l.s4 1966171168
        %v5350 = vunpack.c.0.s8 %v5349
        %v5351 = vlaneseq
        %v5352 = vshrl.u32 %v5351, 7
        %v5353 = vsub.s32 %v5350, %v5352
        %v5354 = vrot.slane %v5346, %v5353
        %v5356 = vunpack.c.l.s4 1966171168
        %v5357 = vunpack.c.0.s8 %v5356
        %v5358 = vlaneseq
        %v5359 = vshrl.u32 %v5358, 7
        %v5360 = vsub.s32 %v5357, %v5359
        %v5361 = vrot.slane %v5347, %v5360
        %v5362 = vcombine.low %v5354, %v5361
        %v5363 = vcombine.low %v3866, %v3870
        %v5364 = vcombine.low %v3874, %v3878
        %v5365 = vcombine.low %v3882, %v3886
        %v5366 = vcombine.low %v3890, %v3894
        %v5368 = vunpack.c.l.s4 1966171168
        %v5369 = vunpack.c.0.s8 %v5368
        %v5370 = vlaneseq
        %v5371 = vshrl.u32 %v5370, 7
        %v5372 = vsub.s32 %v5369, %v5371
        %v5373 = vrot.slane %v5363, %v5372
        %v5375 = vunpack.c.l.s4 1966171168
        %v5376 = vunpack.c.0.s8 %v5375
        %v5377 = vlaneseq
        %v5378 = vshrl.u32 %v5377, 7
        %v5379 = vsub.s32 %v5376, %v5378
        %v5380 = vrot.slane %v5364, %v5379
        %v5382 = vunpack.c.l.s4 1966171168
        %v5383 = vunpack.c.0.s8 %v5382
        %v5384 = vlaneseq
        %v5385 = vshrl.u32 %v5384, 7
        %v5386 = vsub.s32 %v5383, %v5385
        %v5387 = vrot.slane %v5365, %v5386
        %v5389 = vunpack.c.l.s4 1966171168
        %v5390 = vunpack.c.0.s8 %v5389
        %v5391 = vlaneseq
        %v5392 = vshrl.u32 %v5391, 7
        %v5393 = vsub.s32 %v5390, %v5392
        %v5394 = vrot.slane %v5366, %v5393
        %v5395 = vcombine.low %v5373, %v5380
        %v5396 = vcombine.low %v5387, %v5394
        %v5398 = vunpack.c.l.s4 1966171168
        %v5399 = vunpack.c.0.s8 %v5398
        %v5400 = vlaneseq
        %v5401 = vshrl.u32 %v5400, 7
        %v5402 = vsub.s32 %v5399, %v5401
        %v5403 = vrot.slane %v5395, %v5402
        %v5405 = vunpack.c.l.s4 1966171168
        %v5406 = vunpack.c.0.s8 %v5405
        %v5407 = vlaneseq
        %v5408 = vshrl.u32 %v5407, 7
        %v5409 = vsub.s32 %v5406, %v5408
        %v5410 = vrot.slane %v5396, %v5409
        %v5411 = vcombine.low %v5403, %v5410
        %v5412 = vcombine.low %v3898, %v3902
        %v5413 = vcombine.low %v3906, %v3910
        %v5414 = vcombine.low %v3914, %v3918
        %v5415 = vcombine.low %v3922, %v3926
        %v5417 = vunpack.c.l.s4 1966171168
        %v5418 = vunpack.c.0.s8 %v5417
        %v5419 = vlaneseq
        %v5420 = vshrl.u32 %v5419, 7
        %v5421 = vsub.s32 %v5418, %v5420
        %v5422 = vrot.slane %v5412, %v5421
        %v5424 = vunpack.c.l.s4 1966171168
        %v5425 = vunpack.c.0.s8 %v5424
        %v5426 = vlaneseq
        %v5427 = vshrl.u32 %v5426, 7
        %v5428 = vsub.s32 %v5425, %v5427
        %v5429 = vrot.slane %v5413, %v5428
        %v5431 = vunpack.c.l.s4 1966171168
        %v5432 = vunpack.c.0.s8 %v5431
        %v5433 = vlaneseq
        %v5434 = vshrl.u32 %v5433, 7
        %v5435 = vsub.s32 %v5432, %v5434
        %v5436 = vrot.slane %v5414, %v5435
        %v5438 = vunpack.c.l.s4 1966171168
        %v5439 = vunpack.c.0.s8 %v5438
        %v5440 = vlaneseq
        %v5441 = vshrl.u32 %v5440, 7
        %v5442 = vsub.s32 %v5439, %v5441
        %v5443 = vrot.slane %v5415, %v5442
        %v5444 = vcombine.low %v5422, %v5429
        %v5445 = vcombine.low %v5436, %v5443
        %v5447 = vunpack.c.l.s4 1966171168
        %v5448 = vunpack.c.0.s8 %v5447
        %v5449 = vlaneseq
        %v5450 = vshrl.u32 %v5449, 7
        %v5451 = vsub.s32 %v5448, %v5450
        %v5452 = vrot.slane %v5444, %v5451
        %v5454 = vunpack.c.l.s4 1966171168
        %v5455 = vunpack.c.0.s8 %v5454
        %v5456 = vlaneseq
        %v5457 = vshrl.u32 %v5456, 7
        %v5458 = vsub.s32 %v5455, %v5457
        %v5459 = vrot.slane %v5445, %v5458
        %v5460 = vcombine.low %v5452, %v5459
        %v5461 = vcombine.low %v3930, %v3934
        %v5462 = vcombine.low %v3938, %v3942
        %v5463 = vcombine.low %v3946, %v3950
        %v5464 = vcombine.low %v3954, %v3958
        %v5466 = vunpack.c.l.s4 1966171168
        %v5467 = vunpack.c.0.s8 %v5466
        %v5468 = vlaneseq
        %v5469 = vshrl.u32 %v5468, 7
        %v5470 = vsub.s32 %v5467, %v5469
        %v5471 = vrot.slane %v5461, %v5470
        %v5473 = vunpack.c.l.s4 1966171168
        %v5474 = vunpack.c.0.s8 %v5473
        %v5475 = vlaneseq
        %v5476 = vshrl.u32 %v5475, 7
        %v5477 = vsub.s32 %v5474, %v5476
        %v5478 = vrot.slane %v5462, %v5477
        %v5480 = vunpack.c.l.s4 1966171168
        %v5481 = vunpack.c.0.s8 %v5480
        %v5482 = vlaneseq
        %v5483 = vshrl.u32 %v5482, 7
        %v5484 = vsub.s32 %v5481, %v5483
        %v5485 = vrot.slane %v5463, %v5484
        %v5487 = vunpack.c.l.s4 1966171168
        %v5488 = vunpack.c.0.s8 %v5487
        %v5489 = vlaneseq
        %v5490 = vshrl.u32 %v5489, 7
        %v5491 = vsub.s32 %v5488, %v5490
        %v5492 = vrot.slane %v5464, %v5491
        %v5493 = vcombine.low %v5471, %v5478
        %v5494 = vcombine.low %v5485, %v5492
        %v5496 = vunpack.c.l.s4 1966171168
        %v5497 = vunpack.c.0.s8 %v5496
        %v5498 = vlaneseq
        %v5499 = vshrl.u32 %v5498, 7
        %v5500 = vsub.s32 %v5497, %v5499
        %v5501 = vrot.slane %v5493, %v5500
        %v5503 = vunpack.c.l.s4 1966171168
        %v5504 = vunpack.c.0.s8 %v5503
        %v5505 = vlaneseq
        %v5506 = vshrl.u32 %v5505, 7
        %v5507 = vsub.s32 %v5504, %v5506
        %v5508 = vrot.slane %v5494, %v5507
        %v5509 = vcombine.low %v5501, %v5508
        %v5510 = vcombine.low %v3962, %v3966
        %v5511 = vcombine.low %v3970, %v3974
        %v5512 = vcombine.low %v3978, %v3982
        %v5513 = vcombine.low %v3986, %v3990
        %v5515 = vunpack.c.l.s4 1966171168
        %v5516 = vunpack.c.0.s8 %v5515
        %v5517 = vlaneseq
        %v5518 = vshrl.u32 %v5517, 7
        %v5519 = vsub.s32 %v5516, %v5518
        %v5520 = vrot.slane %v5510, %v5519
        %v5522 = vunpack.c.l.s4 1966171168
        %v5523 = vunpack.c.0.s8 %v5522
        %v5524 = vlaneseq
        %v5525 = vshrl.u32 %v5524, 7
        %v5526 = vsub.s32 %v5523, %v5525
        %v5527 = vrot.slane %v5511, %v5526
        %v5529 = vunpack.c.l.s4 1966171168
        %v5530 = vunpack.c.0.s8 %v5529
        %v5531 = vlaneseq
        %v5532 = vshrl.u32 %v5531, 7
        %v5533 = vsub.s32 %v5530, %v5532
        %v5534 = vrot.slane %v5512, %v5533
        %v5536 = vunpack.c.l.s4 1966171168
        %v5537 = vunpack.c.0.s8 %v5536
        %v5538 = vlaneseq
        %v5539 = vshrl.u32 %v5538, 7
        %v5540 = vsub.s32 %v5537, %v5539
        %v5541 = vrot.slane %v5513, %v5540
        %v5542 = vcombine.low %v5520, %v5527
        %v5543 = vcombine.low %v5534, %v5541
        %v5545 = vunpack.c.l.s4 1966171168
        %v5546 = vunpack.c.0.s8 %v5545
        %v5547 = vlaneseq
        %v5548 = vshrl.u32 %v5547, 7
        %v5549 = vsub.s32 %v5546, %v5548
        %v5550 = vrot.slane %v5542, %v5549
        %v5552 = vunpack.c.l.s4 1966171168
        %v5553 = vunpack.c.0.s8 %v5552
        %v5554 = vlaneseq
        %v5555 = vshrl.u32 %v5554, 7
        %v5556 = vsub.s32 %v5553, %v5555
        %v5557 = vrot.slane %v5543, %v5556
        %v5558 = vcombine.low %v5550, %v5557
        %5559 = vset.pattern.permute.xlu0 0
        %5560 = vperm.xlu0 %5559, %v4039
        %v5561 = vpop.permute.xlu0 %5560
        %5562 = vset.pattern.permute.xlu0 0
        %5563 = vperm.xlu0 %5562, %v4088
        %v5564 = vpop.permute.xlu0 %5563
        %5565 = vset.pattern.permute.xlu0 0
        %5566 = vperm.xlu0 %5565, %v4137
        %v5567 = vpop.permute.xlu0 %5566
        %5568 = vset.pattern.permute.xlu0 0
        %5569 = vperm.xlu0 %5568, %v4186
        %v5570 = vpop.permute.xlu0 %5569
        %5571 = vset.pattern.permute.xlu0 0
        %5572 = vperm.xlu0 %5571, %v4235
        %v5573 = vpop.permute.xlu0 %5572
        %5574 = vset.pattern.permute.xlu0 0
        %5575 = vperm.xlu0 %5574, %v4284
        %v5576 = vpop.permute.xlu0 %5575
        %5577 = vset.pattern.permute.xlu0 0
        %5578 = vperm.xlu0 %5577, %v4333
        %v5579 = vpop.permute.xlu0 %5578
        %5580 = vset.pattern.permute.xlu0 0
        %5581 = vperm.xlu0 %5580, %v4382
        %v5582 = vpop.permute.xlu0 %5581
        %5583 = vset.pattern.permute.xlu0 0
        %5584 = vperm.xlu0 %5583, %v4431
        %v5585 = vpop.permute.xlu0 %5584
        %5586 = vset.pattern.permute.xlu0 0
        %5587 = vperm.xlu0 %5586, %v4480
        %v5588 = vpop.permute.xlu0 %5587
        %5589 = vset.pattern.permute.xlu0 0
        %5590 = vperm.xlu0 %5589, %v4529
        %v5591 = vpop.permute.xlu0 %5590
        %5592 = vset.pattern.permute.xlu0 0
        %5593 = vperm.xlu0 %5592, %v4578
        %v5594 = vpop.permute.xlu0 %5593
        %5595 = vset.pattern.permute.xlu0 0
        %5596 = vperm.xlu0 %5595, %v4627
        %v5597 = vpop.permute.xlu0 %5596
        %5598 = vset.pattern.permute.xlu0 0
        %5599 = vperm.xlu0 %5598, %v4676
        %v5600 = vpop.permute.xlu0 %5599
        %5601 = vset.pattern.permute.xlu0 0
        %5602 = vperm.xlu0 %5601, %v4725
        %v5603 = vpop.permute.xlu0 %5602
        %5604 = vset.pattern.permute.xlu0 0
        %5605 = vperm.xlu0 %5604, %v4774
        %v5606 = vpop.permute.xlu0 %5605
        %5607 = vset.pattern.permute.xlu0 0
        %5608 = vperm.xlu0 %5607, %v4823
        %v5609 = vpop.permute.xlu0 %5608
        %5610 = vset.pattern.permute.xlu0 0
        %5611 = vperm.xlu0 %5610, %v4872
        %v5612 = vpop.permute.xlu0 %5611
        %5613 = vset.pattern.permute.xlu0 0
        %5614 = vperm.xlu0 %5613, %v4921
        %v5615 = vpop.permute.xlu0 %5614
        %5616 = vset.pattern.permute.xlu0 0
        %5617 = vperm.xlu0 %5616, %v4970
        %v5618 = vpop.permute.xlu0 %5617
        %5619 = vset.pattern.permute.xlu0 0
        %5620 = vperm.xlu0 %5619, %v5019
        %v5621 = vpop.permute.xlu0 %5620
        %5622 = vset.pattern.permute.xlu0 0
        %5623 = vperm.xlu0 %5622, %v5068
        %v5624 = vpop.permute.xlu0 %5623
        %5625 = vset.pattern.permute.xlu0 0
        %5626 = vperm.xlu0 %5625, %v5117
        %v5627 = vpop.permute.xlu0 %5626
        %5628 = vset.pattern.permute.xlu0 0
        %5629 = vperm.xlu0 %5628, %v5166
        %v5630 = vpop.permute.xlu0 %5629
        %5631 = vset.pattern.permute.xlu0 0
        %5632 = vperm.xlu0 %5631, %v5215
        %v5633 = vpop.permute.xlu0 %5632
        %5634 = vset.pattern.permute.xlu0 0
        %5635 = vperm.xlu0 %5634, %v5264
        %v5636 = vpop.permute.xlu0 %5635
        %5637 = vset.pattern.permute.xlu0 0
        %5638 = vperm.xlu0 %5637, %v5313
        %v5639 = vpop.permute.xlu0 %5638
        %5640 = vset.pattern.permute.xlu0 0
        %5641 = vperm.xlu0 %5640, %v5362
        %v5642 = vpop.permute.xlu0 %5641
        %5643 = vset.pattern.permute.xlu0 0
        %5644 = vperm.xlu0 %5643, %v5411
        %v5645 = vpop.permute.xlu0 %5644
        %5646 = vset.pattern.permute.xlu0 0
        %5647 = vperm.xlu0 %5646, %v5460
        %v5648 = vpop.permute.xlu0 %5647
        %5649 = vset.pattern.permute.xlu0 0
        %5650 = vperm.xlu0 %5649, %v5509
        %v5651 = vpop.permute.xlu0 %5650
        %5652 = vset.pattern.permute.xlu0 0
        %5653 = vperm.xlu0 %5652, %v5558
        %v5654 = vpop.permute.xlu0 %5653
        %v5655 = vlaneseq
        %v5656 = vshrl.u32 %v5655, 7
        %v5657 = vsub.s32 %v468, %v5656
        %v5658 = vrot.slane %v5561, %v5657
        %v5659 = vadd.s32 %v468, 4294967288
        %v5660 = vlaneseq
        %v5661 = vshrl.u32 %v5660, 7
        %v5662 = vsub.s32 %v5659, %v5661
        %v5663 = vrot.slane %v5564, %v5662
        %vm5664 = vcmask 130112
        %v5665 = vsel %vm5664, %v5663, %v5658
        %v5666 = vadd.s32 %v468, 4294967280
        %v5667 = vlaneseq
        %v5668 = vshrl.u32 %v5667, 7
        %v5669 = vsub.s32 %v5666, %v5668
        %v5670 = vrot.slane %v5567, %v5669
        %vm5671 = vcmask 195712
        %v5672 = vsel %vm5671, %v5670, %v5665
        %v5673 = vadd.s32 %v468, 4294967272
        %v5674 = vlaneseq
        %v5675 = vshrl.u32 %v5674, 7
        %v5676 = vsub.s32 %v5673, %v5675
        %v5677 = vrot.slane %v5570, %v5676
        %vm5678 = vcmask 261312
        %v5679 = vsel %vm5678, %v5677, %v5672
        %v5680 = vadd.s32 %v468, 4294967264
        %v5681 = vlaneseq
        %v5682 = vshrl.u32 %v5681, 7
        %v5683 = vsub.s32 %v5680, %v5682
        %v5684 = vrot.slane %v5573, %v5683
        %vm5685 = vcmask 326912
        %v5686 = vsel %vm5685, %v5684, %v5679
        %v5687 = vadd.s32 %v468, 4294967256
        %v5688 = vlaneseq
        %v5689 = vshrl.u32 %v5688, 7
        %v5690 = vsub.s32 %v5687, %v5689
        %v5691 = vrot.slane %v5576, %v5690
        %vm5692 = vcmask 392512
        %v5693 = vsel %vm5692, %v5691, %v5686
        %v5694 = vadd.s32 %v468, 4294967248
        %v5695 = vlaneseq
        %v5696 = vshrl.u32 %v5695, 7
        %v5697 = vsub.s32 %v5694, %v5696
        %v5698 = vrot.slane %v5579, %v5697
        %vm5699 = vcmask 458112
        %v5700 = vsel %vm5699, %v5698, %v5693
        %v5701 = vadd.s32 %v468, 4294967240
        %v5702 = vlaneseq
        %v5703 = vshrl.u32 %v5702, 7
        %v5704 = vsub.s32 %v5701, %v5703
        %v5705 = vrot.slane %v5582, %v5704
        %vm5706 = vcmask 523712
        %v5707 = vsel %vm5706, %v5705, %v5700
        %v5708 = vadd.s32 %v468, 4294967232
        %v5709 = vlaneseq
        %v5710 = vshrl.u32 %v5709, 7
        %v5711 = vsub.s32 %v5708, %v5710
        %v5712 = vrot.slane %v5585, %v5711
        %vm5713 = vcmask 589312
        %v5714 = vsel %vm5713, %v5712, %v5707
        %v5715 = vadd.s32 %v468, 4294967224
        %v5716 = vlaneseq
        %v5717 = vshrl.u32 %v5716, 7
        %v5718 = vsub.s32 %v5715, %v5717
        %v5719 = vrot.slane %v5588, %v5718
        %vm5720 = vcmask 654912
        %v5721 = vsel %vm5720, %v5719, %v5714
        %v5722 = vadd.s32 %v468, 4294967216
        %v5723 = vlaneseq
        %v5724 = vshrl.u32 %v5723, 7
        %v5725 = vsub.s32 %v5722, %v5724
        %v5726 = vrot.slane %v5591, %v5725
        %vm5727 = vcmask 720512
        %v5728 = vsel %vm5727, %v5726, %v5721
        %v5729 = vadd.s32 %v468, 4294967208
        %v5730 = vlaneseq
        %v5731 = vshrl.u32 %v5730, 7
        %v5732 = vsub.s32 %v5729, %v5731
        %v5733 = vrot.slane %v5594, %v5732
        %vm5734 = vcmask 786112
        %v5735 = vsel %vm5734, %v5733, %v5728
        %v5736 = vadd.s32 %v468, 4294967200
        %v5737 = vlaneseq
        %v5738 = vshrl.u32 %v5737, 7
        %v5739 = vsub.s32 %v5736, %v5738
        %v5740 = vrot.slane %v5597, %v5739
        %vm5741 = vcmask 851712
        %v5742 = vsel %vm5741, %v5740, %v5735
        %v5743 = vadd.s32 %v468, 4294967192
        %v5744 = vlaneseq
        %v5745 = vshrl.u32 %v5744, 7
        %v5746 = vsub.s32 %v5743, %v5745
        %v5747 = vrot.slane %v5600, %v5746
        %vm5748 = vcmask 917312
        %v5749 = vsel %vm5748, %v5747, %v5742
        %v5750 = vadd.s32 %v468, 4294967184
        %v5751 = vlaneseq
        %v5752 = vshrl.u32 %v5751, 7
        %v5753 = vsub.s32 %v5750, %v5752
        %v5754 = vrot.slane %v5603, %v5753
        %vm5755 = vcmask 982912
        %v5756 = vsel %vm5755, %v5754, %v5749
        %v5757 = vadd.s32 %v468, 4294967176
        %v5758 = vlaneseq
        %v5759 = vshrl.u32 %v5758, 7
        %v5760 = vsub.s32 %v5757, %v5759
        %v5761 = vrot.slane %v5606, %v5760
        %vm5762 = vcmask 1048512
        %v5763 = vsel %vm5762, %v5761, %v5756
        %v5764 = vlaneseq
        %v5765 = vshrl.u32 %v5764, 7
        %v5766 = vsub.s32 %v468, %v5765
        %v5767 = vrot.slane %v5609, %v5766
        %v5768 = vlaneseq
        %v5769 = vshrl.u32 %v5768, 7
        %v5770 = vsub.s32 %v5659, %v5769
        %v5771 = vrot.slane %v5612, %v5770
        %v5772 = vsel %vm5664, %v5771, %v5767
        %v5773 = vlaneseq
        %v5774 = vshrl.u32 %v5773, 7
        %v5775 = vsub.s32 %v5666, %v5774
        %v5776 = vrot.slane %v5615, %v5775
        %v5777 = vsel %vm5671, %v5776, %v5772
        %v5778 = vlaneseq
        %v5779 = vshrl.u32 %v5778, 7
        %v5780 = vsub.s32 %v5673, %v5779
        %v5781 = vrot.slane %v5618, %v5780
        %v5782 = vsel %vm5678, %v5781, %v5777
        %v5783 = vlaneseq
        %v5784 = vshrl.u32 %v5783, 7
        %v5785 = vsub.s32 %v5680, %v5784
        %v5786 = vrot.slane %v5621, %v5785
        %v5787 = vsel %vm5685, %v5786, %v5782
        %v5788 = vlaneseq
        %v5789 = vshrl.u32 %v5788, 7
        %v5790 = vsub.s32 %v5687, %v5789
        %v5791 = vrot.slane %v5624, %v5790
        %v5792 = vsel %vm5692, %v5791, %v5787
        %v5793 = vlaneseq
        %v5794 = vshrl.u32 %v5793, 7
        %v5795 = vsub.s32 %v5694, %v5794
        %v5796 = vrot.slane %v5627, %v5795
        %v5797 = vsel %vm5699, %v5796, %v5792
        %v5798 = vlaneseq
        %v5799 = vshrl.u32 %v5798, 7
        %v5800 = vsub.s32 %v5701, %v5799
        %v5801 = vrot.slane %v5630, %v5800
        %v5802 = vsel %vm5706, %v5801, %v5797
        %v5803 = vlaneseq
        %v5804 = vshrl.u32 %v5803, 7
        %v5805 = vsub.s32 %v5708, %v5804
        %v5806 = vrot.slane %v5633, %v5805
        %v5807 = vsel %vm5713, %v5806, %v5802
        %v5808 = vlaneseq
        %v5809 = vshrl.u32 %v5808, 7
        %v5810 = vsub.s32 %v5715, %v5809
        %v5811 = vrot.slane %v5636, %v5810
        %v5812 = vsel %vm5720, %v5811, %v5807
        %v5813 = vlaneseq
        %v5814 = vshrl.u32 %v5813, 7
        %v5815 = vsub.s32 %v5722, %v5814
        %v5816 = vrot.slane %v5639, %v5815
        %v5817 = vsel %vm5727, %v5816, %v5812
        %v5818 = vlaneseq
        %v5819 = vshrl.u32 %v5818, 7
        %v5820 = vsub.s32 %v5729, %v5819
        %v5821 = vrot.slane %v5642, %v5820
        %v5822 = vsel %vm5734, %v5821, %v5817
        %v5823 = vlaneseq
        %v5824 = vshrl.u32 %v5823, 7
        %v5825 = vsub.s32 %v5736, %v5824
        %v5826 = vrot.slane %v5645, %v5825
        %v5827 = vsel %vm5741, %v5826, %v5822
        %v5828 = vlaneseq
        %v5829 = vshrl.u32 %v5828, 7
        %v5830 = vsub.s32 %v5743, %v5829
        %v5831 = vrot.slane %v5648, %v5830
        %v5832 = vsel %vm5748, %v5831, %v5827
        %v5833 = vlaneseq
        %v5834 = vshrl.u32 %v5833, 7
        %v5835 = vsub.s32 %v5750, %v5834
        %v5836 = vrot.slane %v5651, %v5835
        %v5837 = vsel %vm5755, %v5836, %v5832
        %v5838 = vlaneseq
        %v5839 = vshrl.u32 %v5838, 7
        %v5840 = vsub.s32 %v5757, %v5839
        %v5841 = vrot.slane %v5654, %v5840
        %v5842 = vsel %vm5762, %v5841, %v5837
        %v5843 = vcombine.low %v5763, %v5842
        %v5845 = vunpack.c.l.s4 1966171168
        %v5846 = vunpack.c.0.s8 %v5845
        %v5847 = vlaneseq
        %v5848 = vshrl.u32 %v5847, 7
        %v5849 = vsub.s32 %v5846, %v5848
        %v5850 = vrot.slane %v5843, %v5849
        %v5852 = vunpack.c.l.s4 1966171168
        %v5853 = vunpack.c.0.s8 %v5852
        %v5854 = vlaneseq
        %v5855 = vshrl.u32 %v5854, 7
        %v5856 = vsub.s32 %v5853, %v5855
        %v5857 = vrot.slane %v5850, %v5856
        %v5859 = vlaneseq
        %vm5860 = vcmp.ge.s32.totalorder %v5859, 0
        %vm5861 = vcmp.lt.s32.totalorder %v5859, 256
        %vm5862 = vmand %vm5860, %vm5861
        %5863 = vst.msk [vmem:[%s452] sm:$0x3] %vm5862, %v5857
        %s5864 = sand.u32 %s320, 1
        %s5865 = scalar_lea.sflag [#allocation4], %s5864
        %s5866 = sand.u32 %s320, 1
        %s5867 = smul.addr %s5866, 2
        %s5868 = scalar_lea.vmem [#allocation3], %s5867
        // Predicated region
        $region73: #{tpu_custom_call.1} parent=71 // pred_check
          %p5869 = pneg %p330
        $region74: #{tpu_custom_call.1} parent=71 // pred_check_branch
          %5871 = sbr.rel (%p5869) target = $region76
        $region75: #{tpu_custom_call.1} parent=71 // pred_region
          %s5872 = smul.u32 2, %s29
          %s5874 = ssub.s32 32, 32
          %5875 = vsyncadd %s5865, %s5874
          %s5876 = smul.addr %s5872, 16
          %s5877 = scalar_lea.hbm %s13, %s5876
          %s5879 = sshll.u32 %s5868, 4
          %s5880 = int_to_ptr.vmem [resolvable:$true] %s5879
          %5882 = dma.vmem_to_hbm [thread:$0]  %s5880, 32, %s5877, %s5865
        $region76: #{tpu_custom_call.1} parent=71 // pred_fallthru
          _
      $region72: #{tpu_custom_call.1} parent=5 // pred_fallthru
        _
      %p5883 = scmp.le.s32.totalorder 2, %s24
      // Predicated region
      $region77: #{tpu_custom_call.1} parent=5 // pred_check
        %p5884 = pneg %p5883
      $region78: #{tpu_custom_call.1} parent=5 // pred_check_branch
        %5886 = sbr.rel (%p5884) target = $region80
      $region79: #{tpu_custom_call.1} parent=5 // pred_region
        %s5887 = ssub.s32 %s24, 2
        // Predicated region
        $region81: #{tpu_custom_call.1} parent=79 // pred_check
          %p5888 = pneg %p336
        $region82: #{tpu_custom_call.1} parent=79 // pred_check_branch
          %5890 = sbr.rel (%p5888) target = $region84
        $region83: #{tpu_custom_call.1} parent=79 // pred_region
          %s5891 = sand.u32 %s321, 1
          %s5892 = scalar_lea.sflag [#allocation4], %s5891
          %s5893 = sand.u32 %s321, 1
          %s5894 = smul.addr %s5893, 2
          %s5895 = scalar_lea.vmem [#allocation3], %s5894
          %5896 = dma.done %s5892, 32
        $region84: #{tpu_custom_call.1} parent=79 // pred_fallthru
          _
      $region80: #{tpu_custom_call.1} parent=5 // pred_fallthru
        _
    $region6: #{tpu_custom_call.1} parent=1 // loop_footer
      %s28 = sadd.s32 1, %s24
    $region7: #{tpu_custom_call.1} parent=1 // loop_footer_branch
      %23 = sbr.rel target = $region3
    $region8: #{tpu_custom_call.1} parent=1 // loop_exit
      _
    %5897 = vsyncpa [#allocation4], 1
    %s5898 = scalar_lea.sflag [#allocation4], 1
    %5899 = vsyncpa %s5898, 1

</llo_original>
